<compile_context>
chip_gen: v6e
topology: v6e:2x2x1
jax: 0.10.0
libtpu: 0.0.40
codegen_flags: <defaults>
</compile_context>

<pallas_src>
import jax
import jax.numpy as jnp
from jax.experimental import pallas as pl
from jax.experimental.pallas import tpu as pltpu

# ---- model hyper-parameters (VectorPVR.sample_size chosen small & consistent) ----
SAMPLE_SIZE = 8                 # VectorPVR.sample_size
VOCAB = 10
EMB_DIM = 64
D_IN = EMB_DIM * SAMPLE_SIZE    # 512
D1, D2, D3, D4 = 512, 1024, 512, 64
D4_PAD = 128                    # layer-4 width padded to a full lane width
D_OUT = 10
D_OUT_PAD = 128                 # lane-dense classifier width (sliced back to 10 outside)
D_OH = SAMPLE_SIZE * VOCAB      # 80: one-hot width after folding the embedding
MAX_TILE_B = 1024               # upper bound on rows per grid step


def _round_up(x, m):
    return (x + m - 1) // m * m


def _cdiv(a, b):
    return -(-a // b)


def _choose_tiling(B):
    """Padding-aware tile selection.

    - n_tiles from the actual batch (no fixed-tile over-padding)
    - at least 2 tiles when B > 256 so both v7x TensorCores are busy
    - tile_b a multiple of 128 when >= 128 rows, else a multiple of 16 (bf16 packing)
    """
    n_tiles = max(1, _cdiv(B, MAX_TILE_B))
    if B > 256:
        n_tiles = max(n_tiles, 2)
    per_tile = _cdiv(B, n_tiles)
    if per_tile >= 128:
        tile_b = _round_up(per_tile, 128)
    else:
        tile_b = max(16, _round_up(per_tile, 16))
    n_tiles = _cdiv(B, tile_b)
    return tile_b, n_tiles


def mlp_kernel(tok_ref,
               w1_ref, b1_ref,
               w2_ref, b2_ref,
               w3_ref, b3_ref,
               w4_ref, b4_ref,
               wc_ref, bc_ref,
               o_ref):
    """One batch tile: in-vreg one-hot + 5 bf16 matmuls (f32 accumulation) + ReLU."""
    tb = tok_ref.shape[0]
    tok = tok_ref[...]                                           # (tb, SAMPLE_SIZE) int32

    # Build the (tb, 80) one-hot in vregs: column c is "hot" iff c == p*VOCAB + tok[:, p].
    col = jax.lax.broadcasted_iota(jnp.int32, (tb, D_OH), 1)
    x = jnp.zeros((tb, D_OH), jnp.bfloat16)
    for p in range(SAMPLE_SIZE):                                 # unrolled: 8 VPU compares
        x = x + (col == tok[:, p:p + 1] + p * VOCAB).astype(jnp.bfloat16)

    h = jnp.dot(x, w1_ref[...], preferred_element_type=jnp.float32) + b1_ref[...]
    h = jnp.maximum(h, 0.0).astype(jnp.bfloat16)

    h = jnp.dot(h, w2_ref[...], preferred_element_type=jnp.float32) + b2_ref[...]
    h = jnp.maximum(h, 0.0).astype(jnp.bfloat16)

    h = jnp.dot(h, w3_ref[...], preferred_element_type=jnp.float32) + b3_ref[...]
    h = jnp.maximum(h, 0.0).astype(jnp.bfloat16)

    h = jnp.dot(h, w4_ref[...], preferred_element_type=jnp.float32) + b4_ref[...]
    h = jnp.maximum(h, 0.0).astype(jnp.bfloat16)

    logits = jnp.dot(h, wc_ref[...], preferred_element_type=jnp.float32) + bc_ref[...]
    o_ref[...] = logits.astype(o_ref.dtype)


def prepare_params(params):
    """One-time preprocessing of f32 params into kernel-ready operands."""
    emb = params["embedding"]                                    # (VOCAB, EMB_DIM) f32
    w1_3d = params["w1"].reshape(SAMPLE_SIZE, EMB_DIM, D1)       # (S, E, D1)
    # Fold the embedding into layer 1: emb[tokens] @ W1 == one_hot(tokens) @ w1f
    # (exact algebraic identity; done once in f32, then cast to bf16).
    w1f = jnp.einsum("ve,pen->pvn", emb, w1_3d,
                     precision=jax.lax.Precision.HIGHEST)
    w1f = w1f.reshape(D_OH, D1).astype(jnp.bfloat16)             # (80, 512)

    # Lane-dense layer 4: pad width 64 -> 128 with zero columns (ReLU(0) = 0).
    w4 = jnp.zeros((D3, D4_PAD), jnp.float32).at[:, :D4].set(params["w4"])
    b4 = jnp.zeros((1, D4_PAD), jnp.float32).at[:, :D4].set(params["b4"])

    # Lane-dense classifier: pad rows 64 -> 128 (zero rows contribute nothing) and
    # output width 10 -> 128 with zeros (sliced back outside the kernel).
    wc = jnp.zeros((D4_PAD, D_OUT_PAD), jnp.float32).at[:D4, :D_OUT].set(params["wc"])
    bc = jnp.zeros((1, D_OUT_PAD), jnp.float32).at[:, :D_OUT].set(params["bc"])

    return dict(
        w1f=w1f, b1=params["b1"],
        w2=params["w2"].astype(jnp.bfloat16), b2=params["b2"],
        w3=params["w3"].astype(jnp.bfloat16), b3=params["b3"],
        w4=w4.astype(jnp.bfloat16), b4=b4,
        wc=wc.astype(jnp.bfloat16), bc=bc,
    )


def _const_spec(shape):
    # Fresh closure per operand (no late-binding bug); constant block index keeps the
    # operand VMEM-resident; Buffered(1) avoids a useless second pipeline buffer.
    return pl.BlockSpec(shape, lambda i: (0, 0), pipeline_mode=pl.Buffered(1))


@jax.jit
def mlp_forward(tokens, kp):
    """tokens: int32 (B, SAMPLE_SIZE); kp = prepare_params(params). Returns (B, 10) f32."""
    B = tokens.shape[0]
    tile_b, n_tiles = _choose_tiling(B)
    b_pad = tile_b * n_tiles

    if b_pad != B:
        # Padded rows use token 0 -> valid one-hot -> relu(bias) garbage, sliced off below.
        tokens = jnp.pad(tokens, ((0, b_pad - B), (0, 0)))

    weight_args = (
        kp["w1f"], kp["b1"],
        kp["w2"], kp["b2"],
        kp["w3"], kp["b3"],
        kp["w4"], kp["b4"],
        kp["wc"], kp["bc"],
    )

    in_specs = [pl.BlockSpec((tile_b, SAMPLE_SIZE), lambda i: (i, 0))]  # tokens: batch-tiled
    in_specs += [_const_spec(w.shape) for w in weight_args]            # weights: resident

    out = pl.pallas_call(
        mlp_kernel,
        out_shape=jax.ShapeDtypeStruct((b_pad, D_OUT_PAD), jnp.float32),
        grid=(n_tiles,),
        in_specs=in_specs,
        out_specs=pl.BlockSpec((tile_b, D_OUT_PAD), lambda i: (i, 0)),
        compiler_params=pltpu.CompilerParams(
            dimension_semantics=("parallel",),       # shard batch tiles across TCs on v7x
            vmem_limit_bytes=32 * 1024 * 1024,       # explicit budget (peak use ~10 MiB)
        ),
    )(tokens, *weight_args)

    return out[:B, :D_OUT]


def init_params(key):
    """Deterministic init mimicking PyTorch defaults (uniform +-1/sqrt(fan_in))."""
    ks = jax.random.split(key, 11)

    def lin(kw, kb, fan_in, fan_out):
        bound = 1.0 / jnp.sqrt(fan_in)
        w = jax.random.uniform(kw, (fan_in, fan_out), jnp.float32, -bound, bound)
        b = jax.random.uniform(kb, (1, fan_out), jnp.float32, -bound, bound)
        return w, b

    emb = jax.random.normal(ks[0], (VOCAB, EMB_DIM), jnp.float32)  # nn.Embedding: N(0,1)
    w1, b1 = lin(ks[1], ks[2], D_IN, D1)
    w2, b2 = lin(ks[3], ks[4], D1, D2)
    w3, b3 = lin(ks[5], ks[6], D2, D3)
    w4, b4 = lin(ks[7], ks[8], D3, D4)
    wc, bc = lin(ks[9], ks[10], D4, D_OUT)
    return dict(embedding=emb, w1=w1, b1=b1, w2=w2, b2=b2,
                w3=w3, b3=b3, w4=w4, b4=b4, wc=wc, bc=bc)


def mlp_reference_f32(tokens, params):
    """Pure-f32 reference with the original PyTorch semantics (gather -> 5 Linear/ReLU)."""
    x = params["embedding"][tokens].reshape(tokens.shape[0], -1)
    h = jax.nn.relu(x @ params["w1"] + params["b1"])
    h = jax.nn.relu(h @ params["w2"] + params["b2"])
    h = jax.nn.relu(h @ params["w3"] + params["b3"])
    h = jax.nn.relu(h @ params["w4"] + params["b4"])
    return h @ params["wc"] + params["bc"]


def mlp_reference_kernel_precision(tokens, kp):
    """Plain-JAX mirror of the kernel's bf16-operand / f32-accumulate policy."""
    f32 = lambda a: a.astype(jnp.float32)
    rnd = lambda a: a.astype(jnp.bfloat16).astype(jnp.float32)
    x = jax.nn.one_hot(tokens, VOCAB, dtype=jnp.float32).reshape(tokens.shape[0], D_OH)
    h = rnd(jax.nn.relu(x @ f32(kp["w1f"]) + kp["b1"]))
    h = rnd(jax.nn.relu(h @ f32(kp["w2"]) + kp["b2"]))
    h = rnd(jax.nn.relu(h @ f32(kp["w3"]) + kp["b3"]))
    h = rnd(jax.nn.relu(h @ f32(kp["w4"]) + kp["b4"]))
    return (h @ f32(kp["wc"]) + kp["bc"])[:, :D_OUT]


if __name__ == "__main__":
    key = jax.random.PRNGKey(0)
    k_tok, k_par, k_tok2 = jax.random.split(key, 3)

    params = init_params(k_par)
    kp = prepare_params(params)

    # Small batch: single 16-row tile.
    B = 2
    tokens = jax.random.randint(k_tok, (B, SAMPLE_SIZE), 0, VOCAB, dtype=jnp.int32)
    out = jax.block_until_ready(mlp_forward(tokens, kp))
    assert out.shape == (B, D_OUT)

    # Tight check: kernel vs. a JAX pipeline using identical bf16 operands.
    ref_bf16 = mlp_reference_kernel_precision(tokens, kp)
    assert jnp.allclose(out, ref_bf16, atol=1e-3, rtol=1e-3), "mismatch vs bf16-precision reference"

    # Loose sanity check: kernel vs. the original f32 module semantics
    # (differences are only bf16 weight/activation quantization).
    ref_f32 = mlp_reference_f32(tokens, params)
    assert jnp.allclose(out, ref_f32, atol=2e-2, rtol=2e-2), "mismatch vs f32 module semantics"

    # Larger batch exercising the padding-aware multi-tile (2 x 256-row) parallel path.
    B2 = 300
    tokens2 = jax.random.randint(k_tok2, (B2, SAMPLE_SIZE), 0, VOCAB, dtype=jnp.int32)
    out2 = jax.block_until_ready(mlp_forward(tokens2, kp))
    assert out2.shape == (B2, D_OUT)
    ref2 = mlp_reference_kernel_precision(tokens2, kp)
    assert jnp.allclose(out2, ref2, atol=1e-3, rtol=1e-3), "mismatch on multi-tile batch"

    print("KERNEL_OK")
</pallas_src>

<mosaic_0001>
module attributes {stable_mosaic.version = 11 : i64} {
  func.func @mlp_kernel(%arg0: i32, %arg1: memref<16x8xi32, #tpu.memory_space<vmem>>, %arg2: memref<80x512xbf16, #tpu.memory_space<vmem>>, %arg3: memref<1x512xf32, #tpu.memory_space<vmem>>, %arg4: memref<512x1024xbf16, #tpu.memory_space<vmem>>, %arg5: memref<1x1024xf32, #tpu.memory_space<vmem>>, %arg6: memref<1024x512xbf16, #tpu.memory_space<vmem>>, %arg7: memref<1x512xf32, #tpu.memory_space<vmem>>, %arg8: memref<512x128xbf16, #tpu.memory_space<vmem>>, %arg9: memref<1x128xf32, #tpu.memory_space<vmem>>, %arg10: memref<128x128xbf16, #tpu.memory_space<vmem>>, %arg11: memref<1x128xf32, #tpu.memory_space<vmem>>, %arg12: memref<16x128xf32, #tpu.memory_space<vmem>>) attributes {dimension_semantics = [#tpu.dimension_semantics<parallel>], iteration_bounds = array<i64: 1>, scalar_prefetch = 0 : i64, scratch_operands = 0 : i64, tpu.core_type = #tpu.core_type<tc>, window_params = [{transform_indices = @transform_0, window_bounds = array<i64: 16, 8>}, {pipeline_mode = #tpu.pipeline_mode<synchronous>, transform_indices = @transform_1, window_bounds = array<i64: 80, 512>}, {pipeline_mode = #tpu.pipeline_mode<synchronous>, transform_indices = @transform_2, window_bounds = array<i64: 1, 512>}, {pipeline_mode = #tpu.pipeline_mode<synchronous>, transform_indices = @transform_3, window_bounds = array<i64: 512, 1024>}, {pipeline_mode = #tpu.pipeline_mode<synchronous>, transform_indices = @transform_4, window_bounds = array<i64: 1, 1024>}, {pipeline_mode = #tpu.pipeline_mode<synchronous>, transform_indices = @transform_5, window_bounds = array<i64: 1024, 512>}, {pipeline_mode = #tpu.pipeline_mode<synchronous>, transform_indices = @transform_6, window_bounds = array<i64: 1, 512>}, {pipeline_mode = #tpu.pipeline_mode<synchronous>, transform_indices = @transform_7, window_bounds = array<i64: 512, 128>}, {pipeline_mode = #tpu.pipeline_mode<synchronous>, transform_indices = @transform_8, window_bounds = array<i64: 1, 128>}, {pipeline_mode = #tpu.pipeline_mode<synchronous>, transform_indices = @transform_9, window_bounds = array<i64: 128, 128>}, {pipeline_mode = #tpu.pipeline_mode<synchronous>, transform_indices = @transform_10, window_bounds = array<i64: 1, 128>}, {transform_indices = @transform_11, window_bounds = array<i64: 16, 128>}]} {
    %c0 = arith.constant 0 : index
    %c0_0 = arith.constant 0 : index
    %0 = vector.load %arg1[%c0, %c0_0] : memref<16x8xi32, #tpu.memory_space<vmem>>, vector<16x8xi32>
    %1 = tpu.iota {dimensions = array<i32: 1>} : vector<16x80xi32>
    %cst = arith.constant 0.000000e+00 : bf16
    %2 = vector.broadcast %cst : bf16 to vector<16x80xbf16>
    %3 = vector.extract_strided_slice %0 {offsets = [0, 0], sizes = [16, 1], strides = [1, 1]} : vector<16x8xi32> to vector<16x1xi32>
    %c0_i32 = arith.constant 0 : i32
    %4 = vector.broadcast %c0_i32 : i32 to vector<16x1xi32>
    %5 = arith.addi %3, %4 : vector<16x1xi32>
    %6 = vector.broadcast %5 : vector<16x1xi32> to vector<16x80xi32>
    %7 = arith.cmpi eq, %1, %6 : vector<16x80xi32>
    %8 = arith.extui %7 : vector<16x80xi1> to vector<16x80xi32>
    %9 = arith.sitofp %8 : vector<16x80xi32> to vector<16x80xf32>
    %10 = arith.truncf %9 : vector<16x80xf32> to vector<16x80xbf16>
    %11 = arith.addf %2, %10 : vector<16x80xbf16>
    %12 = vector.extract_strided_slice %0 {offsets = [0, 1], sizes = [16, 1], strides = [1, 1]} : vector<16x8xi32> to vector<16x1xi32>
    %c10_i32 = arith.constant 10 : i32
    %13 = vector.broadcast %c10_i32 : i32 to vector<16x1xi32>
    %14 = arith.addi %12, %13 : vector<16x1xi32>
    %15 = vector.broadcast %14 : vector<16x1xi32> to vector<16x80xi32>
    %16 = arith.cmpi eq, %1, %15 : vector<16x80xi32>
    %17 = arith.extui %16 : vector<16x80xi1> to vector<16x80xi32>
    %18 = arith.sitofp %17 : vector<16x80xi32> to vector<16x80xf32>
    %19 = arith.truncf %18 : vector<16x80xf32> to vector<16x80xbf16>
    %20 = arith.addf %11, %19 : vector<16x80xbf16>
    %21 = vector.extract_strided_slice %0 {offsets = [0, 2], sizes = [16, 1], strides = [1, 1]} : vector<16x8xi32> to vector<16x1xi32>
    %c20_i32 = arith.constant 20 : i32
    %22 = vector.broadcast %c20_i32 : i32 to vector<16x1xi32>
    %23 = arith.addi %21, %22 : vector<16x1xi32>
    %24 = vector.broadcast %23 : vector<16x1xi32> to vector<16x80xi32>
    %25 = arith.cmpi eq, %1, %24 : vector<16x80xi32>
    %26 = arith.extui %25 : vector<16x80xi1> to vector<16x80xi32>
    %27 = arith.sitofp %26 : vector<16x80xi32> to vector<16x80xf32>
    %28 = arith.truncf %27 : vector<16x80xf32> to vector<16x80xbf16>
    %29 = arith.addf %20, %28 : vector<16x80xbf16>
    %30 = vector.extract_strided_slice %0 {offsets = [0, 3], sizes = [16, 1], strides = [1, 1]} : vector<16x8xi32> to vector<16x1xi32>
    %c30_i32 = arith.constant 30 : i32
    %31 = vector.broadcast %c30_i32 : i32 to vector<16x1xi32>
    %32 = arith.addi %30, %31 : vector<16x1xi32>
    %33 = vector.broadcast %32 : vector<16x1xi32> to vector<16x80xi32>
    %34 = arith.cmpi eq, %1, %33 : vector<16x80xi32>
    %35 = arith.extui %34 : vector<16x80xi1> to vector<16x80xi32>
    %36 = arith.sitofp %35 : vector<16x80xi32> to vector<16x80xf32>
    %37 = arith.truncf %36 : vector<16x80xf32> to vector<16x80xbf16>
    %38 = arith.addf %29, %37 : vector<16x80xbf16>
    %39 = vector.extract_strided_slice %0 {offsets = [0, 4], sizes = [16, 1], strides = [1, 1]} : vector<16x8xi32> to vector<16x1xi32>
    %c40_i32 = arith.constant 40 : i32
    %40 = vector.broadcast %c40_i32 : i32 to vector<16x1xi32>
    %41 = arith.addi %39, %40 : vector<16x1xi32>
    %42 = vector.broadcast %41 : vector<16x1xi32> to vector<16x80xi32>
    %43 = arith.cmpi eq, %1, %42 : vector<16x80xi32>
    %44 = arith.extui %43 : vector<16x80xi1> to vector<16x80xi32>
    %45 = arith.sitofp %44 : vector<16x80xi32> to vector<16x80xf32>
    %46 = arith.truncf %45 : vector<16x80xf32> to vector<16x80xbf16>
    %47 = arith.addf %38, %46 : vector<16x80xbf16>
    %48 = vector.extract_strided_slice %0 {offsets = [0, 5], sizes = [16, 1], strides = [1, 1]} : vector<16x8xi32> to vector<16x1xi32>
    %c50_i32 = arith.constant 50 : i32
    %49 = vector.broadcast %c50_i32 : i32 to vector<16x1xi32>
    %50 = arith.addi %48, %49 : vector<16x1xi32>
    %51 = vector.broadcast %50 : vector<16x1xi32> to vector<16x80xi32>
    %52 = arith.cmpi eq, %1, %51 : vector<16x80xi32>
    %53 = arith.extui %52 : vector<16x80xi1> to vector<16x80xi32>
    %54 = arith.sitofp %53 : vector<16x80xi32> to vector<16x80xf32>
    %55 = arith.truncf %54 : vector<16x80xf32> to vector<16x80xbf16>
    %56 = arith.addf %47, %55 : vector<16x80xbf16>
    %57 = vector.extract_strided_slice %0 {offsets = [0, 6], sizes = [16, 1], strides = [1, 1]} : vector<16x8xi32> to vector<16x1xi32>
    %c60_i32 = arith.constant 60 : i32
    %58 = vector.broadcast %c60_i32 : i32 to vector<16x1xi32>
    %59 = arith.addi %57, %58 : vector<16x1xi32>
    %60 = vector.broadcast %59 : vector<16x1xi32> to vector<16x80xi32>
    %61 = arith.cmpi eq, %1, %60 : vector<16x80xi32>
    %62 = arith.extui %61 : vector<16x80xi1> to vector<16x80xi32>
    %63 = arith.sitofp %62 : vector<16x80xi32> to vector<16x80xf32>
    %64 = arith.truncf %63 : vector<16x80xf32> to vector<16x80xbf16>
    %65 = arith.addf %56, %64 : vector<16x80xbf16>
    %66 = vector.extract_strided_slice %0 {offsets = [0, 7], sizes = [16, 1], strides = [1, 1]} : vector<16x8xi32> to vector<16x1xi32>
    %c70_i32 = arith.constant 70 : i32
    %67 = vector.broadcast %c70_i32 : i32 to vector<16x1xi32>
    %68 = arith.addi %66, %67 : vector<16x1xi32>
    %69 = vector.broadcast %68 : vector<16x1xi32> to vector<16x80xi32>
    %70 = arith.cmpi eq, %1, %69 : vector<16x80xi32>
    %71 = arith.extui %70 : vector<16x80xi1> to vector<16x80xi32>
    %72 = arith.sitofp %71 : vector<16x80xi32> to vector<16x80xf32>
    %73 = arith.truncf %72 : vector<16x80xf32> to vector<16x80xbf16>
    %74 = arith.addf %65, %73 : vector<16x80xbf16>
    %c0_1 = arith.constant 0 : index
    %c0_2 = arith.constant 0 : index
    %75 = vector.load %arg2[%c0_1, %c0_2] : memref<80x512xbf16, #tpu.memory_space<vmem>>, vector<80x512xbf16>
    %cst_3 = arith.constant dense<0.000000e+00> : vector<16x512xf32>
    %76 = tpu.matmul %74, %75, %cst_3 {dimension_numbers = #tpu.dot_dimension_numbers<[1], [0], [0], [1], [0, 0, 1, 1], [], []>} : vector<16x80xbf16>, vector<80x512xbf16>, vector<16x512xf32> -> vector<16x512xf32>
    %c0_4 = arith.constant 0 : index
    %c0_5 = arith.constant 0 : index
    %77 = vector.load %arg3[%c0_4, %c0_5] : memref<1x512xf32, #tpu.memory_space<vmem>>, vector<1x512xf32>
    %78 = vector.broadcast %77 : vector<1x512xf32> to vector<16x512xf32>
    %79 = arith.addf %76, %78 : vector<16x512xf32>
    %cst_6 = arith.constant 0.000000e+00 : f32
    %80 = vector.broadcast %cst_6 : f32 to vector<16x512xf32>
    %81 = arith.maximumf %79, %80 : vector<16x512xf32>
    %82 = arith.truncf %81 : vector<16x512xf32> to vector<16x512xbf16>
    %c0_7 = arith.constant 0 : index
    %c0_8 = arith.constant 0 : index
    %83 = vector.load %arg4[%c0_7, %c0_8] : memref<512x1024xbf16, #tpu.memory_space<vmem>>, vector<512x1024xbf16>
    %cst_9 = arith.constant dense<0.000000e+00> : vector<16x1024xf32>
    %84 = tpu.matmul %82, %83, %cst_9 {dimension_numbers = #tpu.dot_dimension_numbers<[1], [0], [0], [1], [0, 0, 1, 1], [], []>} : vector<16x512xbf16>, vector<512x1024xbf16>, vector<16x1024xf32> -> vector<16x1024xf32>
    %c0_10 = arith.constant 0 : index
    %c0_11 = arith.constant 0 : index
    %85 = vector.load %arg5[%c0_10, %c0_11] : memref<1x1024xf32, #tpu.memory_space<vmem>>, vector<1x1024xf32>
    %86 = vector.broadcast %85 : vector<1x1024xf32> to vector<16x1024xf32>
    %87 = arith.addf %84, %86 : vector<16x1024xf32>
    %cst_12 = arith.constant 0.000000e+00 : f32
    %88 = vector.broadcast %cst_12 : f32 to vector<16x1024xf32>
    %89 = arith.maximumf %87, %88 : vector<16x1024xf32>
    %90 = arith.truncf %89 : vector<16x1024xf32> to vector<16x1024xbf16>
    %c0_13 = arith.constant 0 : index
    %c0_14 = arith.constant 0 : index
    %91 = vector.load %arg6[%c0_13, %c0_14] : memref<1024x512xbf16, #tpu.memory_space<vmem>>, vector<1024x512xbf16>
    %cst_15 = arith.constant dense<0.000000e+00> : vector<16x512xf32>
    %92 = tpu.matmul %90, %91, %cst_15 {dimension_numbers = #tpu.dot_dimension_numbers<[1], [0], [0], [1], [0, 0, 1, 1], [], []>} : vector<16x1024xbf16>, vector<1024x512xbf16>, vector<16x512xf32> -> vector<16x512xf32>
    %c0_16 = arith.constant 0 : index
    %c0_17 = arith.constant 0 : index
    %93 = vector.load %arg7[%c0_16, %c0_17] : memref<1x512xf32, #tpu.memory_space<vmem>>, vector<1x512xf32>
    %94 = vector.broadcast %93 : vector<1x512xf32> to vector<16x512xf32>
    %95 = arith.addf %92, %94 : vector<16x512xf32>
    %cst_18 = arith.constant 0.000000e+00 : f32
    %96 = vector.broadcast %cst_18 : f32 to vector<16x512xf32>
    %97 = arith.maximumf %95, %96 : vector<16x512xf32>
    %98 = arith.truncf %97 : vector<16x512xf32> to vector<16x512xbf16>
    %c0_19 = arith.constant 0 : index
    %c0_20 = arith.constant 0 : index
    %99 = vector.load %arg8[%c0_19, %c0_20] : memref<512x128xbf16, #tpu.memory_space<vmem>>, vector<512x128xbf16>
    %cst_21 = arith.constant dense<0.000000e+00> : vector<16x128xf32>
    %100 = tpu.matmul %98, %99, %cst_21 {dimension_numbers = #tpu.dot_dimension_numbers<[1], [0], [0], [1], [0, 0, 1, 1], [], []>} : vector<16x512xbf16>, vector<512x128xbf16>, vector<16x128xf32> -> vector<16x128xf32>
    %c0_22 = arith.constant 0 : index
    %c0_23 = arith.constant 0 : index
    %101 = vector.load %arg9[%c0_22, %c0_23] : memref<1x128xf32, #tpu.memory_space<vmem>>, vector<1x128xf32>
    %102 = vector.broadcast %101 : vector<1x128xf32> to vector<16x128xf32>
    %103 = arith.addf %100, %102 : vector<16x128xf32>
    %cst_24 = arith.constant 0.000000e+00 : f32
    %104 = vector.broadcast %cst_24 : f32 to vector<16x128xf32>
    %105 = arith.maximumf %103, %104 : vector<16x128xf32>
    %106 = arith.truncf %105 : vector<16x128xf32> to vector<16x128xbf16>
    %c0_25 = arith.constant 0 : index
    %c0_26 = arith.constant 0 : index
    %107 = vector.load %arg10[%c0_25, %c0_26] : memref<128x128xbf16, #tpu.memory_space<vmem>>, vector<128x128xbf16>
    %cst_27 = arith.constant dense<0.000000e+00> : vector<16x128xf32>
    %108 = tpu.matmul %106, %107, %cst_27 {dimension_numbers = #tpu.dot_dimension_numbers<[1], [0], [0], [1], [0, 0, 1, 1], [], []>} : vector<16x128xbf16>, vector<128x128xbf16>, vector<16x128xf32> -> vector<16x128xf32>
    %c0_28 = arith.constant 0 : index
    %c0_29 = arith.constant 0 : index
    %109 = vector.load %arg11[%c0_28, %c0_29] : memref<1x128xf32, #tpu.memory_space<vmem>>, vector<1x128xf32>
    %110 = vector.broadcast %109 : vector<1x128xf32> to vector<16x128xf32>
    %111 = arith.addf %108, %110 : vector<16x128xf32>
    %c0_30 = arith.constant 0 : index
    %c0_31 = arith.constant 0 : index
    %112 = vector.load %arg12[%c0_30, %c0_31] : memref<16x128xf32, #tpu.memory_space<vmem>>, vector<16x128xf32>
    tpu.vector_store %arg12[%c0_30, %c0_31], %111 {strides = array<i32>} : memref<16x128xf32, #tpu.memory_space<vmem>>, vector<16x128xf32>,
    return
  }
  func.func @transform_0(%arg0: i32) -> (i32, i32) {
    %c0_i32 = arith.constant 0 : i32
    %c0_i32_0 = arith.constant 0 : i32
    return %arg0, %c0_i32 : i32, i32
  }
  func.func @transform_1(%arg0: i32) -> (i32, i32) {
    %c0_i32 = arith.constant 0 : i32
    %c0_i32_0 = arith.constant 0 : i32
    %c0_i32_1 = arith.constant 0 : i32
    return %c0_i32, %c0_i32_0 : i32, i32
  }
  func.func @transform_2(%arg0: i32) -> (i32, i32) {
    %c0_i32 = arith.constant 0 : i32
    %c0_i32_0 = arith.constant 0 : i32
    %c0_i32_1 = arith.constant 0 : i32
    return %c0_i32, %c0_i32_0 : i32, i32
  }
  func.func @transform_3(%arg0: i32) -> (i32, i32) {
    %c0_i32 = arith.constant 0 : i32
    %c0_i32_0 = arith.constant 0 : i32
    %c0_i32_1 = arith.constant 0 : i32
    return %c0_i32, %c0_i32_0 : i32, i32
  }
  func.func @transform_4(%arg0: i32) -> (i32, i32) {
    %c0_i32 = arith.constant 0 : i32
    %c0_i32_0 = arith.constant 0 : i32
    %c0_i32_1 = arith.constant 0 : i32
    return %c0_i32, %c0_i32_0 : i32, i32
  }
  func.func @transform_5(%arg0: i32) -> (i32, i32) {
    %c0_i32 = arith.constant 0 : i32
    %c0_i32_0 = arith.constant 0 : i32
    %c0_i32_1 = arith.constant 0 : i32
    return %c0_i32, %c0_i32_0 : i32, i32
  }
  func.func @transform_6(%arg0: i32) -> (i32, i32) {
    %c0_i32 = arith.constant 0 : i32
    %c0_i32_0 = arith.constant 0 : i32
    %c0_i32_1 = arith.constant 0 : i32
    return %c0_i32, %c0_i32_0 : i32, i32
  }
  func.func @transform_7(%arg0: i32) -> (i32, i32) {
    %c0_i32 = arith.constant 0 : i32
    %c0_i32_0 = arith.constant 0 : i32
    %c0_i32_1 = arith.constant 0 : i32
    return %c0_i32, %c0_i32_0 : i32, i32
  }
  func.func @transform_8(%arg0: i32) -> (i32, i32) {
    %c0_i32 = arith.constant 0 : i32
    %c0_i32_0 = arith.constant 0 : i32
    %c0_i32_1 = arith.constant 0 : i32
    return %c0_i32, %c0_i32_0 : i32, i32
  }
  func.func @transform_9(%arg0: i32) -> (i32, i32) {
    %c0_i32 = arith.constant 0 : i32
    %c0_i32_0 = arith.constant 0 : i32
    %c0_i32_1 = arith.constant 0 : i32
    return %c0_i32, %c0_i32_0 : i32, i32
  }
  func.func @transform_10(%arg0: i32) -> (i32, i32) {
    %c0_i32 = arith.constant 0 : i32
    %c0_i32_0 = arith.constant 0 : i32
    %c0_i32_1 = arith.constant 0 : i32
    return %c0_i32, %c0_i32_0 : i32, i32
  }
  func.func @transform_11(%arg0: i32) -> (i32, i32) {
    %c0_i32 = arith.constant 0 : i32
    %c0_i32_0 = arith.constant 0 : i32
    return %arg0, %c0_i32 : i32, i32
  }
}

</mosaic_0001>

<llo_original>
// kernel: mlp_forward.1
$region0: #{mlp_forward.1}
  #allocation0 [shape = 'u32[]', space=smem, size = 0x4, offset = 0x4, fixed_abs, tag = 'smem constant byte address 0x4 - core index']
  #allocation1 [shape = 'u32[144,128]{1,0:T(1,128)}', space=vmem, size = 0x12000, scoped, tag = 'internal scratch']
  %s0 = inlined_call_operand.vmem [shape: s32[16,8], index: 0, kind: input, shape index: {}]
  %s1 = inlined_call_operand.hbm [shape: bf16[80,512], index: 1, kind: input, shape index: {}]
  %s2 = inlined_call_operand.vmem [shape: f32[1,512], index: 2, kind: input, shape index: {}]
  %s3 = inlined_call_operand.hbm [shape: bf16[512,1024], index: 3, kind: input, shape index: {}]
  %s4 = inlined_call_operand.vmem [shape: f32[1,1024], index: 4, kind: input, shape index: {}]
  %s5 = inlined_call_operand.hbm [shape: bf16[1024,512], index: 5, kind: input, shape index: {}]
  %s6 = inlined_call_operand.vmem [shape: f32[1,512], index: 6, kind: input, shape index: {}]
  %s7 = inlined_call_operand.hbm [shape: bf16[512,128], index: 7, kind: input, shape index: {}]
  %s8 = inlined_call_operand.vmem [shape: f32[1,128], index: 8, kind: input, shape index: {}]
  %s9 = inlined_call_operand.hbm [shape: bf16[128,128], index: 9, kind: input, shape index: {}]
  %s10 = inlined_call_operand.vmem [shape: f32[1,128], index: 10, kind: input, shape index: {}]
  %s11 = inlined_call_operand.vmem [shape: f32[16,128], index: 11, kind: output, shape index: {}]
  %s12 = sld [smem:[#allocation0]]
  $region74: #{mlp_forward.1} parent=0
    _
  %s14 = ssub.s32 1, %s12
  %s15 = scalar_select 0, %s14, %s12
  $region1: #{mlp_forward.1} parent=0
    #allocation2 [shape = 'u8[81920]{0}', space=vmem, size = 0x14000, scoped, tag = 'input window, operand 1, single buffered']
    #allocation3 [shape = 's32[1]{0}', space=sflag, size = 0x4, scoped, tag = 'scoped memory for mlp_forward.1']
    #allocation4 [shape = 'u8[1048576]{0}', space=vmem, size = 0x100000, scoped, tag = 'input window, operand 3, single buffered']
    #allocation5 [shape = 's32[1]{0}', space=sflag, size = 0x4, scoped, tag = 'scoped memory for mlp_forward.1']
    #allocation6 [shape = 'u8[1048576]{0}', space=vmem, size = 0x100000, scoped, tag = 'input window, operand 5, single buffered']
    #allocation7 [shape = 'u8[131072]{0}', space=vmem, size = 0x20000, scoped, tag = 'input window, operand 7, single buffered']
    #allocation8 [shape = 's32[1]{0}', space=sflag, size = 0x4, scoped, tag = 'scoped memory for mlp_forward.1']
    #allocation9 [shape = 'u8[32768]{0}', space=vmem, size = 0x8000, scoped, tag = 'input window, operand 9, single buffered']
    %16 = vsyncpa [#allocation3], 0
    %17 = vsyncpa [#allocation5], 0
    %18 = vsyncpa [#allocation8], 0
    // Predicated region
    $region2: #{mlp_forward.1} parent=1 // pred_check
      _
    $region3: #{mlp_forward.1} parent=1 // pred_check_branch
      %20 = sbr.rel (0) target = $region5
    $region4: #{mlp_forward.1} parent=1 // pred_region
      _
    $region5: #{mlp_forward.1} parent=1 // pred_fallthru
      _
    // Predicated region
    $region6: #{mlp_forward.1} parent=1 // pred_check
      _
    $region7: #{mlp_forward.1} parent=1 // pred_check_branch
      %22 = sbr.rel (0) target = $region9
    $region8: #{mlp_forward.1} parent=1 // pred_region
      %s24 = ssub.s32 2560, 2560
      %25 = vsyncadd [#allocation3], %s24
      %s26 = sshll.u32 [#allocation2], 4
      %s27 = int_to_ptr.vmem [resolvable:$true] %s26
      %32 = dma.hbm_to_vmem [thread:$0]  %s1, 2560, %s27, [#allocation3], 256, 256, 16
    $region9: #{mlp_forward.1} parent=1 // pred_fallthru
      _
    // Predicated region
    $region10: #{mlp_forward.1} parent=1 // pred_check
      _
    $region11: #{mlp_forward.1} parent=1 // pred_check_branch
      %34 = sbr.rel (0) target = $region13
    $region12: #{mlp_forward.1} parent=1 // pred_region
      _
    $region13: #{mlp_forward.1} parent=1 // pred_fallthru
      _
    // Predicated region
    $region14: #{mlp_forward.1} parent=1 // pred_check
      _
    $region15: #{mlp_forward.1} parent=1 // pred_check_branch
      %36 = sbr.rel (0) target = $region17
    $region16: #{mlp_forward.1} parent=1 // pred_region
      %s38 = ssub.s32 32768, 32768
      %39 = vsyncadd [#allocation5], %s38
      %s40 = sshll.u32 [#allocation4], 4
      %s41 = int_to_ptr.vmem [resolvable:$true] %s40
      %46 = dma.hbm_to_vmem [thread:$0]  %s3, 32768, %s41, [#allocation5], 512, 512, 32
    $region17: #{mlp_forward.1} parent=1 // pred_fallthru
      _
    // Predicated region
    $region18: #{mlp_forward.1} parent=1 // pred_check
      _
    $region19: #{mlp_forward.1} parent=1 // pred_check_branch
      %48 = sbr.rel (0) target = $region21
    $region20: #{mlp_forward.1} parent=1 // pred_region
      _
    $region21: #{mlp_forward.1} parent=1 // pred_fallthru
      _
    // Predicated region
    $region22: #{mlp_forward.1} parent=1 // pred_check
      _
    $region23: #{mlp_forward.1} parent=1 // pred_check_branch
      %50 = sbr.rel (0) target = $region25
    $region24: #{mlp_forward.1} parent=1 // pred_region
      %s52 = ssub.s32 32768, 32768
      %53 = vsyncadd [#allocation5], %s52
      %s54 = sshll.u32 [#allocation6], 4
      %s55 = int_to_ptr.vmem [resolvable:$true] %s54
      %60 = dma.hbm_to_vmem [thread:$0]  %s5, 32768, %s55, [#allocation5], 256, 256, 16
    $region25: #{mlp_forward.1} parent=1 // pred_fallthru
      _
    // Predicated region
    $region26: #{mlp_forward.1} parent=1 // pred_check
      _
    $region27: #{mlp_forward.1} parent=1 // pred_check_branch
      %62 = sbr.rel (0) target = $region29
    $region28: #{mlp_forward.1} parent=1 // pred_region
      _
    $region29: #{mlp_forward.1} parent=1 // pred_fallthru
      _
    // Predicated region
    $region30: #{mlp_forward.1} parent=1 // pred_check
      _
    $region31: #{mlp_forward.1} parent=1 // pred_check_branch
      %64 = sbr.rel (0) target = $region33
    $region32: #{mlp_forward.1} parent=1 // pred_region
      %s66 = ssub.s32 4096, 4096
      %67 = vsyncadd [#allocation8], %s66
      %s68 = sshll.u32 [#allocation7], 4
      %s69 = int_to_ptr.vmem [resolvable:$true] %s68
      %74 = dma.hbm_to_vmem [thread:$0]  %s7, 4096, %s69, [#allocation8], 64, 64, 4
    $region33: #{mlp_forward.1} parent=1 // pred_fallthru
      _
    // Predicated region
    $region34: #{mlp_forward.1} parent=1 // pred_check
      _
    $region35: #{mlp_forward.1} parent=1 // pred_check_branch
      %76 = sbr.rel (0) target = $region37
    $region36: #{mlp_forward.1} parent=1 // pred_region
      _
    $region37: #{mlp_forward.1} parent=1 // pred_fallthru
      _
    // Predicated region
    $region38: #{mlp_forward.1} parent=1 // pred_check
      _
    $region39: #{mlp_forward.1} parent=1 // pred_check_branch
      %78 = sbr.rel (0) target = $region41
    $region40: #{mlp_forward.1} parent=1 // pred_region
      %s80 = ssub.s32 1024, 1024
      %81 = vsyncadd [#allocation8], %s80
      %s82 = sshll.u32 [#allocation9], 4
      %s83 = int_to_ptr.vmem [resolvable:$true] %s82
      %88 = dma.hbm_to_vmem [thread:$0]  %s9, 1024, %s83, [#allocation8], 64, 64, 4
    $region41: #{mlp_forward.1} parent=1 // pred_fallthru
      _
    // Predicated region
    $region42: #{mlp_forward.1} parent=1 // pred_check
      _
    $region43: #{mlp_forward.1} parent=1 // pred_check_branch
      %90 = sbr.rel (0) target = $region45
    $region44: #{mlp_forward.1} parent=1 // pred_region
      _
    $region45: #{mlp_forward.1} parent=1 // pred_fallthru
      _
    // Predicated region
    $region46: #{mlp_forward.1} parent=1 // pred_check
      _
    $region47: #{mlp_forward.1} parent=1 // pred_check_branch
      %92 = sbr.rel (0) target = $region49
    $region48: #{mlp_forward.1} parent=1 // pred_region
      %93 = dma.done [#allocation3], 2560
    $region49: #{mlp_forward.1} parent=1 // pred_fallthru
      _
    // Predicated region
    $region50: #{mlp_forward.1} parent=1 // pred_check
      _
    $region51: #{mlp_forward.1} parent=1 // pred_check_branch
      %95 = sbr.rel (0) target = $region53
    $region52: #{mlp_forward.1} parent=1 // pred_region
      %96 = dma.done [#allocation5], 32768
    $region53: #{mlp_forward.1} parent=1 // pred_fallthru
      _
    // Predicated region
    $region54: #{mlp_forward.1} parent=1 // pred_check
      _
    $region55: #{mlp_forward.1} parent=1 // pred_check_branch
      %98 = sbr.rel (0) target = $region57
    $region56: #{mlp_forward.1} parent=1 // pred_region
      %99 = dma.done [#allocation5], 32768
    $region57: #{mlp_forward.1} parent=1 // pred_fallthru
      _
    // Predicated region
    $region58: #{mlp_forward.1} parent=1 // pred_check
      _
    $region59: #{mlp_forward.1} parent=1 // pred_check_branch
      %101 = sbr.rel (0) target = $region61
    $region60: #{mlp_forward.1} parent=1 // pred_region
      %102 = dma.done [#allocation8], 4096
    $region61: #{mlp_forward.1} parent=1 // pred_fallthru
      _
    // Predicated region
    $region62: #{mlp_forward.1} parent=1 // pred_check
      _
    $region63: #{mlp_forward.1} parent=1 // pred_check_branch
      %104 = sbr.rel (0) target = $region65
    $region64: #{mlp_forward.1} parent=1 // pred_region
      %105 = dma.done [#allocation8], 1024
    $region65: #{mlp_forward.1} parent=1 // pred_fallthru
      _
    %v107 = vld [vmem:[%s0] sm:$0xff]
    %v108 = vld [vmem:[%s0 + $0x8] sm:$0xff]
    %v109 = vlaneseq
    %v110 = vand.u32 %v109, 127
    %111 = vset.pattern.permute.xlu0 0
    %112 = vperm.xlu0 %111, %v107
    %v113 = vpop.permute.xlu0 %112
    %114 = vset.pattern.permute.xlu0 0
    %115 = vperm.xlu0 %114, %v108
    %v116 = vpop.permute.xlu0 %115
    %vm117 = vcmp.eq.s32.totalorder %v110, %v113
    %vm118 = vcmp.eq.s32.totalorder %v110, %v116
    %v119 = vsel %vm117, 1, 0
    %v120 = vsel %vm118, 1, 0
    %v121 = vcvt.s32.f32 %v119
    %v122 = vcvt.s32.f32 %v120
    %v123 = vpack.c.bf16 %v122, %v121
    %v124 = vadd.bf16 %v123, 0
    %v125 = vadd.s32 %v107, 10
    %v126 = vadd.s32 %v108, 10
    %127 = vset.pattern.permute.xlu0 1
    %128 = vperm.xlu0 %127, %v125
    %v129 = vpop.permute.xlu0 %128
    %130 = vset.pattern.permute.xlu0 1
    %131 = vperm.xlu0 %130, %v126
    %v132 = vpop.permute.xlu0 %131
    %vm133 = vcmp.eq.s32.totalorder %v110, %v129
    %vm134 = vcmp.eq.s32.totalorder %v110, %v132
    %v135 = vsel %vm133, 1, 0
    %v136 = vsel %vm134, 1, 0
    %v137 = vcvt.s32.f32 %v135
    %v138 = vcvt.s32.f32 %v136
    %v139 = vpack.c.bf16 %v138, %v137
    %v140 = vadd.bf16 %v124, %v139
    %v141 = vadd.s32 %v107, 20
    %v142 = vadd.s32 %v108, 20
    %143 = vset.pattern.permute.xlu0 2
    %144 = vperm.xlu0 %143, %v141
    %v145 = vpop.permute.xlu0 %144
    %146 = vset.pattern.permute.xlu0 2
    %147 = vperm.xlu0 %146, %v142
    %v148 = vpop.permute.xlu0 %147
    %vm149 = vcmp.eq.s32.totalorder %v110, %v145
    %vm150 = vcmp.eq.s32.totalorder %v110, %v148
    %v151 = vsel %vm149, 1, 0
    %v152 = vsel %vm150, 1, 0
    %v153 = vcvt.s32.f32 %v151
    %v154 = vcvt.s32.f32 %v152
    %v155 = vpack.c.bf16 %v154, %v153
    %v156 = vadd.bf16 %v140, %v155
    %v157 = vadd.s32 %v107, 30
    %v158 = vadd.s32 %v108, 30
    %159 = vset.pattern.permute.xlu0 3
    %160 = vperm.xlu0 %159, %v157
    %v161 = vpop.permute.xlu0 %160
    %162 = vset.pattern.permute.xlu0 3
    %163 = vperm.xlu0 %162, %v158
    %v164 = vpop.permute.xlu0 %163
    %vm165 = vcmp.eq.s32.totalorder %v110, %v161
    %vm166 = vcmp.eq.s32.totalorder %v110, %v164
    %v167 = vsel %vm165, 1, 0
    %v168 = vsel %vm166, 1, 0
    %v169 = vcvt.s32.f32 %v167
    %v170 = vcvt.s32.f32 %v168
    %v171 = vpack.c.bf16 %v170, %v169
    %v172 = vadd.bf16 %v156, %v171
    %v173 = vadd.s32 %v107, 40
    %v174 = vadd.s32 %v108, 40
    %175 = vset.pattern.permute.xlu0 4
    %176 = vperm.xlu0 %175, %v173
    %v177 = vpop.permute.xlu0 %176
    %178 = vset.pattern.permute.xlu0 4
    %179 = vperm.xlu0 %178, %v174
    %v180 = vpop.permute.xlu0 %179
    %vm181 = vcmp.eq.s32.totalorder %v110, %v177
    %vm182 = vcmp.eq.s32.totalorder %v110, %v180
    %v183 = vsel %vm181, 1, 0
    %v184 = vsel %vm182, 1, 0
    %v185 = vcvt.s32.f32 %v183
    %v186 = vcvt.s32.f32 %v184
    %v187 = vpack.c.bf16 %v186, %v185
    %v188 = vadd.bf16 %v172, %v187
    %v189 = vadd.s32 %v107, 50
    %v190 = vadd.s32 %v108, 50
    %191 = vset.pattern.permute.xlu0 5
    %192 = vperm.xlu0 %191, %v189
    %v193 = vpop.permute.xlu0 %192
    %194 = vset.pattern.permute.xlu0 5
    %195 = vperm.xlu0 %194, %v190
    %v196 = vpop.permute.xlu0 %195
    %vm197 = vcmp.eq.s32.totalorder %v110, %v193
    %vm198 = vcmp.eq.s32.totalorder %v110, %v196
    %v199 = vsel %vm197, 1, 0
    %v200 = vsel %vm198, 1, 0
    %v201 = vcvt.s32.f32 %v199
    %v202 = vcvt.s32.f32 %v200
    %v203 = vpack.c.bf16 %v202, %v201
    %v204 = vadd.bf16 %v188, %v203
    %v205 = vadd.s32 %v107, 60
    %v206 = vadd.s32 %v108, 60
    %207 = vset.pattern.permute.xlu0 6
    %208 = vperm.xlu0 %207, %v205
    %v209 = vpop.permute.xlu0 %208
    %210 = vset.pattern.permute.xlu0 6
    %211 = vperm.xlu0 %210, %v206
    %v212 = vpop.permute.xlu0 %211
    %vm213 = vcmp.eq.s32.totalorder %v110, %v209
    %vm214 = vcmp.eq.s32.totalorder %v110, %v212
    %v215 = vsel %vm213, 1, 0
    %v216 = vsel %vm214, 1, 0
    %v217 = vcvt.s32.f32 %v215
    %v218 = vcvt.s32.f32 %v216
    %v219 = vpack.c.bf16 %v218, %v217
    %v220 = vadd.bf16 %v204, %v219
    %v221 = vadd.s32 %v107, 70
    %v222 = vadd.s32 %v108, 70
    %223 = vset.pattern.permute.xlu0 7
    %224 = vperm.xlu0 %223, %v221
    %v225 = vpop.permute.xlu0 %224
    %226 = vset.pattern.permute.xlu0 7
    %227 = vperm.xlu0 %226, %v222
    %v228 = vpop.permute.xlu0 %227
    %vm229 = vcmp.eq.s32.totalorder %v110, %v225
    %vm230 = vcmp.eq.s32.totalorder %v110, %v228
    %v231 = vsel %vm229, 1, 0
    %v232 = vsel %vm230, 1, 0
    %v233 = vcvt.s32.f32 %v231
    %v234 = vcvt.s32.f32 %v232
    %v235 = vpack.c.bf16 %v234, %v233
    %v236 = vadd.bf16 %v220, %v235
    %v237 = vld [vmem:[#allocation2] sm:$0xff]
    %v238 = vld [vmem:[#allocation2 + $0x8] sm:$0xff]
    %v239 = vld [vmem:[#allocation2 + $0x10] sm:$0xff]
    %v240 = vld [vmem:[#allocation2 + $0x18] sm:$0xff]
    %v241 = vld [vmem:[#allocation2 + $0x20] sm:$0xff]
    %v242 = vld [vmem:[#allocation2 + $0x28] sm:$0xff]
    %v243 = vld [vmem:[#allocation2 + $0x30] sm:$0xff]
    %v244 = vld [vmem:[#allocation2 + $0x38] sm:$0xff]
    %v245 = vld [vmem:[#allocation2 + $0x40] sm:$0xff]
    %v246 = vld [vmem:[#allocation2 + $0x48] sm:$0xff]
    %v247 = vld [vmem:[#allocation2 + $0x50] sm:$0xff]
    %v248 = vld [vmem:[#allocation2 + $0x58] sm:$0xff]
    %v249 = vld [vmem:[#allocation2 + $0x60] sm:$0xff]
    %v250 = vld [vmem:[#allocation2 + $0x68] sm:$0xff]
    %v251 = vld [vmem:[#allocation2 + $0x70] sm:$0xff]
    %v252 = vld [vmem:[#allocation2 + $0x78] sm:$0xff]
    %v253 = vld [vmem:[#allocation2 + $0x80] sm:$0xff]
    %v254 = vld [vmem:[#allocation2 + $0x88] sm:$0xff]
    %v255 = vld [vmem:[#allocation2 + $0x90] sm:$0xff]
    %v256 = vld [vmem:[#allocation2 + $0x98] sm:$0xff]
    %v257 = vld [vmem:[%s2] sm:$0xf]
    %v259 = vlaneseq
    %v260 = vshrl.u32 %v259, 7
    %v261 = vsub.s32 0, %v260
    %v262 = vrot.slane %v257, %v261
    %v263 = vlaneseq
    %v264 = vshrl.u32 %v263, 7
    %v265 = vsub.s32 1, %v264
    %v266 = vrot.slane %v257, %v265
    %v267 = vlaneseq
    %v268 = vshrl.u32 %v267, 7
    %v269 = vsub.s32 2, %v268
    %v270 = vrot.slane %v257, %v269
    %v271 = vlaneseq
    %v272 = vshrl.u32 %v271, 7
    %v273 = vsub.s32 3, %v272
    %v274 = vrot.slane %v257, %v273
    %v299 = vunpack.c.l.b16 %v237
    %v300 = vunpack.c.h.b16 %v237
    %v301 = vunpack.c.l.b16 %v238
    %v302 = vunpack.c.h.b16 %v238
    %v303 = vunpack.c.l.b16 %v239
    %v304 = vunpack.c.h.b16 %v239
    %v305 = vunpack.c.l.b16 %v240
    %v306 = vunpack.c.h.b16 %v240
    %v307 = vunpack.c.l.b16 %v241
    %v308 = vunpack.c.h.b16 %v241
    %v309 = vunpack.c.l.b16 %v242
    %v310 = vunpack.c.h.b16 %v242
    %v311 = vunpack.c.l.b16 %v243
    %v312 = vunpack.c.h.b16 %v243
    %v313 = vunpack.c.l.b16 %v244
    %v314 = vunpack.c.h.b16 %v244
    %v315 = vunpack.c.l.b16 %v245
    %v316 = vunpack.c.h.b16 %v245
    %v317 = vunpack.c.l.b16 %v246
    %v318 = vunpack.c.h.b16 %v246
    %v319 = vunpack.c.l.b16 %v247
    %v320 = vunpack.c.h.b16 %v247
    %v321 = vunpack.c.l.b16 %v248
    %v322 = vunpack.c.h.b16 %v248
    %v323 = vunpack.c.l.b16 %v249
    %v324 = vunpack.c.h.b16 %v249
    %v325 = vunpack.c.l.b16 %v250
    %v326 = vunpack.c.h.b16 %v250
    %v327 = vunpack.c.l.b16 %v251
    %v328 = vunpack.c.h.b16 %v251
    %v329 = vunpack.c.l.b16 %v252
    %v330 = vunpack.c.h.b16 %v252
    %v331 = vunpack.c.l.b16 %v253
    %v332 = vunpack.c.h.b16 %v253
    %v333 = vunpack.c.l.b16 %v254
    %v334 = vunpack.c.h.b16 %v254
    %v335 = vunpack.c.l.b16 %v255
    %v336 = vunpack.c.h.b16 %v255
    %v337 = vunpack.c.l.b16 %v256
    %v338 = vunpack.c.h.b16 %v256
    %v339 = vpack.c.b16 %v303, %v299
    %v340 = vpack.c.b16 %v304, %v300
    %v341 = vpack.c.b16 %v305, %v301
    %v342 = vpack.c.b16 %v306, %v302
    %v343 = vpack.c.b16 %v311, %v307
    %v344 = vpack.c.b16 %v312, %v308
    %v345 = vpack.c.b16 %v313, %v309
    %v346 = vpack.c.b16 %v314, %v310
    %v347 = vpack.c.b16 %v319, %v315
    %v348 = vpack.c.b16 %v320, %v316
    %v349 = vpack.c.b16 %v321, %v317
    %v350 = vpack.c.b16 %v322, %v318
    %v351 = vpack.c.b16 %v327, %v323
    %v352 = vpack.c.b16 %v328, %v324
    %v353 = vpack.c.b16 %v329, %v325
    %v354 = vpack.c.b16 %v330, %v326
    %v355 = vpack.c.b16 %v335, %v331
    %v356 = vpack.c.b16 %v336, %v332
    %v357 = vpack.c.b16 %v337, %v333
    %v358 = vpack.c.b16 %v338, %v334
    %vm379 = vcmask 654336
    %v381 = vsel %vm379, %v236, 0
    %383 = vmatprep.subr.bf16.mxu0 0
    %384 = vmatpush1.bf16.msra.mxu0 0
    %385 = vmatprep.subr.bf16.mxu0 0
    %386 = vmatpush1.bf16.msra.mxu0 0
    %387 = vmatprep.subr.bf16.mxu0 0
    %388 = vmatpush1.bf16.msra.mxu0 0
    %389 = vmatprep.subr.bf16.mxu0 %v356
    %390 = vmatpush1.bf16.msra.mxu0 %v355
    %391 = vmatprep.subr.bf16.mxu0 %v352
    %392 = vmatpush1.bf16.msra.mxu0 %v351
    %393 = vmatprep.subr.bf16.mxu0 %v348
    %394 = vmatpush1.bf16.msra.mxu0 %v347
    %395 = vmatprep.subr.bf16.mxu0 %v344
    %396 = vmatpush1.bf16.msra.mxu0 %v343
    %397 = vmatprep.subr.bf16.mxu0 %v340
    %398 = vmatpush1.bf16.msra.mxu0 %v339
    %399 = vmatprep.subr.bf16.mxu0 0
    %400 = vmatpush2.bf16.msra.mxu0 0
    %401 = vmatprep.subr.bf16.mxu0 0
    %402 = vmatpush2.bf16.msra.mxu0 0
    %403 = vmatprep.subr.bf16.mxu0 0
    %404 = vmatpush2.bf16.msra.mxu0 0
    %405 = vmatprep.subr.bf16.mxu0 0
    %406 = vmatpush2.bf16.msra.mxu0 0
    %407 = vmatprep.subr.bf16.mxu0 0
    %408 = vmatpush2.bf16.msra.mxu0 0
    %409 = vmatprep.subr.bf16.mxu0 0
    %410 = vmatpush2.bf16.msra.mxu0 0
    %411 = vmatprep.subr.bf16.mxu0 0
    %412 = vmatpush2.bf16.msra.mxu0 0
    %413 = vmatprep.subr.bf16.mxu0 0
    %414 = vmatpush2.bf16.msra.mxu0 0
    %415 = vmatprep.mubr.bf16.mxu0 0
    %416 = vmatmul.mubr.bf16.gmra.mxu0 %v381
    %v417 = vpop.f32.mrf.mxu0
    %v418 = vadd.f32 %v262, %v417
    %v419 = vpop.f32.mrf.mxu0
    %v420 = vadd.f32 %v266, %v419
    %v421 = vpop.f32.mrf.mxu0
    %v422 = vadd.f32 %v262, %v421
    %v423 = vpop.f32.mrf.mxu0
    %v424 = vadd.f32 %v266, %v423
    %425 = vdwg.mxu0
    %426 = vmatprep.subr.bf16.mxu0 0
    %427 = vmatpush1.bf16.msra.mxu0 0
    %428 = vmatprep.subr.bf16.mxu0 0
    %429 = vmatpush1.bf16.msra.mxu0 0
    %430 = vmatprep.subr.bf16.mxu0 0
    %431 = vmatpush1.bf16.msra.mxu0 0
    %432 = vmatprep.subr.bf16.mxu0 %v358
    %433 = vmatpush1.bf16.msra.mxu0 %v357
    %434 = vmatprep.subr.bf16.mxu0 %v354
    %435 = vmatpush1.bf16.msra.mxu0 %v353
    %436 = vmatprep.subr.bf16.mxu0 %v350
    %437 = vmatpush1.bf16.msra.mxu0 %v349
    %438 = vmatprep.subr.bf16.mxu0 %v346
    %439 = vmatpush1.bf16.msra.mxu0 %v345
    %440 = vmatprep.subr.bf16.mxu0 %v342
    %441 = vmatpush1.bf16.msra.mxu0 %v341
    %442 = vmatprep.subr.bf16.mxu0 0
    %443 = vmatpush2.bf16.msra.mxu0 0
    %444 = vmatprep.subr.bf16.mxu0 0
    %445 = vmatpush2.bf16.msra.mxu0 0
    %446 = vmatprep.subr.bf16.mxu0 0
    %447 = vmatpush2.bf16.msra.mxu0 0
    %448 = vmatprep.subr.bf16.mxu0 0
    %449 = vmatpush2.bf16.msra.mxu0 0
    %450 = vmatprep.subr.bf16.mxu0 0
    %451 = vmatpush2.bf16.msra.mxu0 0
    %452 = vmatprep.subr.bf16.mxu0 0
    %453 = vmatpush2.bf16.msra.mxu0 0
    %454 = vmatprep.subr.bf16.mxu0 0
    %455 = vmatpush2.bf16.msra.mxu0 0
    %456 = vmatprep.subr.bf16.mxu0 0
    %457 = vmatpush2.bf16.msra.mxu0 0
    %458 = vmatprep.mubr.bf16.mxu0 0
    %459 = vmatmul.mubr.bf16.gmra.mxu0 %v381
    %v460 = vpop.f32.mrf.mxu0
    %v461 = vadd.f32 %v270, %v460
    %v462 = vpop.f32.mrf.mxu0
    %v463 = vadd.f32 %v274, %v462
    %v464 = vpop.f32.mrf.mxu0
    %v465 = vadd.f32 %v270, %v464
    %v466 = vpop.f32.mrf.mxu0
    %v467 = vadd.f32 %v274, %v466
    %468 = vdwg.mxu0
    %v469 = vmax.f32 %v418, 0.0
    %v470 = vmax.f32 %v420, 0.0
    %v471 = vmax.f32 %v461, 0.0
    %v472 = vmax.f32 %v463, 0.0
    %v473 = vmax.f32 %v422, 0.0
    %v474 = vmax.f32 %v424, 0.0
    %v475 = vmax.f32 %v465, 0.0
    %v476 = vmax.f32 %v467, 0.0
    %v477 = vpack.c.bf16 %v473, %v469
    %v478 = vpack.c.bf16 %v474, %v470
    %v479 = vpack.c.bf16 %v475, %v471
    %v480 = vpack.c.bf16 %v476, %v472
    %v481 = vld [vmem:[#allocation4] sm:$0xff]
    %v482 = vld [vmem:[#allocation4 + $0x8] sm:$0xff]
    %v483 = vld [vmem:[#allocation4 + $0x10] sm:$0xff]
    %v484 = vld [vmem:[#allocation4 + $0x18] sm:$0xff]
    %v485 = vld [vmem:[#allocation4 + $0x20] sm:$0xff]
    %v486 = vld [vmem:[#allocation4 + $0x28] sm:$0xff]
    %v487 = vld [vmem:[#allocation4 + $0x30] sm:$0xff]
    %v488 = vld [vmem:[#allocation4 + $0x38] sm:$0xff]
    %v489 = vld [vmem:[#allocation4 + $0x40] sm:$0xff]
    %v490 = vld [vmem:[#allocation4 + $0x48] sm:$0xff]
    %v491 = vld [vmem:[#allocation4 + $0x50] sm:$0xff]
    %v492 = vld [vmem:[#allocation4 + $0x58] sm:$0xff]
    %v493 = vld [vmem:[#allocation4 + $0x60] sm:$0xff]
    %v494 = vld [vmem:[#allocation4 + $0x68] sm:$0xff]
    %v495 = vld [vmem:[#allocation4 + $0x70] sm:$0xff]
    %v496 = vld [vmem:[#allocation4 + $0x78] sm:$0xff]
    %v497 = vld [vmem:[#allocation4 + $0x80] sm:$0xff]
    %v498 = vld [vmem:[#allocation4 + $0x88] sm:$0xff]
    %v499 = vld [vmem:[#allocation4 + $0x90] sm:$0xff]
    %v500 = vld [vmem:[#allocation4 + $0x98] sm:$0xff]
    %v501 = vld [vmem:[#allocation4 + $0xa0] sm:$0xff]
    %v502 = vld [vmem:[#allocation4 + $0xa8] sm:$0xff]
    %v503 = vld [vmem:[#allocation4 + $0xb0] sm:$0xff]
    %v504 = vld [vmem:[#allocation4 + $0xb8] sm:$0xff]
    %v505 = vld [vmem:[#allocation4 + $0xc0] sm:$0xff]
    %v506 = vld [vmem:[#allocation4 + $0xc8] sm:$0xff]
    %v507 = vld [vmem:[#allocation4 + $0xd0] sm:$0xff]
    %v508 = vld [vmem:[#allocation4 + $0xd8] sm:$0xff]
    %v509 = vld [vmem:[#allocation4 + $0xe0] sm:$0xff]
    %v510 = vld [vmem:[#allocation4 + $0xe8] sm:$0xff]
    %v511 = vld [vmem:[#allocation4 + $0xf0] sm:$0xff]
    %v512 = vld [vmem:[#allocation4 + $0xf8] sm:$0xff]
    %v513 = vld [vmem:[#allocation4 + $0x100] sm:$0xff]
    %v514 = vld [vmem:[#allocation4 + $0x108] sm:$0xff]
    %v515 = vld [vmem:[#allocation4 + $0x110] sm:$0xff]
    %v516 = vld [vmem:[#allocation4 + $0x118] sm:$0xff]
    %v517 = vld [vmem:[#allocation4 + $0x120] sm:$0xff]
    %v518 = vld [vmem:[#allocation4 + $0x128] sm:$0xff]
    %v519 = vld [vmem:[#allocation4 + $0x130] sm:$0xff]
    %v520 = vld [vmem:[#allocation4 + $0x138] sm:$0xff]
    %v521 = vld [vmem:[#allocation4 + $0x140] sm:$0xff]
    %v522 = vld [vmem:[#allocation4 + $0x148] sm:$0xff]
    %v523 = vld [vmem:[#allocation4 + $0x150] sm:$0xff]
    %v524 = vld [vmem:[#allocation4 + $0x158] sm:$0xff]
    %v525 = vld [vmem:[#allocation4 + $0x160] sm:$0xff]
    %v526 = vld [vmem:[#allocation4 + $0x168] sm:$0xff]
    %v527 = vld [vmem:[#allocation4 + $0x170] sm:$0xff]
    %v528 = vld [vmem:[#allocation4 + $0x178] sm:$0xff]
    %v529 = vld [vmem:[#allocation4 + $0x180] sm:$0xff]
    %v530 = vld [vmem:[#allocation4 + $0x188] sm:$0xff]
    %v531 = vld [vmem:[#allocation4 + $0x190] sm:$0xff]
    %v532 = vld [vmem:[#allocation4 + $0x198] sm:$0xff]
    %v533 = vld [vmem:[#allocation4 + $0x1a0] sm:$0xff]
    %v534 = vld [vmem:[#allocation4 + $0x1a8] sm:$0xff]
    %v535 = vld [vmem:[#allocation4 + $0x1b0] sm:$0xff]
    %v536 = vld [vmem:[#allocation4 + $0x1b8] sm:$0xff]
    %v537 = vld [vmem:[#allocation4 + $0x1c0] sm:$0xff]
    %v538 = vld [vmem:[#allocation4 + $0x1c8] sm:$0xff]
    %v539 = vld [vmem:[#allocation4 + $0x1d0] sm:$0xff]
    %v540 = vld [vmem:[#allocation4 + $0x1d8] sm:$0xff]
    %v541 = vld [vmem:[#allocation4 + $0x1e0] sm:$0xff]
    %v542 = vld [vmem:[#allocation4 + $0x1e8] sm:$0xff]
    %v543 = vld [vmem:[#allocation4 + $0x1f0] sm:$0xff]
    %v544 = vld [vmem:[#allocation4 + $0x1f8] sm:$0xff]
    %v545 = vld [vmem:[#allocation4 + $0x200] sm:$0xff]
    %v546 = vld [vmem:[#allocation4 + $0x208] sm:$0xff]
    %v547 = vld [vmem:[#allocation4 + $0x210] sm:$0xff]
    %v548 = vld [vmem:[#allocation4 + $0x218] sm:$0xff]
    %v549 = vld [vmem:[#allocation4 + $0x220] sm:$0xff]
    %v550 = vld [vmem:[#allocation4 + $0x228] sm:$0xff]
    %v551 = vld [vmem:[#allocation4 + $0x230] sm:$0xff]
    %v552 = vld [vmem:[#allocation4 + $0x238] sm:$0xff]
    %v553 = vld [vmem:[#allocation4 + $0x240] sm:$0xff]
    %v554 = vld [vmem:[#allocation4 + $0x248] sm:$0xff]
    %v555 = vld [vmem:[#allocation4 + $0x250] sm:$0xff]
    %v556 = vld [vmem:[#allocation4 + $0x258] sm:$0xff]
    %v557 = vld [vmem:[#allocation4 + $0x260] sm:$0xff]
    %v558 = vld [vmem:[#allocation4 + $0x268] sm:$0xff]
    %v559 = vld [vmem:[#allocation4 + $0x270] sm:$0xff]
    %v560 = vld [vmem:[#allocation4 + $0x278] sm:$0xff]
    %v561 = vld [vmem:[#allocation4 + $0x280] sm:$0xff]
    %v562 = vld [vmem:[#allocation4 + $0x288] sm:$0xff]
    %v563 = vld [vmem:[#allocation4 + $0x290] sm:$0xff]
    %v564 = vld [vmem:[#allocation4 + $0x298] sm:$0xff]
    %v565 = vld [vmem:[#allocation4 + $0x2a0] sm:$0xff]
    %v566 = vld [vmem:[#allocation4 + $0x2a8] sm:$0xff]
    %v567 = vld [vmem:[#allocation4 + $0x2b0] sm:$0xff]
    %v568 = vld [vmem:[#allocation4 + $0x2b8] sm:$0xff]
    %v569 = vld [vmem:[#allocation4 + $0x2c0] sm:$0xff]
    %v570 = vld [vmem:[#allocation4 + $0x2c8] sm:$0xff]
    %v571 = vld [vmem:[#allocation4 + $0x2d0] sm:$0xff]
    %v572 = vld [vmem:[#allocation4 + $0x2d8] sm:$0xff]
    %v573 = vld [vmem:[#allocation4 + $0x2e0] sm:$0xff]
    %v574 = vld [vmem:[#allocation4 + $0x2e8] sm:$0xff]
    %v575 = vld [vmem:[#allocation4 + $0x2f0] sm:$0xff]
    %v576 = vld [vmem:[#allocation4 + $0x2f8] sm:$0xff]
    %v577 = vld [vmem:[#allocation4 + $0x300] sm:$0xff]
    %v578 = vld [vmem:[#allocation4 + $0x308] sm:$0xff]
    %v579 = vld [vmem:[#allocation4 + $0x310] sm:$0xff]
    %v580 = vld [vmem:[#allocation4 + $0x318] sm:$0xff]
    %v581 = vld [vmem:[#allocation4 + $0x320] sm:$0xff]
    %v582 = vld [vmem:[#allocation4 + $0x328] sm:$0xff]
    %v583 = vld [vmem:[#allocation4 + $0x330] sm:$0xff]
    %v584 = vld [vmem:[#allocation4 + $0x338] sm:$0xff]
    %v585 = vld [vmem:[#allocation4 + $0x340] sm:$0xff]
    %v586 = vld [vmem:[#allocation4 + $0x348] sm:$0xff]
    %v587 = vld [vmem:[#allocation4 + $0x350] sm:$0xff]
    %v588 = vld [vmem:[#allocation4 + $0x358] sm:$0xff]
    %v589 = vld [vmem:[#allocation4 + $0x360] sm:$0xff]
    %v590 = vld [vmem:[#allocation4 + $0x368] sm:$0xff]
    %v591 = vld [vmem:[#allocation4 + $0x370] sm:$0xff]
    %v592 = vld [vmem:[#allocation4 + $0x378] sm:$0xff]
    %v593 = vld [vmem:[#allocation4 + $0x380] sm:$0xff]
    %v594 = vld [vmem:[#allocation4 + $0x388] sm:$0xff]
    %v595 = vld [vmem:[#allocation4 + $0x390] sm:$0xff]
    %v596 = vld [vmem:[#allocation4 + $0x398] sm:$0xff]
    %v597 = vld [vmem:[#allocation4 + $0x3a0] sm:$0xff]
    %v598 = vld [vmem:[#allocation4 + $0x3a8] sm:$0xff]
    %v599 = vld [vmem:[#allocation4 + $0x3b0] sm:$0xff]
    %v600 = vld [vmem:[#allocation4 + $0x3b8] sm:$0xff]
    %v601 = vld [vmem:[#allocation4 + $0x3c0] sm:$0xff]
    %v602 = vld [vmem:[#allocation4 + $0x3c8] sm:$0xff]
    %v603 = vld [vmem:[#allocation4 + $0x3d0] sm:$0xff]
    %v604 = vld [vmem:[#allocation4 + $0x3d8] sm:$0xff]
    %v605 = vld [vmem:[#allocation4 + $0x3e0] sm:$0xff]
    %v606 = vld [vmem:[#allocation4 + $0x3e8] sm:$0xff]
    %v607 = vld [vmem:[#allocation4 + $0x3f0] sm:$0xff]
    %v608 = vld [vmem:[#allocation4 + $0x3f8] sm:$0xff]
    %v609 = vld [vmem:[#allocation4 + $0x400] sm:$0xff]
    %v610 = vld [vmem:[#allocation4 + $0x408] sm:$0xff]
    %v611 = vld [vmem:[#allocation4 + $0x410] sm:$0xff]
    %v612 = vld [vmem:[#allocation4 + $0x418] sm:$0xff]
    %v613 = vld [vmem:[#allocation4 + $0x420] sm:$0xff]
    %v614 = vld [vmem:[#allocation4 + $0x428] sm:$0xff]
    %v615 = vld [vmem:[#allocation4 + $0x430] sm:$0xff]
    %v616 = vld [vmem:[#allocation4 + $0x438] sm:$0xff]
    %v617 = vld [vmem:[#allocation4 + $0x440] sm:$0xff]
    %v618 = vld [vmem:[#allocation4 + $0x448] sm:$0xff]
    %v619 = vld [vmem:[#allocation4 + $0x450] sm:$0xff]
    %v620 = vld [vmem:[#allocation4 + $0x458] sm:$0xff]
    %v621 = vld [vmem:[#allocation4 + $0x460] sm:$0xff]
    %v622 = vld [vmem:[#allocation4 + $0x468] sm:$0xff]
    %v623 = vld [vmem:[#allocation4 + $0x470] sm:$0xff]
    %v624 = vld [vmem:[#allocation4 + $0x478] sm:$0xff]
    %v625 = vld [vmem:[#allocation4 + $0x480] sm:$0xff]
    %v626 = vld [vmem:[#allocation4 + $0x488] sm:$0xff]
    %v627 = vld [vmem:[#allocation4 + $0x490] sm:$0xff]
    %v628 = vld [vmem:[#allocation4 + $0x498] sm:$0xff]
    %v629 = vld [vmem:[#allocation4 + $0x4a0] sm:$0xff]
    %v630 = vld [vmem:[#allocation4 + $0x4a8] sm:$0xff]
    %v631 = vld [vmem:[#allocation4 + $0x4b0] sm:$0xff]
    %v632 = vld [vmem:[#allocation4 + $0x4b8] sm:$0xff]
    %v633 = vld [vmem:[#allocation4 + $0x4c0] sm:$0xff]
    %v634 = vld [vmem:[#allocation4 + $0x4c8] sm:$0xff]
    %v635 = vld [vmem:[#allocation4 + $0x4d0] sm:$0xff]
    %v636 = vld [vmem:[#allocation4 + $0x4d8] sm:$0xff]
    %v637 = vld [vmem:[#allocation4 + $0x4e0] sm:$0xff]
    %v638 = vld [vmem:[#allocation4 + $0x4e8] sm:$0xff]
    %v639 = vld [vmem:[#allocation4 + $0x4f0] sm:$0xff]
    %v640 = vld [vmem:[#allocation4 + $0x4f8] sm:$0xff]
    %v641 = vld [vmem:[#allocation4 + $0x500] sm:$0xff]
    %v642 = vld [vmem:[#allocation4 + $0x508] sm:$0xff]
    %v643 = vld [vmem:[#allocation4 + $0x510] sm:$0xff]
    %v644 = vld [vmem:[#allocation4 + $0x518] sm:$0xff]
    %v645 = vld [vmem:[#allocation4 + $0x520] sm:$0xff]
    %v646 = vld [vmem:[#allocation4 + $0x528] sm:$0xff]
    %v647 = vld [vmem:[#allocation4 + $0x530] sm:$0xff]
    %v648 = vld [vmem:[#allocation4 + $0x538] sm:$0xff]
    %v649 = vld [vmem:[#allocation4 + $0x540] sm:$0xff]
    %v650 = vld [vmem:[#allocation4 + $0x548] sm:$0xff]
    %v651 = vld [vmem:[#allocation4 + $0x550] sm:$0xff]
    %v652 = vld [vmem:[#allocation4 + $0x558] sm:$0xff]
    %v653 = vld [vmem:[#allocation4 + $0x560] sm:$0xff]
    %v654 = vld [vmem:[#allocation4 + $0x568] sm:$0xff]
    %v655 = vld [vmem:[#allocation4 + $0x570] sm:$0xff]
    %v656 = vld [vmem:[#allocation4 + $0x578] sm:$0xff]
    %v657 = vld [vmem:[#allocation4 + $0x580] sm:$0xff]
    %v658 = vld [vmem:[#allocation4 + $0x588] sm:$0xff]
    %v659 = vld [vmem:[#allocation4 + $0x590] sm:$0xff]
    %v660 = vld [vmem:[#allocation4 + $0x598] sm:$0xff]
    %v661 = vld [vmem:[#allocation4 + $0x5a0] sm:$0xff]
    %v662 = vld [vmem:[#allocation4 + $0x5a8] sm:$0xff]
    %v663 = vld [vmem:[#allocation4 + $0x5b0] sm:$0xff]
    %v664 = vld [vmem:[#allocation4 + $0x5b8] sm:$0xff]
    %v665 = vld [vmem:[#allocation4 + $0x5c0] sm:$0xff]
    %v666 = vld [vmem:[#allocation4 + $0x5c8] sm:$0xff]
    %v667 = vld [vmem:[#allocation4 + $0x5d0] sm:$0xff]
    %v668 = vld [vmem:[#allocation4 + $0x5d8] sm:$0xff]
    %v669 = vld [vmem:[#allocation4 + $0x5e0] sm:$0xff]
    %v670 = vld [vmem:[#allocation4 + $0x5e8] sm:$0xff]
    %v671 = vld [vmem:[#allocation4 + $0x5f0] sm:$0xff]
    %v672 = vld [vmem:[#allocation4 + $0x5f8] sm:$0xff]
    %v673 = vld [vmem:[#allocation4 + $0x600] sm:$0xff]
    %v674 = vld [vmem:[#allocation4 + $0x608] sm:$0xff]
    %v675 = vld [vmem:[#allocation4 + $0x610] sm:$0xff]
    %v676 = vld [vmem:[#allocation4 + $0x618] sm:$0xff]
    %v677 = vld [vmem:[#allocation4 + $0x620] sm:$0xff]
    %v678 = vld [vmem:[#allocation4 + $0x628] sm:$0xff]
    %v679 = vld [vmem:[#allocation4 + $0x630] sm:$0xff]
    %v680 = vld [vmem:[#allocation4 + $0x638] sm:$0xff]
    %v681 = vld [vmem:[#allocation4 + $0x640] sm:$0xff]
    %v682 = vld [vmem:[#allocation4 + $0x648] sm:$0xff]
    %v683 = vld [vmem:[#allocation4 + $0x650] sm:$0xff]
    %v684 = vld [vmem:[#allocation4 + $0x658] sm:$0xff]
    %v685 = vld [vmem:[#allocation4 + $0x660] sm:$0xff]
    %v686 = vld [vmem:[#allocation4 + $0x668] sm:$0xff]
    %v687 = vld [vmem:[#allocation4 + $0x670] sm:$0xff]
    %v688 = vld [vmem:[#allocation4 + $0x678] sm:$0xff]
    %v689 = vld [vmem:[#allocation4 + $0x680] sm:$0xff]
    %v690 = vld [vmem:[#allocation4 + $0x688] sm:$0xff]
    %v691 = vld [vmem:[#allocation4 + $0x690] sm:$0xff]
    %v692 = vld [vmem:[#allocation4 + $0x698] sm:$0xff]
    %v693 = vld [vmem:[#allocation4 + $0x6a0] sm:$0xff]
    %v694 = vld [vmem:[#allocation4 + $0x6a8] sm:$0xff]
    %v695 = vld [vmem:[#allocation4 + $0x6b0] sm:$0xff]
    %v696 = vld [vmem:[#allocation4 + $0x6b8] sm:$0xff]
    %v697 = vld [vmem:[#allocation4 + $0x6c0] sm:$0xff]
    %v698 = vld [vmem:[#allocation4 + $0x6c8] sm:$0xff]
    %v699 = vld [vmem:[#allocation4 + $0x6d0] sm:$0xff]
    %v700 = vld [vmem:[#allocation4 + $0x6d8] sm:$0xff]
    %v701 = vld [vmem:[#allocation4 + $0x6e0] sm:$0xff]
    %v702 = vld [vmem:[#allocation4 + $0x6e8] sm:$0xff]
    %v703 = vld [vmem:[#allocation4 + $0x6f0] sm:$0xff]
    %v704 = vld [vmem:[#allocation4 + $0x6f8] sm:$0xff]
    %v705 = vld [vmem:[#allocation4 + $0x700] sm:$0xff]
    %v706 = vld [vmem:[#allocation4 + $0x708] sm:$0xff]
    %v707 = vld [vmem:[#allocation4 + $0x710] sm:$0xff]
    %v708 = vld [vmem:[#allocation4 + $0x718] sm:$0xff]
    %v709 = vld [vmem:[#allocation4 + $0x720] sm:$0xff]
    %v710 = vld [vmem:[#allocation4 + $0x728] sm:$0xff]
    %v711 = vld [vmem:[#allocation4 + $0x730] sm:$0xff]
    %v712 = vld [vmem:[#allocation4 + $0x738] sm:$0xff]
    %v713 = vld [vmem:[#allocation4 + $0x740] sm:$0xff]
    %v714 = vld [vmem:[#allocation4 + $0x748] sm:$0xff]
    %v715 = vld [vmem:[#allocation4 + $0x750] sm:$0xff]
    %v716 = vld [vmem:[#allocation4 + $0x758] sm:$0xff]
    %v717 = vld [vmem:[#allocation4 + $0x760] sm:$0xff]
    %v718 = vld [vmem:[#allocation4 + $0x768] sm:$0xff]
    %v719 = vld [vmem:[#allocation4 + $0x770] sm:$0xff]
    %v720 = vld [vmem:[#allocation4 + $0x778] sm:$0xff]
    %v721 = vld [vmem:[#allocation4 + $0x780] sm:$0xff]
    %v722 = vld [vmem:[#allocation4 + $0x788] sm:$0xff]
    %v723 = vld [vmem:[#allocation4 + $0x790] sm:$0xff]
    %v724 = vld [vmem:[#allocation4 + $0x798] sm:$0xff]
    %v725 = vld [vmem:[#allocation4 + $0x7a0] sm:$0xff]
    %v726 = vld [vmem:[#allocation4 + $0x7a8] sm:$0xff]
    %v727 = vld [vmem:[#allocation4 + $0x7b0] sm:$0xff]
    %v728 = vld [vmem:[#allocation4 + $0x7b8] sm:$0xff]
    %v729 = vld [vmem:[#allocation4 + $0x7c0] sm:$0xff]
    %v730 = vld [vmem:[#allocation4 + $0x7c8] sm:$0xff]
    %v731 = vld [vmem:[#allocation4 + $0x7d0] sm:$0xff]
    %v732 = vld [vmem:[#allocation4 + $0x7d8] sm:$0xff]
    %v733 = vld [vmem:[#allocation4 + $0x7e0] sm:$0xff]
    %v734 = vld [vmem:[#allocation4 + $0x7e8] sm:$0xff]
    %v735 = vld [vmem:[#allocation4 + $0x7f0] sm:$0xff]
    %v736 = vld [vmem:[#allocation4 + $0x7f8] sm:$0xff]
    %v737 = vld [vmem:[%s4] sm:$0xff]
    %v739 = vlaneseq
    %v740 = vshrl.u32 %v739, 7
    %v741 = vsub.s32 0, %v740
    %v742 = vrot.slane %v737, %v741
    %v743 = vlaneseq
    %v744 = vshrl.u32 %v743, 7
    %v745 = vsub.s32 1, %v744
    %v746 = vrot.slane %v737, %v745
    %v747 = vlaneseq
    %v748 = vshrl.u32 %v747, 7
    %v749 = vsub.s32 2, %v748
    %v750 = vrot.slane %v737, %v749
    %v751 = vlaneseq
    %v752 = vshrl.u32 %v751, 7
    %v753 = vsub.s32 3, %v752
    %v754 = vrot.slane %v737, %v753
    %v755 = vlaneseq
    %v756 = vshrl.u32 %v755, 7
    %v757 = vsub.s32 4, %v756
    %v758 = vrot.slane %v737, %v757
    %v759 = vlaneseq
    %v760 = vshrl.u32 %v759, 7
    %v761 = vsub.s32 5, %v760
    %v762 = vrot.slane %v737, %v761
    %v763 = vlaneseq
    %v764 = vshrl.u32 %v763, 7
    %v765 = vsub.s32 6, %v764
    %v766 = vrot.slane %v737, %v765
    %v767 = vlaneseq
    %v768 = vshrl.u32 %v767, 7
    %v769 = vsub.s32 7, %v768
    %v770 = vrot.slane %v737, %v769
    %v1035 = vunpack.c.l.b16 %v481
    %v1036 = vunpack.c.h.b16 %v481
    %v1037 = vunpack.c.l.b16 %v482
    %v1038 = vunpack.c.h.b16 %v482
    %v1039 = vunpack.c.l.b16 %v483
    %v1040 = vunpack.c.h.b16 %v483
    %v1041 = vunpack.c.l.b16 %v484
    %v1042 = vunpack.c.h.b16 %v484
    %v1043 = vunpack.c.l.b16 %v485
    %v1044 = vunpack.c.h.b16 %v485
    %v1045 = vunpack.c.l.b16 %v486
    %v1046 = vunpack.c.h.b16 %v486
    %v1047 = vunpack.c.l.b16 %v487
    %v1048 = vunpack.c.h.b16 %v487
    %v1049 = vunpack.c.l.b16 %v488
    %v1050 = vunpack.c.h.b16 %v488
    %v1051 = vunpack.c.l.b16 %v489
    %v1052 = vunpack.c.h.b16 %v489
    %v1053 = vunpack.c.l.b16 %v490
    %v1054 = vunpack.c.h.b16 %v490
    %v1055 = vunpack.c.l.b16 %v491
    %v1056 = vunpack.c.h.b16 %v491
    %v1057 = vunpack.c.l.b16 %v492
    %v1058 = vunpack.c.h.b16 %v492
    %v1059 = vunpack.c.l.b16 %v493
    %v1060 = vunpack.c.h.b16 %v493
    %v1061 = vunpack.c.l.b16 %v494
    %v1062 = vunpack.c.h.b16 %v494
    %v1063 = vunpack.c.l.b16 %v495
    %v1064 = vunpack.c.h.b16 %v495
    %v1065 = vunpack.c.l.b16 %v496
    %v1066 = vunpack.c.h.b16 %v496
    %v1067 = vunpack.c.l.b16 %v497
    %v1068 = vunpack.c.h.b16 %v497
    %v1069 = vunpack.c.l.b16 %v498
    %v1070 = vunpack.c.h.b16 %v498
    %v1071 = vunpack.c.l.b16 %v499
    %v1072 = vunpack.c.h.b16 %v499
    %v1073 = vunpack.c.l.b16 %v500
    %v1074 = vunpack.c.h.b16 %v500
    %v1075 = vunpack.c.l.b16 %v501
    %v1076 = vunpack.c.h.b16 %v501
    %v1077 = vunpack.c.l.b16 %v502
    %v1078 = vunpack.c.h.b16 %v502
    %v1079 = vunpack.c.l.b16 %v503
    %v1080 = vunpack.c.h.b16 %v503
    %v1081 = vunpack.c.l.b16 %v504
    %v1082 = vunpack.c.h.b16 %v504
    %v1083 = vunpack.c.l.b16 %v505
    %v1084 = vunpack.c.h.b16 %v505
    %v1085 = vunpack.c.l.b16 %v506
    %v1086 = vunpack.c.h.b16 %v506
    %v1087 = vunpack.c.l.b16 %v507
    %v1088 = vunpack.c.h.b16 %v507
    %v1089 = vunpack.c.l.b16 %v508
    %v1090 = vunpack.c.h.b16 %v508
    %v1091 = vunpack.c.l.b16 %v509
    %v1092 = vunpack.c.h.b16 %v509
    %v1093 = vunpack.c.l.b16 %v510
    %v1094 = vunpack.c.h.b16 %v510
    %v1095 = vunpack.c.l.b16 %v511
    %v1096 = vunpack.c.h.b16 %v511
    %v1097 = vunpack.c.l.b16 %v512
    %v1098 = vunpack.c.h.b16 %v512
    %v1099 = vunpack.c.l.b16 %v513
    %v1100 = vunpack.c.h.b16 %v513
    %v1101 = vunpack.c.l.b16 %v514
    %v1102 = vunpack.c.h.b16 %v514
    %v1103 = vunpack.c.l.b16 %v515
    %v1104 = vunpack.c.h.b16 %v515
    %v1105 = vunpack.c.l.b16 %v516
    %v1106 = vunpack.c.h.b16 %v516
    %v1107 = vunpack.c.l.b16 %v517
    %v1108 = vunpack.c.h.b16 %v517
    %v1109 = vunpack.c.l.b16 %v518
    %v1110 = vunpack.c.h.b16 %v518
    %v1111 = vunpack.c.l.b16 %v519
    %v1112 = vunpack.c.h.b16 %v519
    %v1113 = vunpack.c.l.b16 %v520
    %v1114 = vunpack.c.h.b16 %v520
    %v1115 = vunpack.c.l.b16 %v521
    %v1116 = vunpack.c.h.b16 %v521
    %v1117 = vunpack.c.l.b16 %v522
    %v1118 = vunpack.c.h.b16 %v522
    %v1119 = vunpack.c.l.b16 %v523
    %v1120 = vunpack.c.h.b16 %v523
    %v1121 = vunpack.c.l.b16 %v524
    %v1122 = vunpack.c.h.b16 %v524
    %v1123 = vunpack.c.l.b16 %v525
    %v1124 = vunpack.c.h.b16 %v525
    %v1125 = vunpack.c.l.b16 %v526
    %v1126 = vunpack.c.h.b16 %v526
    %v1127 = vunpack.c.l.b16 %v527
    %v1128 = vunpack.c.h.b16 %v527
    %v1129 = vunpack.c.l.b16 %v528
    %v1130 = vunpack.c.h.b16 %v528
    %v1131 = vunpack.c.l.b16 %v529
    %v1132 = vunpack.c.h.b16 %v529
    %v1133 = vunpack.c.l.b16 %v530
    %v1134 = vunpack.c.h.b16 %v530
    %v1135 = vunpack.c.l.b16 %v531
    %v1136 = vunpack.c.h.b16 %v531
    %v1137 = vunpack.c.l.b16 %v532
    %v1138 = vunpack.c.h.b16 %v532
    %v1139 = vunpack.c.l.b16 %v533
    %v1140 = vunpack.c.h.b16 %v533
    %v1141 = vunpack.c.l.b16 %v534
    %v1142 = vunpack.c.h.b16 %v534
    %v1143 = vunpack.c.l.b16 %v535
    %v1144 = vunpack.c.h.b16 %v535
    %v1145 = vunpack.c.l.b16 %v536
    %v1146 = vunpack.c.h.b16 %v536
    %v1147 = vunpack.c.l.b16 %v537
    %v1148 = vunpack.c.h.b16 %v537
    %v1149 = vunpack.c.l.b16 %v538
    %v1150 = vunpack.c.h.b16 %v538
    %v1151 = vunpack.c.l.b16 %v539
    %v1152 = vunpack.c.h.b16 %v539
    %v1153 = vunpack.c.l.b16 %v540
    %v1154 = vunpack.c.h.b16 %v540
    %v1155 = vunpack.c.l.b16 %v541
    %v1156 = vunpack.c.h.b16 %v541
    %v1157 = vunpack.c.l.b16 %v542
    %v1158 = vunpack.c.h.b16 %v542
    %v1159 = vunpack.c.l.b16 %v543
    %v1160 = vunpack.c.h.b16 %v543
    %v1161 = vunpack.c.l.b16 %v544
    %v1162 = vunpack.c.h.b16 %v544
    %v1163 = vunpack.c.l.b16 %v545
    %v1164 = vunpack.c.h.b16 %v545
    %v1165 = vunpack.c.l.b16 %v546
    %v1166 = vunpack.c.h.b16 %v546
    %v1167 = vunpack.c.l.b16 %v547
    %v1168 = vunpack.c.h.b16 %v547
    %v1169 = vunpack.c.l.b16 %v548
    %v1170 = vunpack.c.h.b16 %v548
    %v1171 = vunpack.c.l.b16 %v549
    %v1172 = vunpack.c.h.b16 %v549
    %v1173 = vunpack.c.l.b16 %v550
    %v1174 = vunpack.c.h.b16 %v550
    %v1175 = vunpack.c.l.b16 %v551
    %v1176 = vunpack.c.h.b16 %v551
    %v1177 = vunpack.c.l.b16 %v552
    %v1178 = vunpack.c.h.b16 %v552
    %v1179 = vunpack.c.l.b16 %v553
    %v1180 = vunpack.c.h.b16 %v553
    %v1181 = vunpack.c.l.b16 %v554
    %v1182 = vunpack.c.h.b16 %v554
    %v1183 = vunpack.c.l.b16 %v555
    %v1184 = vunpack.c.h.b16 %v555
    %v1185 = vunpack.c.l.b16 %v556
    %v1186 = vunpack.c.h.b16 %v556
    %v1187 = vunpack.c.l.b16 %v557
    %v1188 = vunpack.c.h.b16 %v557
    %v1189 = vunpack.c.l.b16 %v558
    %v1190 = vunpack.c.h.b16 %v558
    %v1191 = vunpack.c.l.b16 %v559
    %v1192 = vunpack.c.h.b16 %v559
    %v1193 = vunpack.c.l.b16 %v560
    %v1194 = vunpack.c.h.b16 %v560
    %v1195 = vunpack.c.l.b16 %v561
    %v1196 = vunpack.c.h.b16 %v561
    %v1197 = vunpack.c.l.b16 %v562
    %v1198 = vunpack.c.h.b16 %v562
    %v1199 = vunpack.c.l.b16 %v563
    %v1200 = vunpack.c.h.b16 %v563
    %v1201 = vunpack.c.l.b16 %v564
    %v1202 = vunpack.c.h.b16 %v564
    %v1203 = vunpack.c.l.b16 %v565
    %v1204 = vunpack.c.h.b16 %v565
    %v1205 = vunpack.c.l.b16 %v566
    %v1206 = vunpack.c.h.b16 %v566
    %v1207 = vunpack.c.l.b16 %v567
    %v1208 = vunpack.c.h.b16 %v567
    %v1209 = vunpack.c.l.b16 %v568
    %v1210 = vunpack.c.h.b16 %v568
    %v1211 = vunpack.c.l.b16 %v569
    %v1212 = vunpack.c.h.b16 %v569
    %v1213 = vunpack.c.l.b16 %v570
    %v1214 = vunpack.c.h.b16 %v570
    %v1215 = vunpack.c.l.b16 %v571
    %v1216 = vunpack.c.h.b16 %v571
    %v1217 = vunpack.c.l.b16 %v572
    %v1218 = vunpack.c.h.b16 %v572
    %v1219 = vunpack.c.l.b16 %v573
    %v1220 = vunpack.c.h.b16 %v573
    %v1221 = vunpack.c.l.b16 %v574
    %v1222 = vunpack.c.h.b16 %v574
    %v1223 = vunpack.c.l.b16 %v575
    %v1224 = vunpack.c.h.b16 %v575
    %v1225 = vunpack.c.l.b16 %v576
    %v1226 = vunpack.c.h.b16 %v576
    %v1227 = vunpack.c.l.b16 %v577
    %v1228 = vunpack.c.h.b16 %v577
    %v1229 = vunpack.c.l.b16 %v578
    %v1230 = vunpack.c.h.b16 %v578
    %v1231 = vunpack.c.l.b16 %v579
    %v1232 = vunpack.c.h.b16 %v579
    %v1233 = vunpack.c.l.b16 %v580
    %v1234 = vunpack.c.h.b16 %v580
    %v1235 = vunpack.c.l.b16 %v581
    %v1236 = vunpack.c.h.b16 %v581
    %v1237 = vunpack.c.l.b16 %v582
    %v1238 = vunpack.c.h.b16 %v582
    %v1239 = vunpack.c.l.b16 %v583
    %v1240 = vunpack.c.h.b16 %v583
    %v1241 = vunpack.c.l.b16 %v584
    %v1242 = vunpack.c.h.b16 %v584
    %v1243 = vunpack.c.l.b16 %v585
    %v1244 = vunpack.c.h.b16 %v585
    %v1245 = vunpack.c.l.b16 %v586
    %v1246 = vunpack.c.h.b16 %v586
    %v1247 = vunpack.c.l.b16 %v587
    %v1248 = vunpack.c.h.b16 %v587
    %v1249 = vunpack.c.l.b16 %v588
    %v1250 = vunpack.c.h.b16 %v588
    %v1251 = vunpack.c.l.b16 %v589
    %v1252 = vunpack.c.h.b16 %v589
    %v1253 = vunpack.c.l.b16 %v590
    %v1254 = vunpack.c.h.b16 %v590
    %v1255 = vunpack.c.l.b16 %v591
    %v1256 = vunpack.c.h.b16 %v591
    %v1257 = vunpack.c.l.b16 %v592
    %v1258 = vunpack.c.h.b16 %v592
    %v1259 = vunpack.c.l.b16 %v593
    %v1260 = vunpack.c.h.b16 %v593
    %v1261 = vunpack.c.l.b16 %v594
    %v1262 = vunpack.c.h.b16 %v594
    %v1263 = vunpack.c.l.b16 %v595
    %v1264 = vunpack.c.h.b16 %v595
    %v1265 = vunpack.c.l.b16 %v596
    %v1266 = vunpack.c.h.b16 %v596
    %v1267 = vunpack.c.l.b16 %v597
    %v1268 = vunpack.c.h.b16 %v597
    %v1269 = vunpack.c.l.b16 %v598
    %v1270 = vunpack.c.h.b16 %v598
    %v1271 = vunpack.c.l.b16 %v599
    %v1272 = vunpack.c.h.b16 %v599
    %v1273 = vunpack.c.l.b16 %v600
    %v1274 = vunpack.c.h.b16 %v600
    %v1275 = vunpack.c.l.b16 %v601
    %v1276 = vunpack.c.h.b16 %v601
    %v1277 = vunpack.c.l.b16 %v602
    %v1278 = vunpack.c.h.b16 %v602
    %v1279 = vunpack.c.l.b16 %v603
    %v1280 = vunpack.c.h.b16 %v603
    %v1281 = vunpack.c.l.b16 %v604
    %v1282 = vunpack.c.h.b16 %v604
    %v1283 = vunpack.c.l.b16 %v605
    %v1284 = vunpack.c.h.b16 %v605
    %v1285 = vunpack.c.l.b16 %v606
    %v1286 = vunpack.c.h.b16 %v606
    %v1287 = vunpack.c.l.b16 %v607
    %v1288 = vunpack.c.h.b16 %v607
    %v1289 = vunpack.c.l.b16 %v608
    %v1290 = vunpack.c.h.b16 %v608
    %v1291 = vunpack.c.l.b16 %v609
    %v1292 = vunpack.c.h.b16 %v609
    %v1293 = vunpack.c.l.b16 %v610
    %v1294 = vunpack.c.h.b16 %v610
    %v1295 = vunpack.c.l.b16 %v611
    %v1296 = vunpack.c.h.b16 %v611
    %v1297 = vunpack.c.l.b16 %v612
    %v1298 = vunpack.c.h.b16 %v612
    %v1299 = vunpack.c.l.b16 %v613
    %v1300 = vunpack.c.h.b16 %v613
    %v1301 = vunpack.c.l.b16 %v614
    %v1302 = vunpack.c.h.b16 %v614
    %v1303 = vunpack.c.l.b16 %v615
    %v1304 = vunpack.c.h.b16 %v615
    %v1305 = vunpack.c.l.b16 %v616
    %v1306 = vunpack.c.h.b16 %v616
    %v1307 = vunpack.c.l.b16 %v617
    %v1308 = vunpack.c.h.b16 %v617
    %v1309 = vunpack.c.l.b16 %v618
    %v1310 = vunpack.c.h.b16 %v618
    %v1311 = vunpack.c.l.b16 %v619
    %v1312 = vunpack.c.h.b16 %v619
    %v1313 = vunpack.c.l.b16 %v620
    %v1314 = vunpack.c.h.b16 %v620
    %v1315 = vunpack.c.l.b16 %v621
    %v1316 = vunpack.c.h.b16 %v621
    %v1317 = vunpack.c.l.b16 %v622
    %v1318 = vunpack.c.h.b16 %v622
    %v1319 = vunpack.c.l.b16 %v623
    %v1320 = vunpack.c.h.b16 %v623
    %v1321 = vunpack.c.l.b16 %v624
    %v1322 = vunpack.c.h.b16 %v624
    %v1323 = vunpack.c.l.b16 %v625
    %v1324 = vunpack.c.h.b16 %v625
    %v1325 = vunpack.c.l.b16 %v626
    %v1326 = vunpack.c.h.b16 %v626
    %v1327 = vunpack.c.l.b16 %v627
    %v1328 = vunpack.c.h.b16 %v627
    %v1329 = vunpack.c.l.b16 %v628
    %v1330 = vunpack.c.h.b16 %v628
    %v1331 = vunpack.c.l.b16 %v629
    %v1332 = vunpack.c.h.b16 %v629
    %v1333 = vunpack.c.l.b16 %v630
    %v1334 = vunpack.c.h.b16 %v630
    %v1335 = vunpack.c.l.b16 %v631
    %v1336 = vunpack.c.h.b16 %v631
    %v1337 = vunpack.c.l.b16 %v632
    %v1338 = vunpack.c.h.b16 %v632
    %v1339 = vunpack.c.l.b16 %v633
    %v1340 = vunpack.c.h.b16 %v633
    %v1341 = vunpack.c.l.b16 %v634
    %v1342 = vunpack.c.h.b16 %v634
    %v1343 = vunpack.c.l.b16 %v635
    %v1344 = vunpack.c.h.b16 %v635
    %v1345 = vunpack.c.l.b16 %v636
    %v1346 = vunpack.c.h.b16 %v636
    %v1347 = vunpack.c.l.b16 %v637
    %v1348 = vunpack.c.h.b16 %v637
    %v1349 = vunpack.c.l.b16 %v638
    %v1350 = vunpack.c.h.b16 %v638
    %v1351 = vunpack.c.l.b16 %v639
    %v1352 = vunpack.c.h.b16 %v639
    %v1353 = vunpack.c.l.b16 %v640
    %v1354 = vunpack.c.h.b16 %v640
    %v1355 = vunpack.c.l.b16 %v641
    %v1356 = vunpack.c.h.b16 %v641
    %v1357 = vunpack.c.l.b16 %v642
    %v1358 = vunpack.c.h.b16 %v642
    %v1359 = vunpack.c.l.b16 %v643
    %v1360 = vunpack.c.h.b16 %v643
    %v1361 = vunpack.c.l.b16 %v644
    %v1362 = vunpack.c.h.b16 %v644
    %v1363 = vunpack.c.l.b16 %v645
    %v1364 = vunpack.c.h.b16 %v645
    %v1365 = vunpack.c.l.b16 %v646
    %v1366 = vunpack.c.h.b16 %v646
    %v1367 = vunpack.c.l.b16 %v647
    %v1368 = vunpack.c.h.b16 %v647
    %v1369 = vunpack.c.l.b16 %v648
    %v1370 = vunpack.c.h.b16 %v648
    %v1371 = vunpack.c.l.b16 %v649
    %v1372 = vunpack.c.h.b16 %v649
    %v1373 = vunpack.c.l.b16 %v650
    %v1374 = vunpack.c.h.b16 %v650
    %v1375 = vunpack.c.l.b16 %v651
    %v1376 = vunpack.c.h.b16 %v651
    %v1377 = vunpack.c.l.b16 %v652
    %v1378 = vunpack.c.h.b16 %v652
    %v1379 = vunpack.c.l.b16 %v653
    %v1380 = vunpack.c.h.b16 %v653
    %v1381 = vunpack.c.l.b16 %v654
    %v1382 = vunpack.c.h.b16 %v654
    %v1383 = vunpack.c.l.b16 %v655
    %v1384 = vunpack.c.h.b16 %v655
    %v1385 = vunpack.c.l.b16 %v656
    %v1386 = vunpack.c.h.b16 %v656
    %v1387 = vunpack.c.l.b16 %v657
    %v1388 = vunpack.c.h.b16 %v657
    %v1389 = vunpack.c.l.b16 %v658
    %v1390 = vunpack.c.h.b16 %v658
    %v1391 = vunpack.c.l.b16 %v659
    %v1392 = vunpack.c.h.b16 %v659
    %v1393 = vunpack.c.l.b16 %v660
    %v1394 = vunpack.c.h.b16 %v660
    %v1395 = vunpack.c.l.b16 %v661
    %v1396 = vunpack.c.h.b16 %v661
    %v1397 = vunpack.c.l.b16 %v662
    %v1398 = vunpack.c.h.b16 %v662
    %v1399 = vunpack.c.l.b16 %v663
    %v1400 = vunpack.c.h.b16 %v663
    %v1401 = vunpack.c.l.b16 %v664
    %v1402 = vunpack.c.h.b16 %v664
    %v1403 = vunpack.c.l.b16 %v665
    %v1404 = vunpack.c.h.b16 %v665
    %v1405 = vunpack.c.l.b16 %v666
    %v1406 = vunpack.c.h.b16 %v666
    %v1407 = vunpack.c.l.b16 %v667
    %v1408 = vunpack.c.h.b16 %v667
    %v1409 = vunpack.c.l.b16 %v668
    %v1410 = vunpack.c.h.b16 %v668
    %v1411 = vunpack.c.l.b16 %v669
    %v1412 = vunpack.c.h.b16 %v669
    %v1413 = vunpack.c.l.b16 %v670
    %v1414 = vunpack.c.h.b16 %v670
    %v1415 = vunpack.c.l.b16 %v671
    %v1416 = vunpack.c.h.b16 %v671
    %v1417 = vunpack.c.l.b16 %v672
    %v1418 = vunpack.c.h.b16 %v672
    %v1419 = vunpack.c.l.b16 %v673
    %v1420 = vunpack.c.h.b16 %v673
    %v1421 = vunpack.c.l.b16 %v674
    %v1422 = vunpack.c.h.b16 %v674
    %v1423 = vunpack.c.l.b16 %v675
    %v1424 = vunpack.c.h.b16 %v675
    %v1425 = vunpack.c.l.b16 %v676
    %v1426 = vunpack.c.h.b16 %v676
    %v1427 = vunpack.c.l.b16 %v677
    %v1428 = vunpack.c.h.b16 %v677
    %v1429 = vunpack.c.l.b16 %v678
    %v1430 = vunpack.c.h.b16 %v678
    %v1431 = vunpack.c.l.b16 %v679
    %v1432 = vunpack.c.h.b16 %v679
    %v1433 = vunpack.c.l.b16 %v680
    %v1434 = vunpack.c.h.b16 %v680
    %v1435 = vunpack.c.l.b16 %v681
    %v1436 = vunpack.c.h.b16 %v681
    %v1437 = vunpack.c.l.b16 %v682
    %v1438 = vunpack.c.h.b16 %v682
    %v1439 = vunpack.c.l.b16 %v683
    %v1440 = vunpack.c.h.b16 %v683
    %v1441 = vunpack.c.l.b16 %v684
    %v1442 = vunpack.c.h.b16 %v684
    %v1443 = vunpack.c.l.b16 %v685
    %v1444 = vunpack.c.h.b16 %v685
    %v1445 = vunpack.c.l.b16 %v686
    %v1446 = vunpack.c.h.b16 %v686
    %v1447 = vunpack.c.l.b16 %v687
    %v1448 = vunpack.c.h.b16 %v687
    %v1449 = vunpack.c.l.b16 %v688
    %v1450 = vunpack.c.h.b16 %v688
    %v1451 = vunpack.c.l.b16 %v689
    %v1452 = vunpack.c.h.b16 %v689
    %v1453 = vunpack.c.l.b16 %v690
    %v1454 = vunpack.c.h.b16 %v690
    %v1455 = vunpack.c.l.b16 %v691
    %v1456 = vunpack.c.h.b16 %v691
    %v1457 = vunpack.c.l.b16 %v692
    %v1458 = vunpack.c.h.b16 %v692
    %v1459 = vunpack.c.l.b16 %v693
    %v1460 = vunpack.c.h.b16 %v693
    %v1461 = vunpack.c.l.b16 %v694
    %v1462 = vunpack.c.h.b16 %v694
    %v1463 = vunpack.c.l.b16 %v695
    %v1464 = vunpack.c.h.b16 %v695
    %v1465 = vunpack.c.l.b16 %v696
    %v1466 = vunpack.c.h.b16 %v696
    %v1467 = vunpack.c.l.b16 %v697
    %v1468 = vunpack.c.h.b16 %v697
    %v1469 = vunpack.c.l.b16 %v698
    %v1470 = vunpack.c.h.b16 %v698
    %v1471 = vunpack.c.l.b16 %v699
    %v1472 = vunpack.c.h.b16 %v699
    %v1473 = vunpack.c.l.b16 %v700
    %v1474 = vunpack.c.h.b16 %v700
    %v1475 = vunpack.c.l.b16 %v701
    %v1476 = vunpack.c.h.b16 %v701
    %v1477 = vunpack.c.l.b16 %v702
    %v1478 = vunpack.c.h.b16 %v702
    %v1479 = vunpack.c.l.b16 %v703
    %v1480 = vunpack.c.h.b16 %v703
    %v1481 = vunpack.c.l.b16 %v704
    %v1482 = vunpack.c.h.b16 %v704
    %v1483 = vunpack.c.l.b16 %v705
    %v1484 = vunpack.c.h.b16 %v705
    %v1485 = vunpack.c.l.b16 %v706
    %v1486 = vunpack.c.h.b16 %v706
    %v1487 = vunpack.c.l.b16 %v707
    %v1488 = vunpack.c.h.b16 %v707
    %v1489 = vunpack.c.l.b16 %v708
    %v1490 = vunpack.c.h.b16 %v708
    %v1491 = vunpack.c.l.b16 %v709
    %v1492 = vunpack.c.h.b16 %v709
    %v1493 = vunpack.c.l.b16 %v710
    %v1494 = vunpack.c.h.b16 %v710
    %v1495 = vunpack.c.l.b16 %v711
    %v1496 = vunpack.c.h.b16 %v711
    %v1497 = vunpack.c.l.b16 %v712
    %v1498 = vunpack.c.h.b16 %v712
    %v1499 = vunpack.c.l.b16 %v713
    %v1500 = vunpack.c.h.b16 %v713
    %v1501 = vunpack.c.l.b16 %v714
    %v1502 = vunpack.c.h.b16 %v714
    %v1503 = vunpack.c.l.b16 %v715
    %v1504 = vunpack.c.h.b16 %v715
    %v1505 = vunpack.c.l.b16 %v716
    %v1506 = vunpack.c.h.b16 %v716
    %v1507 = vunpack.c.l.b16 %v717
    %v1508 = vunpack.c.h.b16 %v717
    %v1509 = vunpack.c.l.b16 %v718
    %v1510 = vunpack.c.h.b16 %v718
    %v1511 = vunpack.c.l.b16 %v719
    %v1512 = vunpack.c.h.b16 %v719
    %v1513 = vunpack.c.l.b16 %v720
    %v1514 = vunpack.c.h.b16 %v720
    %v1515 = vunpack.c.l.b16 %v721
    %v1516 = vunpack.c.h.b16 %v721
    %v1517 = vunpack.c.l.b16 %v722
    %v1518 = vunpack.c.h.b16 %v722
    %v1519 = vunpack.c.l.b16 %v723
    %v1520 = vunpack.c.h.b16 %v723
    %v1521 = vunpack.c.l.b16 %v724
    %v1522 = vunpack.c.h.b16 %v724
    %v1523 = vunpack.c.l.b16 %v725
    %v1524 = vunpack.c.h.b16 %v725
    %v1525 = vunpack.c.l.b16 %v726
    %v1526 = vunpack.c.h.b16 %v726
    %v1527 = vunpack.c.l.b16 %v727
    %v1528 = vunpack.c.h.b16 %v727
    %v1529 = vunpack.c.l.b16 %v728
    %v1530 = vunpack.c.h.b16 %v728
    %v1531 = vunpack.c.l.b16 %v729
    %v1532 = vunpack.c.h.b16 %v729
    %v1533 = vunpack.c.l.b16 %v730
    %v1534 = vunpack.c.h.b16 %v730
    %v1535 = vunpack.c.l.b16 %v731
    %v1536 = vunpack.c.h.b16 %v731
    %v1537 = vunpack.c.l.b16 %v732
    %v1538 = vunpack.c.h.b16 %v732
    %v1539 = vunpack.c.l.b16 %v733
    %v1540 = vunpack.c.h.b16 %v733
    %v1541 = vunpack.c.l.b16 %v734
    %v1542 = vunpack.c.h.b16 %v734
    %v1543 = vunpack.c.l.b16 %v735
    %v1544 = vunpack.c.h.b16 %v735
    %v1545 = vunpack.c.l.b16 %v736
    %v1546 = vunpack.c.h.b16 %v736
    %v1547 = vpack.c.b16 %v1043, %v1035
    %v1548 = vpack.c.b16 %v1044, %v1036
    %v1549 = vpack.c.b16 %v1045, %v1037
    %v1550 = vpack.c.b16 %v1046, %v1038
    %v1551 = vpack.c.b16 %v1047, %v1039
    %v1552 = vpack.c.b16 %v1048, %v1040
    %v1553 = vpack.c.b16 %v1049, %v1041
    %v1554 = vpack.c.b16 %v1050, %v1042
    %v1555 = vpack.c.b16 %v1059, %v1051
    %v1556 = vpack.c.b16 %v1060, %v1052
    %v1557 = vpack.c.b16 %v1061, %v1053
    %v1558 = vpack.c.b16 %v1062, %v1054
    %v1559 = vpack.c.b16 %v1063, %v1055
    %v1560 = vpack.c.b16 %v1064, %v1056
    %v1561 = vpack.c.b16 %v1065, %v1057
    %v1562 = vpack.c.b16 %v1066, %v1058
    %v1563 = vpack.c.b16 %v1075, %v1067
    %v1564 = vpack.c.b16 %v1076, %v1068
    %v1565 = vpack.c.b16 %v1077, %v1069
    %v1566 = vpack.c.b16 %v1078, %v1070
    %v1567 = vpack.c.b16 %v1079, %v1071
    %v1568 = vpack.c.b16 %v1080, %v1072
    %v1569 = vpack.c.b16 %v1081, %v1073
    %v1570 = vpack.c.b16 %v1082, %v1074
    %v1571 = vpack.c.b16 %v1091, %v1083
    %v1572 = vpack.c.b16 %v1092, %v1084
    %v1573 = vpack.c.b16 %v1093, %v1085
    %v1574 = vpack.c.b16 %v1094, %v1086
    %v1575 = vpack.c.b16 %v1095, %v1087
    %v1576 = vpack.c.b16 %v1096, %v1088
    %v1577 = vpack.c.b16 %v1097, %v1089
    %v1578 = vpack.c.b16 %v1098, %v1090
    %v1579 = vpack.c.b16 %v1107, %v1099
    %v1580 = vpack.c.b16 %v1108, %v1100
    %v1581 = vpack.c.b16 %v1109, %v1101
    %v1582 = vpack.c.b16 %v1110, %v1102
    %v1583 = vpack.c.b16 %v1111, %v1103
    %v1584 = vpack.c.b16 %v1112, %v1104
    %v1585 = vpack.c.b16 %v1113, %v1105
    %v1586 = vpack.c.b16 %v1114, %v1106
    %v1587 = vpack.c.b16 %v1123, %v1115
    %v1588 = vpack.c.b16 %v1124, %v1116
    %v1589 = vpack.c.b16 %v1125, %v1117
    %v1590 = vpack.c.b16 %v1126, %v1118
    %v1591 = vpack.c.b16 %v1127, %v1119
    %v1592 = vpack.c.b16 %v1128, %v1120
    %v1593 = vpack.c.b16 %v1129, %v1121
    %v1594 = vpack.c.b16 %v1130, %v1122
    %v1595 = vpack.c.b16 %v1139, %v1131
    %v1596 = vpack.c.b16 %v1140, %v1132
    %v1597 = vpack.c.b16 %v1141, %v1133
    %v1598 = vpack.c.b16 %v1142, %v1134
    %v1599 = vpack.c.b16 %v1143, %v1135
    %v1600 = vpack.c.b16 %v1144, %v1136
    %v1601 = vpack.c.b16 %v1145, %v1137
    %v1602 = vpack.c.b16 %v1146, %v1138
    %v1603 = vpack.c.b16 %v1155, %v1147
    %v1604 = vpack.c.b16 %v1156, %v1148
    %v1605 = vpack.c.b16 %v1157, %v1149
    %v1606 = vpack.c.b16 %v1158, %v1150
    %v1607 = vpack.c.b16 %v1159, %v1151
    %v1608 = vpack.c.b16 %v1160, %v1152
    %v1609 = vpack.c.b16 %v1161, %v1153
    %v1610 = vpack.c.b16 %v1162, %v1154
    %v1611 = vpack.c.b16 %v1171, %v1163
    %v1612 = vpack.c.b16 %v1172, %v1164
    %v1613 = vpack.c.b16 %v1173, %v1165
    %v1614 = vpack.c.b16 %v1174, %v1166
    %v1615 = vpack.c.b16 %v1175, %v1167
    %v1616 = vpack.c.b16 %v1176, %v1168
    %v1617 = vpack.c.b16 %v1177, %v1169
    %v1618 = vpack.c.b16 %v1178, %v1170
    %v1619 = vpack.c.b16 %v1187, %v1179
    %v1620 = vpack.c.b16 %v1188, %v1180
    %v1621 = vpack.c.b16 %v1189, %v1181
    %v1622 = vpack.c.b16 %v1190, %v1182
    %v1623 = vpack.c.b16 %v1191, %v1183
    %v1624 = vpack.c.b16 %v1192, %v1184
    %v1625 = vpack.c.b16 %v1193, %v1185
    %v1626 = vpack.c.b16 %v1194, %v1186
    %v1627 = vpack.c.b16 %v1203, %v1195
    %v1628 = vpack.c.b16 %v1204, %v1196
    %v1629 = vpack.c.b16 %v1205, %v1197
    %v1630 = vpack.c.b16 %v1206, %v1198
    %v1631 = vpack.c.b16 %v1207, %v1199
    %v1632 = vpack.c.b16 %v1208, %v1200
    %v1633 = vpack.c.b16 %v1209, %v1201
    %v1634 = vpack.c.b16 %v1210, %v1202
    %v1635 = vpack.c.b16 %v1219, %v1211
    %v1636 = vpack.c.b16 %v1220, %v1212
    %v1637 = vpack.c.b16 %v1221, %v1213
    %v1638 = vpack.c.b16 %v1222, %v1214
    %v1639 = vpack.c.b16 %v1223, %v1215
    %v1640 = vpack.c.b16 %v1224, %v1216
    %v1641 = vpack.c.b16 %v1225, %v1217
    %v1642 = vpack.c.b16 %v1226, %v1218
    %v1643 = vpack.c.b16 %v1235, %v1227
    %v1644 = vpack.c.b16 %v1236, %v1228
    %v1645 = vpack.c.b16 %v1237, %v1229
    %v1646 = vpack.c.b16 %v1238, %v1230
    %v1647 = vpack.c.b16 %v1239, %v1231
    %v1648 = vpack.c.b16 %v1240, %v1232
    %v1649 = vpack.c.b16 %v1241, %v1233
    %v1650 = vpack.c.b16 %v1242, %v1234
    %v1651 = vpack.c.b16 %v1251, %v1243
    %v1652 = vpack.c.b16 %v1252, %v1244
    %v1653 = vpack.c.b16 %v1253, %v1245
    %v1654 = vpack.c.b16 %v1254, %v1246
    %v1655 = vpack.c.b16 %v1255, %v1247
    %v1656 = vpack.c.b16 %v1256, %v1248
    %v1657 = vpack.c.b16 %v1257, %v1249
    %v1658 = vpack.c.b16 %v1258, %v1250
    %v1659 = vpack.c.b16 %v1267, %v1259
    %v1660 = vpack.c.b16 %v1268, %v1260
    %v1661 = vpack.c.b16 %v1269, %v1261
    %v1662 = vpack.c.b16 %v1270, %v1262
    %v1663 = vpack.c.b16 %v1271, %v1263
    %v1664 = vpack.c.b16 %v1272, %v1264
    %v1665 = vpack.c.b16 %v1273, %v1265
    %v1666 = vpack.c.b16 %v1274, %v1266
    %v1667 = vpack.c.b16 %v1283, %v1275
    %v1668 = vpack.c.b16 %v1284, %v1276
    %v1669 = vpack.c.b16 %v1285, %v1277
    %v1670 = vpack.c.b16 %v1286, %v1278
    %v1671 = vpack.c.b16 %v1287, %v1279
    %v1672 = vpack.c.b16 %v1288, %v1280
    %v1673 = vpack.c.b16 %v1289, %v1281
    %v1674 = vpack.c.b16 %v1290, %v1282
    %v1675 = vpack.c.b16 %v1299, %v1291
    %v1676 = vpack.c.b16 %v1300, %v1292
    %v1677 = vpack.c.b16 %v1301, %v1293
    %v1678 = vpack.c.b16 %v1302, %v1294
    %v1679 = vpack.c.b16 %v1303, %v1295
    %v1680 = vpack.c.b16 %v1304, %v1296
    %v1681 = vpack.c.b16 %v1305, %v1297
    %v1682 = vpack.c.b16 %v1306, %v1298
    %v1683 = vpack.c.b16 %v1315, %v1307
    %v1684 = vpack.c.b16 %v1316, %v1308
    %v1685 = vpack.c.b16 %v1317, %v1309
    %v1686 = vpack.c.b16 %v1318, %v1310
    %v1687 = vpack.c.b16 %v1319, %v1311
    %v1688 = vpack.c.b16 %v1320, %v1312
    %v1689 = vpack.c.b16 %v1321, %v1313
    %v1690 = vpack.c.b16 %v1322, %v1314
    %v1691 = vpack.c.b16 %v1331, %v1323
    %v1692 = vpack.c.b16 %v1332, %v1324
    %v1693 = vpack.c.b16 %v1333, %v1325
    %v1694 = vpack.c.b16 %v1334, %v1326
    %v1695 = vpack.c.b16 %v1335, %v1327
    %v1696 = vpack.c.b16 %v1336, %v1328
    %v1697 = vpack.c.b16 %v1337, %v1329
    %v1698 = vpack.c.b16 %v1338, %v1330
    %v1699 = vpack.c.b16 %v1347, %v1339
    %v1700 = vpack.c.b16 %v1348, %v1340
    %v1701 = vpack.c.b16 %v1349, %v1341
    %v1702 = vpack.c.b16 %v1350, %v1342
    %v1703 = vpack.c.b16 %v1351, %v1343
    %v1704 = vpack.c.b16 %v1352, %v1344
    %v1705 = vpack.c.b16 %v1353, %v1345
    %v1706 = vpack.c.b16 %v1354, %v1346
    %v1707 = vpack.c.b16 %v1363, %v1355
    %v1708 = vpack.c.b16 %v1364, %v1356
    %v1709 = vpack.c.b16 %v1365, %v1357
    %v1710 = vpack.c.b16 %v1366, %v1358
    %v1711 = vpack.c.b16 %v1367, %v1359
    %v1712 = vpack.c.b16 %v1368, %v1360
    %v1713 = vpack.c.b16 %v1369, %v1361
    %v1714 = vpack.c.b16 %v1370, %v1362
    %v1715 = vpack.c.b16 %v1379, %v1371
    %v1716 = vpack.c.b16 %v1380, %v1372
    %v1717 = vpack.c.b16 %v1381, %v1373
    %v1718 = vpack.c.b16 %v1382, %v1374
    %v1719 = vpack.c.b16 %v1383, %v1375
    %v1720 = vpack.c.b16 %v1384, %v1376
    %v1721 = vpack.c.b16 %v1385, %v1377
    %v1722 = vpack.c.b16 %v1386, %v1378
    %v1723 = vpack.c.b16 %v1395, %v1387
    %v1724 = vpack.c.b16 %v1396, %v1388
    %v1725 = vpack.c.b16 %v1397, %v1389
    %v1726 = vpack.c.b16 %v1398, %v1390
    %v1727 = vpack.c.b16 %v1399, %v1391
    %v1728 = vpack.c.b16 %v1400, %v1392
    %v1729 = vpack.c.b16 %v1401, %v1393
    %v1730 = vpack.c.b16 %v1402, %v1394
    %v1731 = vpack.c.b16 %v1411, %v1403
    %v1732 = vpack.c.b16 %v1412, %v1404
    %v1733 = vpack.c.b16 %v1413, %v1405
    %v1734 = vpack.c.b16 %v1414, %v1406
    %v1735 = vpack.c.b16 %v1415, %v1407
    %v1736 = vpack.c.b16 %v1416, %v1408
    %v1737 = vpack.c.b16 %v1417, %v1409
    %v1738 = vpack.c.b16 %v1418, %v1410
    %v1739 = vpack.c.b16 %v1427, %v1419
    %v1740 = vpack.c.b16 %v1428, %v1420
    %v1741 = vpack.c.b16 %v1429, %v1421
    %v1742 = vpack.c.b16 %v1430, %v1422
    %v1743 = vpack.c.b16 %v1431, %v1423
    %v1744 = vpack.c.b16 %v1432, %v1424
    %v1745 = vpack.c.b16 %v1433, %v1425
    %v1746 = vpack.c.b16 %v1434, %v1426
    %v1747 = vpack.c.b16 %v1443, %v1435
    %v1748 = vpack.c.b16 %v1444, %v1436
    %v1749 = vpack.c.b16 %v1445, %v1437
    %v1750 = vpack.c.b16 %v1446, %v1438
    %v1751 = vpack.c.b16 %v1447, %v1439
    %v1752 = vpack.c.b16 %v1448, %v1440
    %v1753 = vpack.c.b16 %v1449, %v1441
    %v1754 = vpack.c.b16 %v1450, %v1442
    %v1755 = vpack.c.b16 %v1459, %v1451
    %v1756 = vpack.c.b16 %v1460, %v1452
    %v1757 = vpack.c.b16 %v1461, %v1453
    %v1758 = vpack.c.b16 %v1462, %v1454
    %v1759 = vpack.c.b16 %v1463, %v1455
    %v1760 = vpack.c.b16 %v1464, %v1456
    %v1761 = vpack.c.b16 %v1465, %v1457
    %v1762 = vpack.c.b16 %v1466, %v1458
    %v1763 = vpack.c.b16 %v1475, %v1467
    %v1764 = vpack.c.b16 %v1476, %v1468
    %v1765 = vpack.c.b16 %v1477, %v1469
    %v1766 = vpack.c.b16 %v1478, %v1470
    %v1767 = vpack.c.b16 %v1479, %v1471
    %v1768 = vpack.c.b16 %v1480, %v1472
    %v1769 = vpack.c.b16 %v1481, %v1473
    %v1770 = vpack.c.b16 %v1482, %v1474
    %v1771 = vpack.c.b16 %v1491, %v1483
    %v1772 = vpack.c.b16 %v1492, %v1484
    %v1773 = vpack.c.b16 %v1493, %v1485
    %v1774 = vpack.c.b16 %v1494, %v1486
    %v1775 = vpack.c.b16 %v1495, %v1487
    %v1776 = vpack.c.b16 %v1496, %v1488
    %v1777 = vpack.c.b16 %v1497, %v1489
    %v1778 = vpack.c.b16 %v1498, %v1490
    %v1779 = vpack.c.b16 %v1507, %v1499
    %v1780 = vpack.c.b16 %v1508, %v1500
    %v1781 = vpack.c.b16 %v1509, %v1501
    %v1782 = vpack.c.b16 %v1510, %v1502
    %v1783 = vpack.c.b16 %v1511, %v1503
    %v1784 = vpack.c.b16 %v1512, %v1504
    %v1785 = vpack.c.b16 %v1513, %v1505
    %v1786 = vpack.c.b16 %v1514, %v1506
    %v1787 = vpack.c.b16 %v1523, %v1515
    %v1788 = vpack.c.b16 %v1524, %v1516
    %v1789 = vpack.c.b16 %v1525, %v1517
    %v1790 = vpack.c.b16 %v1526, %v1518
    %v1791 = vpack.c.b16 %v1527, %v1519
    %v1792 = vpack.c.b16 %v1528, %v1520
    %v1793 = vpack.c.b16 %v1529, %v1521
    %v1794 = vpack.c.b16 %v1530, %v1522
    %v1795 = vpack.c.b16 %v1539, %v1531
    %v1796 = vpack.c.b16 %v1540, %v1532
    %v1797 = vpack.c.b16 %v1541, %v1533
    %v1798 = vpack.c.b16 %v1542, %v1534
    %v1799 = vpack.c.b16 %v1543, %v1535
    %v1800 = vpack.c.b16 %v1544, %v1536
    %v1801 = vpack.c.b16 %v1545, %v1537
    %v1802 = vpack.c.b16 %v1546, %v1538
    %2059 = vmatprep.subr.bf16.mxu0 %v1604
    %2060 = vmatpush1.bf16.msra.mxu0 %v1603
    %2061 = vmatprep.subr.bf16.mxu0 %v1596
    %2062 = vmatpush1.bf16.msra.mxu0 %v1595
    %2063 = vmatprep.subr.bf16.mxu0 %v1588
    %2064 = vmatpush1.bf16.msra.mxu0 %v1587
    %2065 = vmatprep.subr.bf16.mxu0 %v1580
    %2066 = vmatpush1.bf16.msra.mxu0 %v1579
    %2067 = vmatprep.subr.bf16.mxu0 %v1572
    %2068 = vmatpush1.bf16.msra.mxu0 %v1571
    %2069 = vmatprep.subr.bf16.mxu0 %v1564
    %2070 = vmatpush1.bf16.msra.mxu0 %v1563
    %2071 = vmatprep.subr.bf16.mxu0 %v1556
    %2072 = vmatpush1.bf16.msra.mxu0 %v1555
    %2073 = vmatprep.subr.bf16.mxu0 %v1548
    %2074 = vmatpush1.bf16.msra.mxu0 %v1547
    %2075 = vmatprep.subr.bf16.mxu0 %v1668
    %2076 = vmatpush2.bf16.msra.mxu0 %v1667
    %2077 = vmatprep.subr.bf16.mxu0 %v1660
    %2078 = vmatpush2.bf16.msra.mxu0 %v1659
    %2079 = vmatprep.subr.bf16.mxu0 %v1652
    %2080 = vmatpush2.bf16.msra.mxu0 %v1651
    %2081 = vmatprep.subr.bf16.mxu0 %v1644
    %2082 = vmatpush2.bf16.msra.mxu0 %v1643
    %2083 = vmatprep.subr.bf16.mxu0 %v1636
    %2084 = vmatpush2.bf16.msra.mxu0 %v1635
    %2085 = vmatprep.subr.bf16.mxu0 %v1628
    %2086 = vmatpush2.bf16.msra.mxu0 %v1627
    %2087 = vmatprep.subr.bf16.mxu0 %v1620
    %2088 = vmatpush2.bf16.msra.mxu0 %v1619
    %2089 = vmatprep.subr.bf16.mxu0 %v1612
    %2090 = vmatpush2.bf16.msra.mxu0 %v1611
    %2091 = vmatprep.mubr.bf16.mxu0 %v478
    %2092 = vmatmul.mubr.bf16.gmra.mxu0 %v477
    %v2093 = vpop.f32.mrf.mxu0
    %v2094 = vadd.f32 %v742, %v2093
    %v2095 = vpop.f32.mrf.mxu0
    %v2096 = vadd.f32 %v746, %v2095
    %v2097 = vpop.f32.mrf.mxu0
    %v2098 = vadd.f32 %v742, %v2097
    %v2099 = vpop.f32.mrf.mxu0
    %v2100 = vadd.f32 %v746, %v2099
    %2101 = vdwg.mxu0
    %2102 = vmatprep.subr.bf16.mxu0 %v1732
    %2103 = vmatpush1.bf16.msra.mxu0 %v1731
    %2104 = vmatprep.subr.bf16.mxu0 %v1724
    %2105 = vmatpush1.bf16.msra.mxu0 %v1723
    %2106 = vmatprep.subr.bf16.mxu0 %v1716
    %2107 = vmatpush1.bf16.msra.mxu0 %v1715
    %2108 = vmatprep.subr.bf16.mxu0 %v1708
    %2109 = vmatpush1.bf16.msra.mxu0 %v1707
    %2110 = vmatprep.subr.bf16.mxu0 %v1700
    %2111 = vmatpush1.bf16.msra.mxu0 %v1699
    %2112 = vmatprep.subr.bf16.mxu0 %v1692
    %2113 = vmatpush1.bf16.msra.mxu0 %v1691
    %2114 = vmatprep.subr.bf16.mxu0 %v1684
    %2115 = vmatpush1.bf16.msra.mxu0 %v1683
    %2116 = vmatprep.subr.bf16.mxu0 %v1676
    %2117 = vmatpush1.bf16.msra.mxu0 %v1675
    %2118 = vmatprep.subr.bf16.mxu0 %v1796
    %2119 = vmatpush2.bf16.msra.mxu0 %v1795
    %2120 = vmatprep.subr.bf16.mxu0 %v1788
    %2121 = vmatpush2.bf16.msra.mxu0 %v1787
    %2122 = vmatprep.subr.bf16.mxu0 %v1780
    %2123 = vmatpush2.bf16.msra.mxu0 %v1779
    %2124 = vmatprep.subr.bf16.mxu0 %v1772
    %2125 = vmatpush2.bf16.msra.mxu0 %v1771
    %2126 = vmatprep.subr.bf16.mxu0 %v1764
    %2127 = vmatpush2.bf16.msra.mxu0 %v1763
    %2128 = vmatprep.subr.bf16.mxu0 %v1756
    %2129 = vmatpush2.bf16.msra.mxu0 %v1755
    %2130 = vmatprep.subr.bf16.mxu0 %v1748
    %2131 = vmatpush2.bf16.msra.mxu0 %v1747
    %2132 = vmatprep.subr.bf16.mxu0 %v1740
    %2133 = vmatpush2.bf16.msra.mxu0 %v1739
    %2134 = vmatprep.mubr.bf16.mxu0 %v480
    %2135 = vmatmul.mubr.bf16.gmra.mxu0 %v479
    %v2136 = vpop.f32.mrf.mxu0
    %v2137 = vadd.f32 %v2094, %v2136
    %v2138 = vpop.f32.mrf.mxu0
    %v2139 = vadd.f32 %v2096, %v2138
    %v2140 = vpop.f32.mrf.mxu0
    %v2141 = vadd.f32 %v2098, %v2140
    %v2142 = vpop.f32.mrf.mxu0
    %v2143 = vadd.f32 %v2100, %v2142
    %2144 = vdwg.mxu0
    %2145 = vmatprep.subr.bf16.mxu0 %v1606
    %2146 = vmatpush1.bf16.msra.mxu0 %v1605
    %2147 = vmatprep.subr.bf16.mxu0 %v1598
    %2148 = vmatpush1.bf16.msra.mxu0 %v1597
    %2149 = vmatprep.subr.bf16.mxu0 %v1590
    %2150 = vmatpush1.bf16.msra.mxu0 %v1589
    %2151 = vmatprep.subr.bf16.mxu0 %v1582
    %2152 = vmatpush1.bf16.msra.mxu0 %v1581
    %2153 = vmatprep.subr.bf16.mxu0 %v1574
    %2154 = vmatpush1.bf16.msra.mxu0 %v1573
    %2155 = vmatprep.subr.bf16.mxu0 %v1566
    %2156 = vmatpush1.bf16.msra.mxu0 %v1565
    %2157 = vmatprep.subr.bf16.mxu0 %v1558
    %2158 = vmatpush1.bf16.msra.mxu0 %v1557
    %2159 = vmatprep.subr.bf16.mxu0 %v1550
    %2160 = vmatpush1.bf16.msra.mxu0 %v1549
    %2161 = vmatprep.subr.bf16.mxu0 %v1670
    %2162 = vmatpush2.bf16.msra.mxu0 %v1669
    %2163 = vmatprep.subr.bf16.mxu0 %v1662
    %2164 = vmatpush2.bf16.msra.mxu0 %v1661
    %2165 = vmatprep.subr.bf16.mxu0 %v1654
    %2166 = vmatpush2.bf16.msra.mxu0 %v1653
    %2167 = vmatprep.subr.bf16.mxu0 %v1646
    %2168 = vmatpush2.bf16.msra.mxu0 %v1645
    %2169 = vmatprep.subr.bf16.mxu0 %v1638
    %2170 = vmatpush2.bf16.msra.mxu0 %v1637
    %2171 = vmatprep.subr.bf16.mxu0 %v1630
    %2172 = vmatpush2.bf16.msra.mxu0 %v1629
    %2173 = vmatprep.subr.bf16.mxu0 %v1622
    %2174 = vmatpush2.bf16.msra.mxu0 %v1621
    %2175 = vmatprep.subr.bf16.mxu0 %v1614
    %2176 = vmatpush2.bf16.msra.mxu0 %v1613
    %2177 = vmatprep.mubr.bf16.mxu0 %v478
    %2178 = vmatmul.mubr.bf16.gmra.mxu0 %v477
    %v2179 = vpop.f32.mrf.mxu0
    %v2180 = vadd.f32 %v750, %v2179
    %v2181 = vpop.f32.mrf.mxu0
    %v2182 = vadd.f32 %v754, %v2181
    %v2183 = vpop.f32.mrf.mxu0
    %v2184 = vadd.f32 %v750, %v2183
    %v2185 = vpop.f32.mrf.mxu0
    %v2186 = vadd.f32 %v754, %v2185
    %2187 = vdwg.mxu0
    %2188 = vmatprep.subr.bf16.mxu0 %v1734
    %2189 = vmatpush1.bf16.msra.mxu0 %v1733
    %2190 = vmatprep.subr.bf16.mxu0 %v1726
    %2191 = vmatpush1.bf16.msra.mxu0 %v1725
    %2192 = vmatprep.subr.bf16.mxu0 %v1718
    %2193 = vmatpush1.bf16.msra.mxu0 %v1717
    %2194 = vmatprep.subr.bf16.mxu0 %v1710
    %2195 = vmatpush1.bf16.msra.mxu0 %v1709
    %2196 = vmatprep.subr.bf16.mxu0 %v1702
    %2197 = vmatpush1.bf16.msra.mxu0 %v1701
    %2198 = vmatprep.subr.bf16.mxu0 %v1694
    %2199 = vmatpush1.bf16.msra.mxu0 %v1693
    %2200 = vmatprep.subr.bf16.mxu0 %v1686
    %2201 = vmatpush1.bf16.msra.mxu0 %v1685
    %2202 = vmatprep.subr.bf16.mxu0 %v1678
    %2203 = vmatpush1.bf16.msra.mxu0 %v1677
    %2204 = vmatprep.subr.bf16.mxu0 %v1798
    %2205 = vmatpush2.bf16.msra.mxu0 %v1797
    %2206 = vmatprep.subr.bf16.mxu0 %v1790
    %2207 = vmatpush2.bf16.msra.mxu0 %v1789
    %2208 = vmatprep.subr.bf16.mxu0 %v1782
    %2209 = vmatpush2.bf16.msra.mxu0 %v1781
    %2210 = vmatprep.subr.bf16.mxu0 %v1774
    %2211 = vmatpush2.bf16.msra.mxu0 %v1773
    %2212 = vmatprep.subr.bf16.mxu0 %v1766
    %2213 = vmatpush2.bf16.msra.mxu0 %v1765
    %2214 = vmatprep.subr.bf16.mxu0 %v1758
    %2215 = vmatpush2.bf16.msra.mxu0 %v1757
    %2216 = vmatprep.subr.bf16.mxu0 %v1750
    %2217 = vmatpush2.bf16.msra.mxu0 %v1749
    %2218 = vmatprep.subr.bf16.mxu0 %v1742
    %2219 = vmatpush2.bf16.msra.mxu0 %v1741
    %2220 = vmatprep.mubr.bf16.mxu0 %v480
    %2221 = vmatmul.mubr.bf16.gmra.mxu0 %v479
    %v2222 = vpop.f32.mrf.mxu0
    %v2223 = vadd.f32 %v2180, %v2222
    %v2224 = vpop.f32.mrf.mxu0
    %v2225 = vadd.f32 %v2182, %v2224
    %v2226 = vpop.f32.mrf.mxu0
    %v2227 = vadd.f32 %v2184, %v2226
    %v2228 = vpop.f32.mrf.mxu0
    %v2229 = vadd.f32 %v2186, %v2228
    %2230 = vdwg.mxu0
    %2231 = vmatprep.subr.bf16.mxu0 %v1608
    %2232 = vmatpush1.bf16.msra.mxu0 %v1607
    %2233 = vmatprep.subr.bf16.mxu0 %v1600
    %2234 = vmatpush1.bf16.msra.mxu0 %v1599
    %2235 = vmatprep.subr.bf16.mxu0 %v1592
    %2236 = vmatpush1.bf16.msra.mxu0 %v1591
    %2237 = vmatprep.subr.bf16.mxu0 %v1584
    %2238 = vmatpush1.bf16.msra.mxu0 %v1583
    %2239 = vmatprep.subr.bf16.mxu0 %v1576
    %2240 = vmatpush1.bf16.msra.mxu0 %v1575
    %2241 = vmatprep.subr.bf16.mxu0 %v1568
    %2242 = vmatpush1.bf16.msra.mxu0 %v1567
    %2243 = vmatprep.subr.bf16.mxu0 %v1560
    %2244 = vmatpush1.bf16.msra.mxu0 %v1559
    %2245 = vmatprep.subr.bf16.mxu0 %v1552
    %2246 = vmatpush1.bf16.msra.mxu0 %v1551
    %2247 = vmatprep.subr.bf16.mxu0 %v1672
    %2248 = vmatpush2.bf16.msra.mxu0 %v1671
    %2249 = vmatprep.subr.bf16.mxu0 %v1664
    %2250 = vmatpush2.bf16.msra.mxu0 %v1663
    %2251 = vmatprep.subr.bf16.mxu0 %v1656
    %2252 = vmatpush2.bf16.msra.mxu0 %v1655
    %2253 = vmatprep.subr.bf16.mxu0 %v1648
    %2254 = vmatpush2.bf16.msra.mxu0 %v1647
    %2255 = vmatprep.subr.bf16.mxu0 %v1640
    %2256 = vmatpush2.bf16.msra.mxu0 %v1639
    %2257 = vmatprep.subr.bf16.mxu0 %v1632
    %2258 = vmatpush2.bf16.msra.mxu0 %v1631
    %2259 = vmatprep.subr.bf16.mxu0 %v1624
    %2260 = vmatpush2.bf16.msra.mxu0 %v1623
    %2261 = vmatprep.subr.bf16.mxu0 %v1616
    %2262 = vmatpush2.bf16.msra.mxu0 %v1615
    %2263 = vmatprep.mubr.bf16.mxu0 %v478
    %2264 = vmatmul.mubr.bf16.gmra.mxu0 %v477
    %v2265 = vpop.f32.mrf.mxu0
    %v2266 = vadd.f32 %v758, %v2265
    %v2267 = vpop.f32.mrf.mxu0
    %v2268 = vadd.f32 %v762, %v2267
    %v2269 = vpop.f32.mrf.mxu0
    %v2270 = vadd.f32 %v758, %v2269
    %v2271 = vpop.f32.mrf.mxu0
    %v2272 = vadd.f32 %v762, %v2271
    %2273 = vdwg.mxu0
    %2274 = vmatprep.subr.bf16.mxu0 %v1736
    %2275 = vmatpush1.bf16.msra.mxu0 %v1735
    %2276 = vmatprep.subr.bf16.mxu0 %v1728
    %2277 = vmatpush1.bf16.msra.mxu0 %v1727
    %2278 = vmatprep.subr.bf16.mxu0 %v1720
    %2279 = vmatpush1.bf16.msra.mxu0 %v1719
    %2280 = vmatprep.subr.bf16.mxu0 %v1712
    %2281 = vmatpush1.bf16.msra.mxu0 %v1711
    %2282 = vmatprep.subr.bf16.mxu0 %v1704
    %2283 = vmatpush1.bf16.msra.mxu0 %v1703
    %2284 = vmatprep.subr.bf16.mxu0 %v1696
    %2285 = vmatpush1.bf16.msra.mxu0 %v1695
    %2286 = vmatprep.subr.bf16.mxu0 %v1688
    %2287 = vmatpush1.bf16.msra.mxu0 %v1687
    %2288 = vmatprep.subr.bf16.mxu0 %v1680
    %2289 = vmatpush1.bf16.msra.mxu0 %v1679
    %2290 = vmatprep.subr.bf16.mxu0 %v1800
    %2291 = vmatpush2.bf16.msra.mxu0 %v1799
    %2292 = vmatprep.subr.bf16.mxu0 %v1792
    %2293 = vmatpush2.bf16.msra.mxu0 %v1791
    %2294 = vmatprep.subr.bf16.mxu0 %v1784
    %2295 = vmatpush2.bf16.msra.mxu0 %v1783
    %2296 = vmatprep.subr.bf16.mxu0 %v1776
    %2297 = vmatpush2.bf16.msra.mxu0 %v1775
    %2298 = vmatprep.subr.bf16.mxu0 %v1768
    %2299 = vmatpush2.bf16.msra.mxu0 %v1767
    %2300 = vmatprep.subr.bf16.mxu0 %v1760
    %2301 = vmatpush2.bf16.msra.mxu0 %v1759
    %2302 = vmatprep.subr.bf16.mxu0 %v1752
    %2303 = vmatpush2.bf16.msra.mxu0 %v1751
    %2304 = vmatprep.subr.bf16.mxu0 %v1744
    %2305 = vmatpush2.bf16.msra.mxu0 %v1743
    %2306 = vmatprep.mubr.bf16.mxu0 %v480
    %2307 = vmatmul.mubr.bf16.gmra.mxu0 %v479
    %v2308 = vpop.f32.mrf.mxu0
    %v2309 = vadd.f32 %v2266, %v2308
    %v2310 = vpop.f32.mrf.mxu0
    %v2311 = vadd.f32 %v2268, %v2310
    %v2312 = vpop.f32.mrf.mxu0
    %v2313 = vadd.f32 %v2270, %v2312
    %v2314 = vpop.f32.mrf.mxu0
    %v2315 = vadd.f32 %v2272, %v2314
    %2316 = vdwg.mxu0
    %2317 = vmatprep.subr.bf16.mxu0 %v1610
    %2318 = vmatpush1.bf16.msra.mxu0 %v1609
    %2319 = vmatprep.subr.bf16.mxu0 %v1602
    %2320 = vmatpush1.bf16.msra.mxu0 %v1601
    %2321 = vmatprep.subr.bf16.mxu0 %v1594
    %2322 = vmatpush1.bf16.msra.mxu0 %v1593
    %2323 = vmatprep.subr.bf16.mxu0 %v1586
    %2324 = vmatpush1.bf16.msra.mxu0 %v1585
    %2325 = vmatprep.subr.bf16.mxu0 %v1578
    %2326 = vmatpush1.bf16.msra.mxu0 %v1577
    %2327 = vmatprep.subr.bf16.mxu0 %v1570
    %2328 = vmatpush1.bf16.msra.mxu0 %v1569
    %2329 = vmatprep.subr.bf16.mxu0 %v1562
    %2330 = vmatpush1.bf16.msra.mxu0 %v1561
    %2331 = vmatprep.subr.bf16.mxu0 %v1554
    %2332 = vmatpush1.bf16.msra.mxu0 %v1553
    %2333 = vmatprep.subr.bf16.mxu0 %v1674
    %2334 = vmatpush2.bf16.msra.mxu0 %v1673
    %2335 = vmatprep.subr.bf16.mxu0 %v1666
    %2336 = vmatpush2.bf16.msra.mxu0 %v1665
    %2337 = vmatprep.subr.bf16.mxu0 %v1658
    %2338 = vmatpush2.bf16.msra.mxu0 %v1657
    %2339 = vmatprep.subr.bf16.mxu0 %v1650
    %2340 = vmatpush2.bf16.msra.mxu0 %v1649
    %2341 = vmatprep.subr.bf16.mxu0 %v1642
    %2342 = vmatpush2.bf16.msra.mxu0 %v1641
    %2343 = vmatprep.subr.bf16.mxu0 %v1634
    %2344 = vmatpush2.bf16.msra.mxu0 %v1633
    %2345 = vmatprep.subr.bf16.mxu0 %v1626
    %2346 = vmatpush2.bf16.msra.mxu0 %v1625
    %2347 = vmatprep.subr.bf16.mxu0 %v1618
    %2348 = vmatpush2.bf16.msra.mxu0 %v1617
    %2349 = vmatprep.mubr.bf16.mxu0 %v478
    %2350 = vmatmul.mubr.bf16.gmra.mxu0 %v477
    %v2351 = vpop.f32.mrf.mxu0
    %v2352 = vadd.f32 %v766, %v2351
    %v2353 = vpop.f32.mrf.mxu0
    %v2354 = vadd.f32 %v770, %v2353
    %v2355 = vpop.f32.mrf.mxu0
    %v2356 = vadd.f32 %v766, %v2355
    %v2357 = vpop.f32.mrf.mxu0
    %v2358 = vadd.f32 %v770, %v2357
    %2359 = vdwg.mxu0
    %2360 = vmatprep.subr.bf16.mxu0 %v1738
    %2361 = vmatpush1.bf16.msra.mxu0 %v1737
    %2362 = vmatprep.subr.bf16.mxu0 %v1730
    %2363 = vmatpush1.bf16.msra.mxu0 %v1729
    %2364 = vmatprep.subr.bf16.mxu0 %v1722
    %2365 = vmatpush1.bf16.msra.mxu0 %v1721
    %2366 = vmatprep.subr.bf16.mxu0 %v1714
    %2367 = vmatpush1.bf16.msra.mxu0 %v1713
    %2368 = vmatprep.subr.bf16.mxu0 %v1706
    %2369 = vmatpush1.bf16.msra.mxu0 %v1705
    %2370 = vmatprep.subr.bf16.mxu0 %v1698
    %2371 = vmatpush1.bf16.msra.mxu0 %v1697
    %2372 = vmatprep.subr.bf16.mxu0 %v1690
    %2373 = vmatpush1.bf16.msra.mxu0 %v1689
    %2374 = vmatprep.subr.bf16.mxu0 %v1682
    %2375 = vmatpush1.bf16.msra.mxu0 %v1681
    %2376 = vmatprep.subr.bf16.mxu0 %v1802
    %2377 = vmatpush2.bf16.msra.mxu0 %v1801
    %2378 = vmatprep.subr.bf16.mxu0 %v1794
    %2379 = vmatpush2.bf16.msra.mxu0 %v1793
    %2380 = vmatprep.subr.bf16.mxu0 %v1786
    %2381 = vmatpush2.bf16.msra.mxu0 %v1785
    %2382 = vmatprep.subr.bf16.mxu0 %v1778
    %2383 = vmatpush2.bf16.msra.mxu0 %v1777
    %2384 = vmatprep.subr.bf16.mxu0 %v1770
    %2385 = vmatpush2.bf16.msra.mxu0 %v1769
    %2386 = vmatprep.subr.bf16.mxu0 %v1762
    %2387 = vmatpush2.bf16.msra.mxu0 %v1761
    %2388 = vmatprep.subr.bf16.mxu0 %v1754
    %2389 = vmatpush2.bf16.msra.mxu0 %v1753
    %2390 = vmatprep.subr.bf16.mxu0 %v1746
    %2391 = vmatpush2.bf16.msra.mxu0 %v1745
    %2392 = vmatprep.mubr.bf16.mxu0 %v480
    %2393 = vmatmul.mubr.bf16.gmra.mxu0 %v479
    %v2394 = vpop.f32.mrf.mxu0
    %v2395 = vadd.f32 %v2352, %v2394
    %v2396 = vpop.f32.mrf.mxu0
    %v2397 = vadd.f32 %v2354, %v2396
    %v2398 = vpop.f32.mrf.mxu0
    %v2399 = vadd.f32 %v2356, %v2398
    %v2400 = vpop.f32.mrf.mxu0
    %v2401 = vadd.f32 %v2358, %v2400
    %2402 = vdwg.mxu0
    %v2403 = vmax.f32 %v2137, 0.0
    %v2404 = vmax.f32 %v2139, 0.0
    %v2405 = vmax.f32 %v2223, 0.0
    %v2406 = vmax.f32 %v2225, 0.0
    %v2407 = vmax.f32 %v2309, 0.0
    %v2408 = vmax.f32 %v2311, 0.0
    %v2409 = vmax.f32 %v2395, 0.0
    %v2410 = vmax.f32 %v2397, 0.0
    %v2411 = vmax.f32 %v2141, 0.0
    %v2412 = vmax.f32 %v2143, 0.0
    %v2413 = vmax.f32 %v2227, 0.0
    %v2414 = vmax.f32 %v2229, 0.0
    %v2415 = vmax.f32 %v2313, 0.0
    %v2416 = vmax.f32 %v2315, 0.0
    %v2417 = vmax.f32 %v2399, 0.0
    %v2418 = vmax.f32 %v2401, 0.0
    %v2419 = vpack.c.bf16 %v2411, %v2403
    %v2420 = vpack.c.bf16 %v2412, %v2404
    %v2421 = vpack.c.bf16 %v2413, %v2405
    %v2422 = vpack.c.bf16 %v2414, %v2406
    %v2423 = vpack.c.bf16 %v2415, %v2407
    %v2424 = vpack.c.bf16 %v2416, %v2408
    %v2425 = vpack.c.bf16 %v2417, %v2409
    %v2426 = vpack.c.bf16 %v2418, %v2410
    %v2427 = vld [vmem:[#allocation6] sm:$0xff]
    %v2428 = vld [vmem:[#allocation6 + $0x8] sm:$0xff]
    %v2429 = vld [vmem:[#allocation6 + $0x10] sm:$0xff]
    %v2430 = vld [vmem:[#allocation6 + $0x18] sm:$0xff]
    %v2431 = vld [vmem:[#allocation6 + $0x20] sm:$0xff]
    %v2432 = vld [vmem:[#allocation6 + $0x28] sm:$0xff]
    %v2433 = vld [vmem:[#allocation6 + $0x30] sm:$0xff]
    %v2434 = vld [vmem:[#allocation6 + $0x38] sm:$0xff]
    %v2435 = vld [vmem:[#allocation6 + $0x40] sm:$0xff]
    %v2436 = vld [vmem:[#allocation6 + $0x48] sm:$0xff]
    %v2437 = vld [vmem:[#allocation6 + $0x50] sm:$0xff]
    %v2438 = vld [vmem:[#allocation6 + $0x58] sm:$0xff]
    %v2439 = vld [vmem:[#allocation6 + $0x60] sm:$0xff]
    %v2440 = vld [vmem:[#allocation6 + $0x68] sm:$0xff]
    %v2441 = vld [vmem:[#allocation6 + $0x70] sm:$0xff]
    %v2442 = vld [vmem:[#allocation6 + $0x78] sm:$0xff]
    %v2443 = vld [vmem:[#allocation6 + $0x80] sm:$0xff]
    %v2444 = vld [vmem:[#allocation6 + $0x88] sm:$0xff]
    %v2445 = vld [vmem:[#allocation6 + $0x90] sm:$0xff]
    %v2446 = vld [vmem:[#allocation6 + $0x98] sm:$0xff]
    %v2447 = vld [vmem:[#allocation6 + $0xa0] sm:$0xff]
    %v2448 = vld [vmem:[#allocation6 + $0xa8] sm:$0xff]
    %v2449 = vld [vmem:[#allocation6 + $0xb0] sm:$0xff]
    %v2450 = vld [vmem:[#allocation6 + $0xb8] sm:$0xff]
    %v2451 = vld [vmem:[#allocation6 + $0xc0] sm:$0xff]
    %v2452 = vld [vmem:[#allocation6 + $0xc8] sm:$0xff]
    %v2453 = vld [vmem:[#allocation6 + $0xd0] sm:$0xff]
    %v2454 = vld [vmem:[#allocation6 + $0xd8] sm:$0xff]
    %v2455 = vld [vmem:[#allocation6 + $0xe0] sm:$0xff]
    %v2456 = vld [vmem:[#allocation6 + $0xe8] sm:$0xff]
    %v2457 = vld [vmem:[#allocation6 + $0xf0] sm:$0xff]
    %v2458 = vld [vmem:[#allocation6 + $0xf8] sm:$0xff]
    %v2459 = vld [vmem:[#allocation6 + $0x100] sm:$0xff]
    %v2460 = vld [vmem:[#allocation6 + $0x108] sm:$0xff]
    %v2461 = vld [vmem:[#allocation6 + $0x110] sm:$0xff]
    %v2462 = vld [vmem:[#allocation6 + $0x118] sm:$0xff]
    %v2463 = vld [vmem:[#allocation6 + $0x120] sm:$0xff]
    %v2464 = vld [vmem:[#allocation6 + $0x128] sm:$0xff]
    %v2465 = vld [vmem:[#allocation6 + $0x130] sm:$0xff]
    %v2466 = vld [vmem:[#allocation6 + $0x138] sm:$0xff]
    %v2467 = vld [vmem:[#allocation6 + $0x140] sm:$0xff]
    %v2468 = vld [vmem:[#allocation6 + $0x148] sm:$0xff]
    %v2469 = vld [vmem:[#allocation6 + $0x150] sm:$0xff]
    %v2470 = vld [vmem:[#allocation6 + $0x158] sm:$0xff]
    %v2471 = vld [vmem:[#allocation6 + $0x160] sm:$0xff]
    %v2472 = vld [vmem:[#allocation6 + $0x168] sm:$0xff]
    %v2473 = vld [vmem:[#allocation6 + $0x170] sm:$0xff]
    %v2474 = vld [vmem:[#allocation6 + $0x178] sm:$0xff]
    %v2475 = vld [vmem:[#allocation6 + $0x180] sm:$0xff]
    %v2476 = vld [vmem:[#allocation6 + $0x188] sm:$0xff]
    %v2477 = vld [vmem:[#allocation6 + $0x190] sm:$0xff]
    %v2478 = vld [vmem:[#allocation6 + $0x198] sm:$0xff]
    %v2479 = vld [vmem:[#allocation6 + $0x1a0] sm:$0xff]
    %v2480 = vld [vmem:[#allocation6 + $0x1a8] sm:$0xff]
    %v2481 = vld [vmem:[#allocation6 + $0x1b0] sm:$0xff]
    %v2482 = vld [vmem:[#allocation6 + $0x1b8] sm:$0xff]
    %v2483 = vld [vmem:[#allocation6 + $0x1c0] sm:$0xff]
    %v2484 = vld [vmem:[#allocation6 + $0x1c8] sm:$0xff]
    %v2485 = vld [vmem:[#allocation6 + $0x1d0] sm:$0xff]
    %v2486 = vld [vmem:[#allocation6 + $0x1d8] sm:$0xff]
    %v2487 = vld [vmem:[#allocation6 + $0x1e0] sm:$0xff]
    %v2488 = vld [vmem:[#allocation6 + $0x1e8] sm:$0xff]
    %v2489 = vld [vmem:[#allocation6 + $0x1f0] sm:$0xff]
    %v2490 = vld [vmem:[#allocation6 + $0x1f8] sm:$0xff]
    %v2491 = vld [vmem:[#allocation6 + $0x200] sm:$0xff]
    %v2492 = vld [vmem:[#allocation6 + $0x208] sm:$0xff]
    %v2493 = vld [vmem:[#allocation6 + $0x210] sm:$0xff]
    %v2494 = vld [vmem:[#allocation6 + $0x218] sm:$0xff]
    %v2495 = vld [vmem:[#allocation6 + $0x220] sm:$0xff]
    %v2496 = vld [vmem:[#allocation6 + $0x228] sm:$0xff]
    %v2497 = vld [vmem:[#allocation6 + $0x230] sm:$0xff]
    %v2498 = vld [vmem:[#allocation6 + $0x238] sm:$0xff]
    %v2499 = vld [vmem:[#allocation6 + $0x240] sm:$0xff]
    %v2500 = vld [vmem:[#allocation6 + $0x248] sm:$0xff]
    %v2501 = vld [vmem:[#allocation6 + $0x250] sm:$0xff]
    %v2502 = vld [vmem:[#allocation6 + $0x258] sm:$0xff]
    %v2503 = vld [vmem:[#allocation6 + $0x260] sm:$0xff]
    %v2504 = vld [vmem:[#allocation6 + $0x268] sm:$0xff]
    %v2505 = vld [vmem:[#allocation6 + $0x270] sm:$0xff]
    %v2506 = vld [vmem:[#allocation6 + $0x278] sm:$0xff]
    %v2507 = vld [vmem:[#allocation6 + $0x280] sm:$0xff]
    %v2508 = vld [vmem:[#allocation6 + $0x288] sm:$0xff]
    %v2509 = vld [vmem:[#allocation6 + $0x290] sm:$0xff]
    %v2510 = vld [vmem:[#allocation6 + $0x298] sm:$0xff]
    %v2511 = vld [vmem:[#allocation6 + $0x2a0] sm:$0xff]
    %v2512 = vld [vmem:[#allocation6 + $0x2a8] sm:$0xff]
    %v2513 = vld [vmem:[#allocation6 + $0x2b0] sm:$0xff]
    %v2514 = vld [vmem:[#allocation6 + $0x2b8] sm:$0xff]
    %v2515 = vld [vmem:[#allocation6 + $0x2c0] sm:$0xff]
    %v2516 = vld [vmem:[#allocation6 + $0x2c8] sm:$0xff]
    %v2517 = vld [vmem:[#allocation6 + $0x2d0] sm:$0xff]
    %v2518 = vld [vmem:[#allocation6 + $0x2d8] sm:$0xff]
    %v2519 = vld [vmem:[#allocation6 + $0x2e0] sm:$0xff]
    %v2520 = vld [vmem:[#allocation6 + $0x2e8] sm:$0xff]
    %v2521 = vld [vmem:[#allocation6 + $0x2f0] sm:$0xff]
    %v2522 = vld [vmem:[#allocation6 + $0x2f8] sm:$0xff]
    %v2523 = vld [vmem:[#allocation6 + $0x300] sm:$0xff]
    %v2524 = vld [vmem:[#allocation6 + $0x308] sm:$0xff]
    %v2525 = vld [vmem:[#allocation6 + $0x310] sm:$0xff]
    %v2526 = vld [vmem:[#allocation6 + $0x318] sm:$0xff]
    %v2527 = vld [vmem:[#allocation6 + $0x320] sm:$0xff]
    %v2528 = vld [vmem:[#allocation6 + $0x328] sm:$0xff]
    %v2529 = vld [vmem:[#allocation6 + $0x330] sm:$0xff]
    %v2530 = vld [vmem:[#allocation6 + $0x338] sm:$0xff]
    %v2531 = vld [vmem:[#allocation6 + $0x340] sm:$0xff]
    %v2532 = vld [vmem:[#allocation6 + $0x348] sm:$0xff]
    %v2533 = vld [vmem:[#allocation6 + $0x350] sm:$0xff]
    %v2534 = vld [vmem:[#allocation6 + $0x358] sm:$0xff]
    %v2535 = vld [vmem:[#allocation6 + $0x360] sm:$0xff]
    %v2536 = vld [vmem:[#allocation6 + $0x368] sm:$0xff]
    %v2537 = vld [vmem:[#allocation6 + $0x370] sm:$0xff]
    %v2538 = vld [vmem:[#allocation6 + $0x378] sm:$0xff]
    %v2539 = vld [vmem:[#allocation6 + $0x380] sm:$0xff]
    %v2540 = vld [vmem:[#allocation6 + $0x388] sm:$0xff]
    %v2541 = vld [vmem:[#allocation6 + $0x390] sm:$0xff]
    %v2542 = vld [vmem:[#allocation6 + $0x398] sm:$0xff]
    %v2543 = vld [vmem:[#allocation6 + $0x3a0] sm:$0xff]
    %v2544 = vld [vmem:[#allocation6 + $0x3a8] sm:$0xff]
    %v2545 = vld [vmem:[#allocation6 + $0x3b0] sm:$0xff]
    %v2546 = vld [vmem:[#allocation6 + $0x3b8] sm:$0xff]
    %v2547 = vld [vmem:[#allocation6 + $0x3c0] sm:$0xff]
    %v2548 = vld [vmem:[#allocation6 + $0x3c8] sm:$0xff]
    %v2549 = vld [vmem:[#allocation6 + $0x3d0] sm:$0xff]
    %v2550 = vld [vmem:[#allocation6 + $0x3d8] sm:$0xff]
    %v2551 = vld [vmem:[#allocation6 + $0x3e0] sm:$0xff]
    %v2552 = vld [vmem:[#allocation6 + $0x3e8] sm:$0xff]
    %v2553 = vld [vmem:[#allocation6 + $0x3f0] sm:$0xff]
    %v2554 = vld [vmem:[#allocation6 + $0x3f8] sm:$0xff]
    %v2555 = vld [vmem:[#allocation6 + $0x400] sm:$0xff]
    %v2556 = vld [vmem:[#allocation6 + $0x408] sm:$0xff]
    %v2557 = vld [vmem:[#allocation6 + $0x410] sm:$0xff]
    %v2558 = vld [vmem:[#allocation6 + $0x418] sm:$0xff]
    %v2559 = vld [vmem:[#allocation6 + $0x420] sm:$0xff]
    %v2560 = vld [vmem:[#allocation6 + $0x428] sm:$0xff]
    %v2561 = vld [vmem:[#allocation6 + $0x430] sm:$0xff]
    %v2562 = vld [vmem:[#allocation6 + $0x438] sm:$0xff]
    %v2563 = vld [vmem:[#allocation6 + $0x440] sm:$0xff]
    %v2564 = vld [vmem:[#allocation6 + $0x448] sm:$0xff]
    %v2565 = vld [vmem:[#allocation6 + $0x450] sm:$0xff]
    %v2566 = vld [vmem:[#allocation6 + $0x458] sm:$0xff]
    %v2567 = vld [vmem:[#allocation6 + $0x460] sm:$0xff]
    %v2568 = vld [vmem:[#allocation6 + $0x468] sm:$0xff]
    %v2569 = vld [vmem:[#allocation6 + $0x470] sm:$0xff]
    %v2570 = vld [vmem:[#allocation6 + $0x478] sm:$0xff]
    %v2571 = vld [vmem:[#allocation6 + $0x480] sm:$0xff]
    %v2572 = vld [vmem:[#allocation6 + $0x488] sm:$0xff]
    %v2573 = vld [vmem:[#allocation6 + $0x490] sm:$0xff]
    %v2574 = vld [vmem:[#allocation6 + $0x498] sm:$0xff]
    %v2575 = vld [vmem:[#allocation6 + $0x4a0] sm:$0xff]
    %v2576 = vld [vmem:[#allocation6 + $0x4a8] sm:$0xff]
    %v2577 = vld [vmem:[#allocation6 + $0x4b0] sm:$0xff]
    %v2578 = vld [vmem:[#allocation6 + $0x4b8] sm:$0xff]
    %v2579 = vld [vmem:[#allocation6 + $0x4c0] sm:$0xff]
    %v2580 = vld [vmem:[#allocation6 + $0x4c8] sm:$0xff]
    %v2581 = vld [vmem:[#allocation6 + $0x4d0] sm:$0xff]
    %v2582 = vld [vmem:[#allocation6 + $0x4d8] sm:$0xff]
    %v2583 = vld [vmem:[#allocation6 + $0x4e0] sm:$0xff]
    %v2584 = vld [vmem:[#allocation6 + $0x4e8] sm:$0xff]
    %v2585 = vld [vmem:[#allocation6 + $0x4f0] sm:$0xff]
    %v2586 = vld [vmem:[#allocation6 + $0x4f8] sm:$0xff]
    %v2587 = vld [vmem:[#allocation6 + $0x500] sm:$0xff]
    %v2588 = vld [vmem:[#allocation6 + $0x508] sm:$0xff]
    %v2589 = vld [vmem:[#allocation6 + $0x510] sm:$0xff]
    %v2590 = vld [vmem:[#allocation6 + $0x518] sm:$0xff]
    %v2591 = vld [vmem:[#allocation6 + $0x520] sm:$0xff]
    %v2592 = vld [vmem:[#allocation6 + $0x528] sm:$0xff]
    %v2593 = vld [vmem:[#allocation6 + $0x530] sm:$0xff]
    %v2594 = vld [vmem:[#allocation6 + $0x538] sm:$0xff]
    %v2595 = vld [vmem:[#allocation6 + $0x540] sm:$0xff]
    %v2596 = vld [vmem:[#allocation6 + $0x548] sm:$0xff]
    %v2597 = vld [vmem:[#allocation6 + $0x550] sm:$0xff]
    %v2598 = vld [vmem:[#allocation6 + $0x558] sm:$0xff]
    %v2599 = vld [vmem:[#allocation6 + $0x560] sm:$0xff]
    %v2600 = vld [vmem:[#allocation6 + $0x568] sm:$0xff]
    %v2601 = vld [vmem:[#allocation6 + $0x570] sm:$0xff]
    %v2602 = vld [vmem:[#allocation6 + $0x578] sm:$0xff]
    %v2603 = vld [vmem:[#allocation6 + $0x580] sm:$0xff]
    %v2604 = vld [vmem:[#allocation6 + $0x588] sm:$0xff]
    %v2605 = vld [vmem:[#allocation6 + $0x590] sm:$0xff]
    %v2606 = vld [vmem:[#allocation6 + $0x598] sm:$0xff]
    %v2607 = vld [vmem:[#allocation6 + $0x5a0] sm:$0xff]
    %v2608 = vld [vmem:[#allocation6 + $0x5a8] sm:$0xff]
    %v2609 = vld [vmem:[#allocation6 + $0x5b0] sm:$0xff]
    %v2610 = vld [vmem:[#allocation6 + $0x5b8] sm:$0xff]
    %v2611 = vld [vmem:[#allocation6 + $0x5c0] sm:$0xff]
    %v2612 = vld [vmem:[#allocation6 + $0x5c8] sm:$0xff]
    %v2613 = vld [vmem:[#allocation6 + $0x5d0] sm:$0xff]
    %v2614 = vld [vmem:[#allocation6 + $0x5d8] sm:$0xff]
    %v2615 = vld [vmem:[#allocation6 + $0x5e0] sm:$0xff]
    %v2616 = vld [vmem:[#allocation6 + $0x5e8] sm:$0xff]
    %v2617 = vld [vmem:[#allocation6 + $0x5f0] sm:$0xff]
    %v2618 = vld [vmem:[#allocation6 + $0x5f8] sm:$0xff]
    %v2619 = vld [vmem:[#allocation6 + $0x600] sm:$0xff]
    %v2620 = vld [vmem:[#allocation6 + $0x608] sm:$0xff]
    %v2621 = vld [vmem:[#allocation6 + $0x610] sm:$0xff]
    %v2622 = vld [vmem:[#allocation6 + $0x618] sm:$0xff]
    %v2623 = vld [vmem:[#allocation6 + $0x620] sm:$0xff]
    %v2624 = vld [vmem:[#allocation6 + $0x628] sm:$0xff]
    %v2625 = vld [vmem:[#allocation6 + $0x630] sm:$0xff]
    %v2626 = vld [vmem:[#allocation6 + $0x638] sm:$0xff]
    %v2627 = vld [vmem:[#allocation6 + $0x640] sm:$0xff]
    %v2628 = vld [vmem:[#allocation6 + $0x648] sm:$0xff]
    %v2629 = vld [vmem:[#allocation6 + $0x650] sm:$0xff]
    %v2630 = vld [vmem:[#allocation6 + $0x658] sm:$0xff]
    %v2631 = vld [vmem:[#allocation6 + $0x660] sm:$0xff]
    %v2632 = vld [vmem:[#allocation6 + $0x668] sm:$0xff]
    %v2633 = vld [vmem:[#allocation6 + $0x670] sm:$0xff]
    %v2634 = vld [vmem:[#allocation6 + $0x678] sm:$0xff]
    %v2635 = vld [vmem:[#allocation6 + $0x680] sm:$0xff]
    %v2636 = vld [vmem:[#allocation6 + $0x688] sm:$0xff]
    %v2637 = vld [vmem:[#allocation6 + $0x690] sm:$0xff]
    %v2638 = vld [vmem:[#allocation6 + $0x698] sm:$0xff]
    %v2639 = vld [vmem:[#allocation6 + $0x6a0] sm:$0xff]
    %v2640 = vld [vmem:[#allocation6 + $0x6a8] sm:$0xff]
    %v2641 = vld [vmem:[#allocation6 + $0x6b0] sm:$0xff]
    %v2642 = vld [vmem:[#allocation6 + $0x6b8] sm:$0xff]
    %v2643 = vld [vmem:[#allocation6 + $0x6c0] sm:$0xff]
    %v2644 = vld [vmem:[#allocation6 + $0x6c8] sm:$0xff]
    %v2645 = vld [vmem:[#allocation6 + $0x6d0] sm:$0xff]
    %v2646 = vld [vmem:[#allocation6 + $0x6d8] sm:$0xff]
    %v2647 = vld [vmem:[#allocation6 + $0x6e0] sm:$0xff]
    %v2648 = vld [vmem:[#allocation6 + $0x6e8] sm:$0xff]
    %v2649 = vld [vmem:[#allocation6 + $0x6f0] sm:$0xff]
    %v2650 = vld [vmem:[#allocation6 + $0x6f8] sm:$0xff]
    %v2651 = vld [vmem:[#allocation6 + $0x700] sm:$0xff]
    %v2652 = vld [vmem:[#allocation6 + $0x708] sm:$0xff]
    %v2653 = vld [vmem:[#allocation6 + $0x710] sm:$0xff]
    %v2654 = vld [vmem:[#allocation6 + $0x718] sm:$0xff]
    %v2655 = vld [vmem:[#allocation6 + $0x720] sm:$0xff]
    %v2656 = vld [vmem:[#allocation6 + $0x728] sm:$0xff]
    %v2657 = vld [vmem:[#allocation6 + $0x730] sm:$0xff]
    %v2658 = vld [vmem:[#allocation6 + $0x738] sm:$0xff]
    %v2659 = vld [vmem:[#allocation6 + $0x740] sm:$0xff]
    %v2660 = vld [vmem:[#allocation6 + $0x748] sm:$0xff]
    %v2661 = vld [vmem:[#allocation6 + $0x750] sm:$0xff]
    %v2662 = vld [vmem:[#allocation6 + $0x758] sm:$0xff]
    %v2663 = vld [vmem:[#allocation6 + $0x760] sm:$0xff]
    %v2664 = vld [vmem:[#allocation6 + $0x768] sm:$0xff]
    %v2665 = vld [vmem:[#allocation6 + $0x770] sm:$0xff]
    %v2666 = vld [vmem:[#allocation6 + $0x778] sm:$0xff]
    %v2667 = vld [vmem:[#allocation6 + $0x780] sm:$0xff]
    %v2668 = vld [vmem:[#allocation6 + $0x788] sm:$0xff]
    %v2669 = vld [vmem:[#allocation6 + $0x790] sm:$0xff]
    %v2670 = vld [vmem:[#allocation6 + $0x798] sm:$0xff]
    %v2671 = vld [vmem:[#allocation6 + $0x7a0] sm:$0xff]
    %v2672 = vld [vmem:[#allocation6 + $0x7a8] sm:$0xff]
    %v2673 = vld [vmem:[#allocation6 + $0x7b0] sm:$0xff]
    %v2674 = vld [vmem:[#allocation6 + $0x7b8] sm:$0xff]
    %v2675 = vld [vmem:[#allocation6 + $0x7c0] sm:$0xff]
    %v2676 = vld [vmem:[#allocation6 + $0x7c8] sm:$0xff]
    %v2677 = vld [vmem:[#allocation6 + $0x7d0] sm:$0xff]
    %v2678 = vld [vmem:[#allocation6 + $0x7d8] sm:$0xff]
    %v2679 = vld [vmem:[#allocation6 + $0x7e0] sm:$0xff]
    %v2680 = vld [vmem:[#allocation6 + $0x7e8] sm:$0xff]
    %v2681 = vld [vmem:[#allocation6 + $0x7f0] sm:$0xff]
    %v2682 = vld [vmem:[#allocation6 + $0x7f8] sm:$0xff]
    %v2683 = vld [vmem:[%s6] sm:$0xf]
    %v2685 = vlaneseq
    %v2686 = vshrl.u32 %v2685, 7
    %v2687 = vsub.s32 0, %v2686
    %v2688 = vrot.slane %v2683, %v2687
    %v2689 = vlaneseq
    %v2690 = vshrl.u32 %v2689, 7
    %v2691 = vsub.s32 1, %v2690
    %v2692 = vrot.slane %v2683, %v2691
    %v2693 = vlaneseq
    %v2694 = vshrl.u32 %v2693, 7
    %v2695 = vsub.s32 2, %v2694
    %v2696 = vrot.slane %v2683, %v2695
    %v2697 = vlaneseq
    %v2698 = vshrl.u32 %v2697, 7
    %v2699 = vsub.s32 3, %v2698
    %v2700 = vrot.slane %v2683, %v2699
    %v2961 = vunpack.c.l.b16 %v2427
    %v2962 = vunpack.c.h.b16 %v2427
    %v2963 = vunpack.c.l.b16 %v2428
    %v2964 = vunpack.c.h.b16 %v2428
    %v2965 = vunpack.c.l.b16 %v2429
    %v2966 = vunpack.c.h.b16 %v2429
    %v2967 = vunpack.c.l.b16 %v2430
    %v2968 = vunpack.c.h.b16 %v2430
    %v2969 = vunpack.c.l.b16 %v2431
    %v2970 = vunpack.c.h.b16 %v2431
    %v2971 = vunpack.c.l.b16 %v2432
    %v2972 = vunpack.c.h.b16 %v2432
    %v2973 = vunpack.c.l.b16 %v2433
    %v2974 = vunpack.c.h.b16 %v2433
    %v2975 = vunpack.c.l.b16 %v2434
    %v2976 = vunpack.c.h.b16 %v2434
    %v2977 = vunpack.c.l.b16 %v2435
    %v2978 = vunpack.c.h.b16 %v2435
    %v2979 = vunpack.c.l.b16 %v2436
    %v2980 = vunpack.c.h.b16 %v2436
    %v2981 = vunpack.c.l.b16 %v2437
    %v2982 = vunpack.c.h.b16 %v2437
    %v2983 = vunpack.c.l.b16 %v2438
    %v2984 = vunpack.c.h.b16 %v2438
    %v2985 = vunpack.c.l.b16 %v2439
    %v2986 = vunpack.c.h.b16 %v2439
    %v2987 = vunpack.c.l.b16 %v2440
    %v2988 = vunpack.c.h.b16 %v2440
    %v2989 = vunpack.c.l.b16 %v2441
    %v2990 = vunpack.c.h.b16 %v2441
    %v2991 = vunpack.c.l.b16 %v2442
    %v2992 = vunpack.c.h.b16 %v2442
    %v2993 = vunpack.c.l.b16 %v2443
    %v2994 = vunpack.c.h.b16 %v2443
    %v2995 = vunpack.c.l.b16 %v2444
    %v2996 = vunpack.c.h.b16 %v2444
    %v2997 = vunpack.c.l.b16 %v2445
    %v2998 = vunpack.c.h.b16 %v2445
    %v2999 = vunpack.c.l.b16 %v2446
    %v3000 = vunpack.c.h.b16 %v2446
    %v3001 = vunpack.c.l.b16 %v2447
    %v3002 = vunpack.c.h.b16 %v2447
    %v3003 = vunpack.c.l.b16 %v2448
    %v3004 = vunpack.c.h.b16 %v2448
    %v3005 = vunpack.c.l.b16 %v2449
    %v3006 = vunpack.c.h.b16 %v2449
    %v3007 = vunpack.c.l.b16 %v2450
    %v3008 = vunpack.c.h.b16 %v2450
    %v3009 = vunpack.c.l.b16 %v2451
    %v3010 = vunpack.c.h.b16 %v2451
    %v3011 = vunpack.c.l.b16 %v2452
    %v3012 = vunpack.c.h.b16 %v2452
    %v3013 = vunpack.c.l.b16 %v2453
    %v3014 = vunpack.c.h.b16 %v2453
    %v3015 = vunpack.c.l.b16 %v2454
    %v3016 = vunpack.c.h.b16 %v2454
    %v3017 = vunpack.c.l.b16 %v2455
    %v3018 = vunpack.c.h.b16 %v2455
    %v3019 = vunpack.c.l.b16 %v2456
    %v3020 = vunpack.c.h.b16 %v2456
    %v3021 = vunpack.c.l.b16 %v2457
    %v3022 = vunpack.c.h.b16 %v2457
    %v3023 = vunpack.c.l.b16 %v2458
    %v3024 = vunpack.c.h.b16 %v2458
    %v3025 = vunpack.c.l.b16 %v2459
    %v3026 = vunpack.c.h.b16 %v2459
    %v3027 = vunpack.c.l.b16 %v2460
    %v3028 = vunpack.c.h.b16 %v2460
    %v3029 = vunpack.c.l.b16 %v2461
    %v3030 = vunpack.c.h.b16 %v2461
    %v3031 = vunpack.c.l.b16 %v2462
    %v3032 = vunpack.c.h.b16 %v2462
    %v3033 = vunpack.c.l.b16 %v2463
    %v3034 = vunpack.c.h.b16 %v2463
    %v3035 = vunpack.c.l.b16 %v2464
    %v3036 = vunpack.c.h.b16 %v2464
    %v3037 = vunpack.c.l.b16 %v2465
    %v3038 = vunpack.c.h.b16 %v2465
    %v3039 = vunpack.c.l.b16 %v2466
    %v3040 = vunpack.c.h.b16 %v2466
    %v3041 = vunpack.c.l.b16 %v2467
    %v3042 = vunpack.c.h.b16 %v2467
    %v3043 = vunpack.c.l.b16 %v2468
    %v3044 = vunpack.c.h.b16 %v2468
    %v3045 = vunpack.c.l.b16 %v2469
    %v3046 = vunpack.c.h.b16 %v2469
    %v3047 = vunpack.c.l.b16 %v2470
    %v3048 = vunpack.c.h.b16 %v2470
    %v3049 = vunpack.c.l.b16 %v2471
    %v3050 = vunpack.c.h.b16 %v2471
    %v3051 = vunpack.c.l.b16 %v2472
    %v3052 = vunpack.c.h.b16 %v2472
    %v3053 = vunpack.c.l.b16 %v2473
    %v3054 = vunpack.c.h.b16 %v2473
    %v3055 = vunpack.c.l.b16 %v2474
    %v3056 = vunpack.c.h.b16 %v2474
    %v3057 = vunpack.c.l.b16 %v2475
    %v3058 = vunpack.c.h.b16 %v2475
    %v3059 = vunpack.c.l.b16 %v2476
    %v3060 = vunpack.c.h.b16 %v2476
    %v3061 = vunpack.c.l.b16 %v2477
    %v3062 = vunpack.c.h.b16 %v2477
    %v3063 = vunpack.c.l.b16 %v2478
    %v3064 = vunpack.c.h.b16 %v2478
    %v3065 = vunpack.c.l.b16 %v2479
    %v3066 = vunpack.c.h.b16 %v2479
    %v3067 = vunpack.c.l.b16 %v2480
    %v3068 = vunpack.c.h.b16 %v2480
    %v3069 = vunpack.c.l.b16 %v2481
    %v3070 = vunpack.c.h.b16 %v2481
    %v3071 = vunpack.c.l.b16 %v2482
    %v3072 = vunpack.c.h.b16 %v2482
    %v3073 = vunpack.c.l.b16 %v2483
    %v3074 = vunpack.c.h.b16 %v2483
    %v3075 = vunpack.c.l.b16 %v2484
    %v3076 = vunpack.c.h.b16 %v2484
    %v3077 = vunpack.c.l.b16 %v2485
    %v3078 = vunpack.c.h.b16 %v2485
    %v3079 = vunpack.c.l.b16 %v2486
    %v3080 = vunpack.c.h.b16 %v2486
    %v3081 = vunpack.c.l.b16 %v2487
    %v3082 = vunpack.c.h.b16 %v2487
    %v3083 = vunpack.c.l.b16 %v2488
    %v3084 = vunpack.c.h.b16 %v2488
    %v3085 = vunpack.c.l.b16 %v2489
    %v3086 = vunpack.c.h.b16 %v2489
    %v3087 = vunpack.c.l.b16 %v2490
    %v3088 = vunpack.c.h.b16 %v2490
    %v3089 = vunpack.c.l.b16 %v2491
    %v3090 = vunpack.c.h.b16 %v2491
    %v3091 = vunpack.c.l.b16 %v2492
    %v3092 = vunpack.c.h.b16 %v2492
    %v3093 = vunpack.c.l.b16 %v2493
    %v3094 = vunpack.c.h.b16 %v2493
    %v3095 = vunpack.c.l.b16 %v2494
    %v3096 = vunpack.c.h.b16 %v2494
    %v3097 = vunpack.c.l.b16 %v2495
    %v3098 = vunpack.c.h.b16 %v2495
    %v3099 = vunpack.c.l.b16 %v2496
    %v3100 = vunpack.c.h.b16 %v2496
    %v3101 = vunpack.c.l.b16 %v2497
    %v3102 = vunpack.c.h.b16 %v2497
    %v3103 = vunpack.c.l.b16 %v2498
    %v3104 = vunpack.c.h.b16 %v2498
    %v3105 = vunpack.c.l.b16 %v2499
    %v3106 = vunpack.c.h.b16 %v2499
    %v3107 = vunpack.c.l.b16 %v2500
    %v3108 = vunpack.c.h.b16 %v2500
    %v3109 = vunpack.c.l.b16 %v2501
    %v3110 = vunpack.c.h.b16 %v2501
    %v3111 = vunpack.c.l.b16 %v2502
    %v3112 = vunpack.c.h.b16 %v2502
    %v3113 = vunpack.c.l.b16 %v2503
    %v3114 = vunpack.c.h.b16 %v2503
    %v3115 = vunpack.c.l.b16 %v2504
    %v3116 = vunpack.c.h.b16 %v2504
    %v3117 = vunpack.c.l.b16 %v2505
    %v3118 = vunpack.c.h.b16 %v2505
    %v3119 = vunpack.c.l.b16 %v2506
    %v3120 = vunpack.c.h.b16 %v2506
    %v3121 = vunpack.c.l.b16 %v2507
    %v3122 = vunpack.c.h.b16 %v2507
    %v3123 = vunpack.c.l.b16 %v2508
    %v3124 = vunpack.c.h.b16 %v2508
    %v3125 = vunpack.c.l.b16 %v2509
    %v3126 = vunpack.c.h.b16 %v2509
    %v3127 = vunpack.c.l.b16 %v2510
    %v3128 = vunpack.c.h.b16 %v2510
    %v3129 = vunpack.c.l.b16 %v2511
    %v3130 = vunpack.c.h.b16 %v2511
    %v3131 = vunpack.c.l.b16 %v2512
    %v3132 = vunpack.c.h.b16 %v2512
    %v3133 = vunpack.c.l.b16 %v2513
    %v3134 = vunpack.c.h.b16 %v2513
    %v3135 = vunpack.c.l.b16 %v2514
    %v3136 = vunpack.c.h.b16 %v2514
    %v3137 = vunpack.c.l.b16 %v2515
    %v3138 = vunpack.c.h.b16 %v2515
    %v3139 = vunpack.c.l.b16 %v2516
    %v3140 = vunpack.c.h.b16 %v2516
    %v3141 = vunpack.c.l.b16 %v2517
    %v3142 = vunpack.c.h.b16 %v2517
    %v3143 = vunpack.c.l.b16 %v2518
    %v3144 = vunpack.c.h.b16 %v2518
    %v3145 = vunpack.c.l.b16 %v2519
    %v3146 = vunpack.c.h.b16 %v2519
    %v3147 = vunpack.c.l.b16 %v2520
    %v3148 = vunpack.c.h.b16 %v2520
    %v3149 = vunpack.c.l.b16 %v2521
    %v3150 = vunpack.c.h.b16 %v2521
    %v3151 = vunpack.c.l.b16 %v2522
    %v3152 = vunpack.c.h.b16 %v2522
    %v3153 = vunpack.c.l.b16 %v2523
    %v3154 = vunpack.c.h.b16 %v2523
    %v3155 = vunpack.c.l.b16 %v2524
    %v3156 = vunpack.c.h.b16 %v2524
    %v3157 = vunpack.c.l.b16 %v2525
    %v3158 = vunpack.c.h.b16 %v2525
    %v3159 = vunpack.c.l.b16 %v2526
    %v3160 = vunpack.c.h.b16 %v2526
    %v3161 = vunpack.c.l.b16 %v2527
    %v3162 = vunpack.c.h.b16 %v2527
    %v3163 = vunpack.c.l.b16 %v2528
    %v3164 = vunpack.c.h.b16 %v2528
    %v3165 = vunpack.c.l.b16 %v2529
    %v3166 = vunpack.c.h.b16 %v2529
    %v3167 = vunpack.c.l.b16 %v2530
    %v3168 = vunpack.c.h.b16 %v2530
    %v3169 = vunpack.c.l.b16 %v2531
    %v3170 = vunpack.c.h.b16 %v2531
    %v3171 = vunpack.c.l.b16 %v2532
    %v3172 = vunpack.c.h.b16 %v2532
    %v3173 = vunpack.c.l.b16 %v2533
    %v3174 = vunpack.c.h.b16 %v2533
    %v3175 = vunpack.c.l.b16 %v2534
    %v3176 = vunpack.c.h.b16 %v2534
    %v3177 = vunpack.c.l.b16 %v2535
    %v3178 = vunpack.c.h.b16 %v2535
    %v3179 = vunpack.c.l.b16 %v2536
    %v3180 = vunpack.c.h.b16 %v2536
    %v3181 = vunpack.c.l.b16 %v2537
    %v3182 = vunpack.c.h.b16 %v2537
    %v3183 = vunpack.c.l.b16 %v2538
    %v3184 = vunpack.c.h.b16 %v2538
    %v3185 = vunpack.c.l.b16 %v2539
    %v3186 = vunpack.c.h.b16 %v2539
    %v3187 = vunpack.c.l.b16 %v2540
    %v3188 = vunpack.c.h.b16 %v2540
    %v3189 = vunpack.c.l.b16 %v2541
    %v3190 = vunpack.c.h.b16 %v2541
    %v3191 = vunpack.c.l.b16 %v2542
    %v3192 = vunpack.c.h.b16 %v2542
    %v3193 = vunpack.c.l.b16 %v2543
    %v3194 = vunpack.c.h.b16 %v2543
    %v3195 = vunpack.c.l.b16 %v2544
    %v3196 = vunpack.c.h.b16 %v2544
    %v3197 = vunpack.c.l.b16 %v2545
    %v3198 = vunpack.c.h.b16 %v2545
    %v3199 = vunpack.c.l.b16 %v2546
    %v3200 = vunpack.c.h.b16 %v2546
    %v3201 = vunpack.c.l.b16 %v2547
    %v3202 = vunpack.c.h.b16 %v2547
    %v3203 = vunpack.c.l.b16 %v2548
    %v3204 = vunpack.c.h.b16 %v2548
    %v3205 = vunpack.c.l.b16 %v2549
    %v3206 = vunpack.c.h.b16 %v2549
    %v3207 = vunpack.c.l.b16 %v2550
    %v3208 = vunpack.c.h.b16 %v2550
    %v3209 = vunpack.c.l.b16 %v2551
    %v3210 = vunpack.c.h.b16 %v2551
    %v3211 = vunpack.c.l.b16 %v2552
    %v3212 = vunpack.c.h.b16 %v2552
    %v3213 = vunpack.c.l.b16 %v2553
    %v3214 = vunpack.c.h.b16 %v2553
    %v3215 = vunpack.c.l.b16 %v2554
    %v3216 = vunpack.c.h.b16 %v2554
    %v3217 = vunpack.c.l.b16 %v2555
    %v3218 = vunpack.c.h.b16 %v2555
    %v3219 = vunpack.c.l.b16 %v2556
    %v3220 = vunpack.c.h.b16 %v2556
    %v3221 = vunpack.c.l.b16 %v2557
    %v3222 = vunpack.c.h.b16 %v2557
    %v3223 = vunpack.c.l.b16 %v2558
    %v3224 = vunpack.c.h.b16 %v2558
    %v3225 = vunpack.c.l.b16 %v2559
    %v3226 = vunpack.c.h.b16 %v2559
    %v3227 = vunpack.c.l.b16 %v2560
    %v3228 = vunpack.c.h.b16 %v2560
    %v3229 = vunpack.c.l.b16 %v2561
    %v3230 = vunpack.c.h.b16 %v2561
    %v3231 = vunpack.c.l.b16 %v2562
    %v3232 = vunpack.c.h.b16 %v2562
    %v3233 = vunpack.c.l.b16 %v2563
    %v3234 = vunpack.c.h.b16 %v2563
    %v3235 = vunpack.c.l.b16 %v2564
    %v3236 = vunpack.c.h.b16 %v2564
    %v3237 = vunpack.c.l.b16 %v2565
    %v3238 = vunpack.c.h.b16 %v2565
    %v3239 = vunpack.c.l.b16 %v2566
    %v3240 = vunpack.c.h.b16 %v2566
    %v3241 = vunpack.c.l.b16 %v2567
    %v3242 = vunpack.c.h.b16 %v2567
    %v3243 = vunpack.c.l.b16 %v2568
    %v3244 = vunpack.c.h.b16 %v2568
    %v3245 = vunpack.c.l.b16 %v2569
    %v3246 = vunpack.c.h.b16 %v2569
    %v3247 = vunpack.c.l.b16 %v2570
    %v3248 = vunpack.c.h.b16 %v2570
    %v3249 = vunpack.c.l.b16 %v2571
    %v3250 = vunpack.c.h.b16 %v2571
    %v3251 = vunpack.c.l.b16 %v2572
    %v3252 = vunpack.c.h.b16 %v2572
    %v3253 = vunpack.c.l.b16 %v2573
    %v3254 = vunpack.c.h.b16 %v2573
    %v3255 = vunpack.c.l.b16 %v2574
    %v3256 = vunpack.c.h.b16 %v2574
    %v3257 = vunpack.c.l.b16 %v2575
    %v3258 = vunpack.c.h.b16 %v2575
    %v3259 = vunpack.c.l.b16 %v2576
    %v3260 = vunpack.c.h.b16 %v2576
    %v3261 = vunpack.c.l.b16 %v2577
    %v3262 = vunpack.c.h.b16 %v2577
    %v3263 = vunpack.c.l.b16 %v2578
    %v3264 = vunpack.c.h.b16 %v2578
    %v3265 = vunpack.c.l.b16 %v2579
    %v3266 = vunpack.c.h.b16 %v2579
    %v3267 = vunpack.c.l.b16 %v2580
    %v3268 = vunpack.c.h.b16 %v2580
    %v3269 = vunpack.c.l.b16 %v2581
    %v3270 = vunpack.c.h.b16 %v2581
    %v3271 = vunpack.c.l.b16 %v2582
    %v3272 = vunpack.c.h.b16 %v2582
    %v3273 = vunpack.c.l.b16 %v2583
    %v3274 = vunpack.c.h.b16 %v2583
    %v3275 = vunpack.c.l.b16 %v2584
    %v3276 = vunpack.c.h.b16 %v2584
    %v3277 = vunpack.c.l.b16 %v2585
    %v3278 = vunpack.c.h.b16 %v2585
    %v3279 = vunpack.c.l.b16 %v2586
    %v3280 = vunpack.c.h.b16 %v2586
    %v3281 = vunpack.c.l.b16 %v2587
    %v3282 = vunpack.c.h.b16 %v2587
    %v3283 = vunpack.c.l.b16 %v2588
    %v3284 = vunpack.c.h.b16 %v2588
    %v3285 = vunpack.c.l.b16 %v2589
    %v3286 = vunpack.c.h.b16 %v2589
    %v3287 = vunpack.c.l.b16 %v2590
    %v3288 = vunpack.c.h.b16 %v2590
    %v3289 = vunpack.c.l.b16 %v2591
    %v3290 = vunpack.c.h.b16 %v2591
    %v3291 = vunpack.c.l.b16 %v2592
    %v3292 = vunpack.c.h.b16 %v2592
    %v3293 = vunpack.c.l.b16 %v2593
    %v3294 = vunpack.c.h.b16 %v2593
    %v3295 = vunpack.c.l.b16 %v2594
    %v3296 = vunpack.c.h.b16 %v2594
    %v3297 = vunpack.c.l.b16 %v2595
    %v3298 = vunpack.c.h.b16 %v2595
    %v3299 = vunpack.c.l.b16 %v2596
    %v3300 = vunpack.c.h.b16 %v2596
    %v3301 = vunpack.c.l.b16 %v2597
    %v3302 = vunpack.c.h.b16 %v2597
    %v3303 = vunpack.c.l.b16 %v2598
    %v3304 = vunpack.c.h.b16 %v2598
    %v3305 = vunpack.c.l.b16 %v2599
    %v3306 = vunpack.c.h.b16 %v2599
    %v3307 = vunpack.c.l.b16 %v2600
    %v3308 = vunpack.c.h.b16 %v2600
    %v3309 = vunpack.c.l.b16 %v2601
    %v3310 = vunpack.c.h.b16 %v2601
    %v3311 = vunpack.c.l.b16 %v2602
    %v3312 = vunpack.c.h.b16 %v2602
    %v3313 = vunpack.c.l.b16 %v2603
    %v3314 = vunpack.c.h.b16 %v2603
    %v3315 = vunpack.c.l.b16 %v2604
    %v3316 = vunpack.c.h.b16 %v2604
    %v3317 = vunpack.c.l.b16 %v2605
    %v3318 = vunpack.c.h.b16 %v2605
    %v3319 = vunpack.c.l.b16 %v2606
    %v3320 = vunpack.c.h.b16 %v2606
    %v3321 = vunpack.c.l.b16 %v2607
    %v3322 = vunpack.c.h.b16 %v2607
    %v3323 = vunpack.c.l.b16 %v2608
    %v3324 = vunpack.c.h.b16 %v2608
    %v3325 = vunpack.c.l.b16 %v2609
    %v3326 = vunpack.c.h.b16 %v2609
    %v3327 = vunpack.c.l.b16 %v2610
    %v3328 = vunpack.c.h.b16 %v2610
    %v3329 = vunpack.c.l.b16 %v2611
    %v3330 = vunpack.c.h.b16 %v2611
    %v3331 = vunpack.c.l.b16 %v2612
    %v3332 = vunpack.c.h.b16 %v2612
    %v3333 = vunpack.c.l.b16 %v2613
    %v3334 = vunpack.c.h.b16 %v2613
    %v3335 = vunpack.c.l.b16 %v2614
    %v3336 = vunpack.c.h.b16 %v2614
    %v3337 = vunpack.c.l.b16 %v2615
    %v3338 = vunpack.c.h.b16 %v2615
    %v3339 = vunpack.c.l.b16 %v2616
    %v3340 = vunpack.c.h.b16 %v2616
    %v3341 = vunpack.c.l.b16 %v2617
    %v3342 = vunpack.c.h.b16 %v2617
    %v3343 = vunpack.c.l.b16 %v2618
    %v3344 = vunpack.c.h.b16 %v2618
    %v3345 = vunpack.c.l.b16 %v2619
    %v3346 = vunpack.c.h.b16 %v2619
    %v3347 = vunpack.c.l.b16 %v2620
    %v3348 = vunpack.c.h.b16 %v2620
    %v3349 = vunpack.c.l.b16 %v2621
    %v3350 = vunpack.c.h.b16 %v2621
    %v3351 = vunpack.c.l.b16 %v2622
    %v3352 = vunpack.c.h.b16 %v2622
    %v3353 = vunpack.c.l.b16 %v2623
    %v3354 = vunpack.c.h.b16 %v2623
    %v3355 = vunpack.c.l.b16 %v2624
    %v3356 = vunpack.c.h.b16 %v2624
    %v3357 = vunpack.c.l.b16 %v2625
    %v3358 = vunpack.c.h.b16 %v2625
    %v3359 = vunpack.c.l.b16 %v2626
    %v3360 = vunpack.c.h.b16 %v2626
    %v3361 = vunpack.c.l.b16 %v2627
    %v3362 = vunpack.c.h.b16 %v2627
    %v3363 = vunpack.c.l.b16 %v2628
    %v3364 = vunpack.c.h.b16 %v2628
    %v3365 = vunpack.c.l.b16 %v2629
    %v3366 = vunpack.c.h.b16 %v2629
    %v3367 = vunpack.c.l.b16 %v2630
    %v3368 = vunpack.c.h.b16 %v2630
    %v3369 = vunpack.c.l.b16 %v2631
    %v3370 = vunpack.c.h.b16 %v2631
    %v3371 = vunpack.c.l.b16 %v2632
    %v3372 = vunpack.c.h.b16 %v2632
    %v3373 = vunpack.c.l.b16 %v2633
    %v3374 = vunpack.c.h.b16 %v2633
    %v3375 = vunpack.c.l.b16 %v2634
    %v3376 = vunpack.c.h.b16 %v2634
    %v3377 = vunpack.c.l.b16 %v2635
    %v3378 = vunpack.c.h.b16 %v2635
    %v3379 = vunpack.c.l.b16 %v2636
    %v3380 = vunpack.c.h.b16 %v2636
    %v3381 = vunpack.c.l.b16 %v2637
    %v3382 = vunpack.c.h.b16 %v2637
    %v3383 = vunpack.c.l.b16 %v2638
    %v3384 = vunpack.c.h.b16 %v2638
    %v3385 = vunpack.c.l.b16 %v2639
    %v3386 = vunpack.c.h.b16 %v2639
    %v3387 = vunpack.c.l.b16 %v2640
    %v3388 = vunpack.c.h.b16 %v2640
    %v3389 = vunpack.c.l.b16 %v2641
    %v3390 = vunpack.c.h.b16 %v2641
    %v3391 = vunpack.c.l.b16 %v2642
    %v3392 = vunpack.c.h.b16 %v2642
    %v3393 = vunpack.c.l.b16 %v2643
    %v3394 = vunpack.c.h.b16 %v2643
    %v3395 = vunpack.c.l.b16 %v2644
    %v3396 = vunpack.c.h.b16 %v2644
    %v3397 = vunpack.c.l.b16 %v2645
    %v3398 = vunpack.c.h.b16 %v2645
    %v3399 = vunpack.c.l.b16 %v2646
    %v3400 = vunpack.c.h.b16 %v2646
    %v3401 = vunpack.c.l.b16 %v2647
    %v3402 = vunpack.c.h.b16 %v2647
    %v3403 = vunpack.c.l.b16 %v2648
    %v3404 = vunpack.c.h.b16 %v2648
    %v3405 = vunpack.c.l.b16 %v2649
    %v3406 = vunpack.c.h.b16 %v2649
    %v3407 = vunpack.c.l.b16 %v2650
    %v3408 = vunpack.c.h.b16 %v2650
    %v3409 = vunpack.c.l.b16 %v2651
    %v3410 = vunpack.c.h.b16 %v2651
    %v3411 = vunpack.c.l.b16 %v2652
    %v3412 = vunpack.c.h.b16 %v2652
    %v3413 = vunpack.c.l.b16 %v2653
    %v3414 = vunpack.c.h.b16 %v2653
    %v3415 = vunpack.c.l.b16 %v2654
    %v3416 = vunpack.c.h.b16 %v2654
    %v3417 = vunpack.c.l.b16 %v2655
    %v3418 = vunpack.c.h.b16 %v2655
    %v3419 = vunpack.c.l.b16 %v2656
    %v3420 = vunpack.c.h.b16 %v2656
    %v3421 = vunpack.c.l.b16 %v2657
    %v3422 = vunpack.c.h.b16 %v2657
    %v3423 = vunpack.c.l.b16 %v2658
    %v3424 = vunpack.c.h.b16 %v2658
    %v3425 = vunpack.c.l.b16 %v2659
    %v3426 = vunpack.c.h.b16 %v2659
    %v3427 = vunpack.c.l.b16 %v2660
    %v3428 = vunpack.c.h.b16 %v2660
    %v3429 = vunpack.c.l.b16 %v2661
    %v3430 = vunpack.c.h.b16 %v2661
    %v3431 = vunpack.c.l.b16 %v2662
    %v3432 = vunpack.c.h.b16 %v2662
    %v3433 = vunpack.c.l.b16 %v2663
    %v3434 = vunpack.c.h.b16 %v2663
    %v3435 = vunpack.c.l.b16 %v2664
    %v3436 = vunpack.c.h.b16 %v2664
    %v3437 = vunpack.c.l.b16 %v2665
    %v3438 = vunpack.c.h.b16 %v2665
    %v3439 = vunpack.c.l.b16 %v2666
    %v3440 = vunpack.c.h.b16 %v2666
    %v3441 = vunpack.c.l.b16 %v2667
    %v3442 = vunpack.c.h.b16 %v2667
    %v3443 = vunpack.c.l.b16 %v2668
    %v3444 = vunpack.c.h.b16 %v2668
    %v3445 = vunpack.c.l.b16 %v2669
    %v3446 = vunpack.c.h.b16 %v2669
    %v3447 = vunpack.c.l.b16 %v2670
    %v3448 = vunpack.c.h.b16 %v2670
    %v3449 = vunpack.c.l.b16 %v2671
    %v3450 = vunpack.c.h.b16 %v2671
    %v3451 = vunpack.c.l.b16 %v2672
    %v3452 = vunpack.c.h.b16 %v2672
    %v3453 = vunpack.c.l.b16 %v2673
    %v3454 = vunpack.c.h.b16 %v2673
    %v3455 = vunpack.c.l.b16 %v2674
    %v3456 = vunpack.c.h.b16 %v2674
    %v3457 = vunpack.c.l.b16 %v2675
    %v3458 = vunpack.c.h.b16 %v2675
    %v3459 = vunpack.c.l.b16 %v2676
    %v3460 = vunpack.c.h.b16 %v2676
    %v3461 = vunpack.c.l.b16 %v2677
    %v3462 = vunpack.c.h.b16 %v2677
    %v3463 = vunpack.c.l.b16 %v2678
    %v3464 = vunpack.c.h.b16 %v2678
    %v3465 = vunpack.c.l.b16 %v2679
    %v3466 = vunpack.c.h.b16 %v2679
    %v3467 = vunpack.c.l.b16 %v2680
    %v3468 = vunpack.c.h.b16 %v2680
    %v3469 = vunpack.c.l.b16 %v2681
    %v3470 = vunpack.c.h.b16 %v2681
    %v3471 = vunpack.c.l.b16 %v2682
    %v3472 = vunpack.c.h.b16 %v2682
    %v3473 = vpack.c.b16 %v2965, %v2961
    %v3474 = vpack.c.b16 %v2966, %v2962
    %v3475 = vpack.c.b16 %v2967, %v2963
    %v3476 = vpack.c.b16 %v2968, %v2964
    %v3477 = vpack.c.b16 %v2973, %v2969
    %v3478 = vpack.c.b16 %v2974, %v2970
    %v3479 = vpack.c.b16 %v2975, %v2971
    %v3480 = vpack.c.b16 %v2976, %v2972
    %v3481 = vpack.c.b16 %v2981, %v2977
    %v3482 = vpack.c.b16 %v2982, %v2978
    %v3483 = vpack.c.b16 %v2983, %v2979
    %v3484 = vpack.c.b16 %v2984, %v2980
    %v3485 = vpack.c.b16 %v2989, %v2985
    %v3486 = vpack.c.b16 %v2990, %v2986
    %v3487 = vpack.c.b16 %v2991, %v2987
    %v3488 = vpack.c.b16 %v2992, %v2988
    %v3489 = vpack.c.b16 %v2997, %v2993
    %v3490 = vpack.c.b16 %v2998, %v2994
    %v3491 = vpack.c.b16 %v2999, %v2995
    %v3492 = vpack.c.b16 %v3000, %v2996
    %v3493 = vpack.c.b16 %v3005, %v3001
    %v3494 = vpack.c.b16 %v3006, %v3002
    %v3495 = vpack.c.b16 %v3007, %v3003
    %v3496 = vpack.c.b16 %v3008, %v3004
    %v3497 = vpack.c.b16 %v3013, %v3009
    %v3498 = vpack.c.b16 %v3014, %v3010
    %v3499 = vpack.c.b16 %v3015, %v3011
    %v3500 = vpack.c.b16 %v3016, %v3012
    %v3501 = vpack.c.b16 %v3021, %v3017
    %v3502 = vpack.c.b16 %v3022, %v3018
    %v3503 = vpack.c.b16 %v3023, %v3019
    %v3504 = vpack.c.b16 %v3024, %v3020
    %v3505 = vpack.c.b16 %v3029, %v3025
    %v3506 = vpack.c.b16 %v3030, %v3026
    %v3507 = vpack.c.b16 %v3031, %v3027
    %v3508 = vpack.c.b16 %v3032, %v3028
    %v3509 = vpack.c.b16 %v3037, %v3033
    %v3510 = vpack.c.b16 %v3038, %v3034
    %v3511 = vpack.c.b16 %v3039, %v3035
    %v3512 = vpack.c.b16 %v3040, %v3036
    %v3513 = vpack.c.b16 %v3045, %v3041
    %v3514 = vpack.c.b16 %v3046, %v3042
    %v3515 = vpack.c.b16 %v3047, %v3043
    %v3516 = vpack.c.b16 %v3048, %v3044
    %v3517 = vpack.c.b16 %v3053, %v3049
    %v3518 = vpack.c.b16 %v3054, %v3050
    %v3519 = vpack.c.b16 %v3055, %v3051
    %v3520 = vpack.c.b16 %v3056, %v3052
    %v3521 = vpack.c.b16 %v3061, %v3057
    %v3522 = vpack.c.b16 %v3062, %v3058
    %v3523 = vpack.c.b16 %v3063, %v3059
    %v3524 = vpack.c.b16 %v3064, %v3060
    %v3525 = vpack.c.b16 %v3069, %v3065
    %v3526 = vpack.c.b16 %v3070, %v3066
    %v3527 = vpack.c.b16 %v3071, %v3067
    %v3528 = vpack.c.b16 %v3072, %v3068
    %v3529 = vpack.c.b16 %v3077, %v3073
    %v3530 = vpack.c.b16 %v3078, %v3074
    %v3531 = vpack.c.b16 %v3079, %v3075
    %v3532 = vpack.c.b16 %v3080, %v3076
    %v3533 = vpack.c.b16 %v3085, %v3081
    %v3534 = vpack.c.b16 %v3086, %v3082
    %v3535 = vpack.c.b16 %v3087, %v3083
    %v3536 = vpack.c.b16 %v3088, %v3084
    %v3537 = vpack.c.b16 %v3093, %v3089
    %v3538 = vpack.c.b16 %v3094, %v3090
    %v3539 = vpack.c.b16 %v3095, %v3091
    %v3540 = vpack.c.b16 %v3096, %v3092
    %v3541 = vpack.c.b16 %v3101, %v3097
    %v3542 = vpack.c.b16 %v3102, %v3098
    %v3543 = vpack.c.b16 %v3103, %v3099
    %v3544 = vpack.c.b16 %v3104, %v3100
    %v3545 = vpack.c.b16 %v3109, %v3105
    %v3546 = vpack.c.b16 %v3110, %v3106
    %v3547 = vpack.c.b16 %v3111, %v3107
    %v3548 = vpack.c.b16 %v3112, %v3108
    %v3549 = vpack.c.b16 %v3117, %v3113
    %v3550 = vpack.c.b16 %v3118, %v3114
    %v3551 = vpack.c.b16 %v3119, %v3115
    %v3552 = vpack.c.b16 %v3120, %v3116
    %v3553 = vpack.c.b16 %v3125, %v3121
    %v3554 = vpack.c.b16 %v3126, %v3122
    %v3555 = vpack.c.b16 %v3127, %v3123
    %v3556 = vpack.c.b16 %v3128, %v3124
    %v3557 = vpack.c.b16 %v3133, %v3129
    %v3558 = vpack.c.b16 %v3134, %v3130
    %v3559 = vpack.c.b16 %v3135, %v3131
    %v3560 = vpack.c.b16 %v3136, %v3132
    %v3561 = vpack.c.b16 %v3141, %v3137
    %v3562 = vpack.c.b16 %v3142, %v3138
    %v3563 = vpack.c.b16 %v3143, %v3139
    %v3564 = vpack.c.b16 %v3144, %v3140
    %v3565 = vpack.c.b16 %v3149, %v3145
    %v3566 = vpack.c.b16 %v3150, %v3146
    %v3567 = vpack.c.b16 %v3151, %v3147
    %v3568 = vpack.c.b16 %v3152, %v3148
    %v3569 = vpack.c.b16 %v3157, %v3153
    %v3570 = vpack.c.b16 %v3158, %v3154
    %v3571 = vpack.c.b16 %v3159, %v3155
    %v3572 = vpack.c.b16 %v3160, %v3156
    %v3573 = vpack.c.b16 %v3165, %v3161
    %v3574 = vpack.c.b16 %v3166, %v3162
    %v3575 = vpack.c.b16 %v3167, %v3163
    %v3576 = vpack.c.b16 %v3168, %v3164
    %v3577 = vpack.c.b16 %v3173, %v3169
    %v3578 = vpack.c.b16 %v3174, %v3170
    %v3579 = vpack.c.b16 %v3175, %v3171
    %v3580 = vpack.c.b16 %v3176, %v3172
    %v3581 = vpack.c.b16 %v3181, %v3177
    %v3582 = vpack.c.b16 %v3182, %v3178
    %v3583 = vpack.c.b16 %v3183, %v3179
    %v3584 = vpack.c.b16 %v3184, %v3180
    %v3585 = vpack.c.b16 %v3189, %v3185
    %v3586 = vpack.c.b16 %v3190, %v3186
    %v3587 = vpack.c.b16 %v3191, %v3187
    %v3588 = vpack.c.b16 %v3192, %v3188
    %v3589 = vpack.c.b16 %v3197, %v3193
    %v3590 = vpack.c.b16 %v3198, %v3194
    %v3591 = vpack.c.b16 %v3199, %v3195
    %v3592 = vpack.c.b16 %v3200, %v3196
    %v3593 = vpack.c.b16 %v3205, %v3201
    %v3594 = vpack.c.b16 %v3206, %v3202
    %v3595 = vpack.c.b16 %v3207, %v3203
    %v3596 = vpack.c.b16 %v3208, %v3204
    %v3597 = vpack.c.b16 %v3213, %v3209
    %v3598 = vpack.c.b16 %v3214, %v3210
    %v3599 = vpack.c.b16 %v3215, %v3211
    %v3600 = vpack.c.b16 %v3216, %v3212
    %v3601 = vpack.c.b16 %v3221, %v3217
    %v3602 = vpack.c.b16 %v3222, %v3218
    %v3603 = vpack.c.b16 %v3223, %v3219
    %v3604 = vpack.c.b16 %v3224, %v3220
    %v3605 = vpack.c.b16 %v3229, %v3225
    %v3606 = vpack.c.b16 %v3230, %v3226
    %v3607 = vpack.c.b16 %v3231, %v3227
    %v3608 = vpack.c.b16 %v3232, %v3228
    %v3609 = vpack.c.b16 %v3237, %v3233
    %v3610 = vpack.c.b16 %v3238, %v3234
    %v3611 = vpack.c.b16 %v3239, %v3235
    %v3612 = vpack.c.b16 %v3240, %v3236
    %v3613 = vpack.c.b16 %v3245, %v3241
    %v3614 = vpack.c.b16 %v3246, %v3242
    %v3615 = vpack.c.b16 %v3247, %v3243
    %v3616 = vpack.c.b16 %v3248, %v3244
    %v3617 = vpack.c.b16 %v3253, %v3249
    %v3618 = vpack.c.b16 %v3254, %v3250
    %v3619 = vpack.c.b16 %v3255, %v3251
    %v3620 = vpack.c.b16 %v3256, %v3252
    %v3621 = vpack.c.b16 %v3261, %v3257
    %v3622 = vpack.c.b16 %v3262, %v3258
    %v3623 = vpack.c.b16 %v3263, %v3259
    %v3624 = vpack.c.b16 %v3264, %v3260
    %v3625 = vpack.c.b16 %v3269, %v3265
    %v3626 = vpack.c.b16 %v3270, %v3266
    %v3627 = vpack.c.b16 %v3271, %v3267
    %v3628 = vpack.c.b16 %v3272, %v3268
    %v3629 = vpack.c.b16 %v3277, %v3273
    %v3630 = vpack.c.b16 %v3278, %v3274
    %v3631 = vpack.c.b16 %v3279, %v3275
    %v3632 = vpack.c.b16 %v3280, %v3276
    %v3633 = vpack.c.b16 %v3285, %v3281
    %v3634 = vpack.c.b16 %v3286, %v3282
    %v3635 = vpack.c.b16 %v3287, %v3283
    %v3636 = vpack.c.b16 %v3288, %v3284
    %v3637 = vpack.c.b16 %v3293, %v3289
    %v3638 = vpack.c.b16 %v3294, %v3290
    %v3639 = vpack.c.b16 %v3295, %v3291
    %v3640 = vpack.c.b16 %v3296, %v3292
    %v3641 = vpack.c.b16 %v3301, %v3297
    %v3642 = vpack.c.b16 %v3302, %v3298
    %v3643 = vpack.c.b16 %v3303, %v3299
    %v3644 = vpack.c.b16 %v3304, %v3300
    %v3645 = vpack.c.b16 %v3309, %v3305
    %v3646 = vpack.c.b16 %v3310, %v3306
    %v3647 = vpack.c.b16 %v3311, %v3307
    %v3648 = vpack.c.b16 %v3312, %v3308
    %v3649 = vpack.c.b16 %v3317, %v3313
    %v3650 = vpack.c.b16 %v3318, %v3314
    %v3651 = vpack.c.b16 %v3319, %v3315
    %v3652 = vpack.c.b16 %v3320, %v3316
    %v3653 = vpack.c.b16 %v3325, %v3321
    %v3654 = vpack.c.b16 %v3326, %v3322
    %v3655 = vpack.c.b16 %v3327, %v3323
    %v3656 = vpack.c.b16 %v3328, %v3324
    %v3657 = vpack.c.b16 %v3333, %v3329
    %v3658 = vpack.c.b16 %v3334, %v3330
    %v3659 = vpack.c.b16 %v3335, %v3331
    %v3660 = vpack.c.b16 %v3336, %v3332
    %v3661 = vpack.c.b16 %v3341, %v3337
    %v3662 = vpack.c.b16 %v3342, %v3338
    %v3663 = vpack.c.b16 %v3343, %v3339
    %v3664 = vpack.c.b16 %v3344, %v3340
    %v3665 = vpack.c.b16 %v3349, %v3345
    %v3666 = vpack.c.b16 %v3350, %v3346
    %v3667 = vpack.c.b16 %v3351, %v3347
    %v3668 = vpack.c.b16 %v3352, %v3348
    %v3669 = vpack.c.b16 %v3357, %v3353
    %v3670 = vpack.c.b16 %v3358, %v3354
    %v3671 = vpack.c.b16 %v3359, %v3355
    %v3672 = vpack.c.b16 %v3360, %v3356
    %v3673 = vpack.c.b16 %v3365, %v3361
    %v3674 = vpack.c.b16 %v3366, %v3362
    %v3675 = vpack.c.b16 %v3367, %v3363
    %v3676 = vpack.c.b16 %v3368, %v3364
    %v3677 = vpack.c.b16 %v3373, %v3369
    %v3678 = vpack.c.b16 %v3374, %v3370
    %v3679 = vpack.c.b16 %v3375, %v3371
    %v3680 = vpack.c.b16 %v3376, %v3372
    %v3681 = vpack.c.b16 %v3381, %v3377
    %v3682 = vpack.c.b16 %v3382, %v3378
    %v3683 = vpack.c.b16 %v3383, %v3379
    %v3684 = vpack.c.b16 %v3384, %v3380
    %v3685 = vpack.c.b16 %v3389, %v3385
    %v3686 = vpack.c.b16 %v3390, %v3386
    %v3687 = vpack.c.b16 %v3391, %v3387
    %v3688 = vpack.c.b16 %v3392, %v3388
    %v3689 = vpack.c.b16 %v3397, %v3393
    %v3690 = vpack.c.b16 %v3398, %v3394
    %v3691 = vpack.c.b16 %v3399, %v3395
    %v3692 = vpack.c.b16 %v3400, %v3396
    %v3693 = vpack.c.b16 %v3405, %v3401
    %v3694 = vpack.c.b16 %v3406, %v3402
    %v3695 = vpack.c.b16 %v3407, %v3403
    %v3696 = vpack.c.b16 %v3408, %v3404
    %v3697 = vpack.c.b16 %v3413, %v3409
    %v3698 = vpack.c.b16 %v3414, %v3410
    %v3699 = vpack.c.b16 %v3415, %v3411
    %v3700 = vpack.c.b16 %v3416, %v3412
    %v3701 = vpack.c.b16 %v3421, %v3417
    %v3702 = vpack.c.b16 %v3422, %v3418
    %v3703 = vpack.c.b16 %v3423, %v3419
    %v3704 = vpack.c.b16 %v3424, %v3420
    %v3705 = vpack.c.b16 %v3429, %v3425
    %v3706 = vpack.c.b16 %v3430, %v3426
    %v3707 = vpack.c.b16 %v3431, %v3427
    %v3708 = vpack.c.b16 %v3432, %v3428
    %v3709 = vpack.c.b16 %v3437, %v3433
    %v3710 = vpack.c.b16 %v3438, %v3434
    %v3711 = vpack.c.b16 %v3439, %v3435
    %v3712 = vpack.c.b16 %v3440, %v3436
    %v3713 = vpack.c.b16 %v3445, %v3441
    %v3714 = vpack.c.b16 %v3446, %v3442
    %v3715 = vpack.c.b16 %v3447, %v3443
    %v3716 = vpack.c.b16 %v3448, %v3444
    %v3717 = vpack.c.b16 %v3453, %v3449
    %v3718 = vpack.c.b16 %v3454, %v3450
    %v3719 = vpack.c.b16 %v3455, %v3451
    %v3720 = vpack.c.b16 %v3456, %v3452
    %v3721 = vpack.c.b16 %v3461, %v3457
    %v3722 = vpack.c.b16 %v3462, %v3458
    %v3723 = vpack.c.b16 %v3463, %v3459
    %v3724 = vpack.c.b16 %v3464, %v3460
    %v3725 = vpack.c.b16 %v3469, %v3465
    %v3726 = vpack.c.b16 %v3470, %v3466
    %v3727 = vpack.c.b16 %v3471, %v3467
    %v3728 = vpack.c.b16 %v3472, %v3468
    %3985 = vmatprep.subr.bf16.mxu0 %v3502
    %3986 = vmatpush1.bf16.msra.mxu0 %v3501
    %3987 = vmatprep.subr.bf16.mxu0 %v3498
    %3988 = vmatpush1.bf16.msra.mxu0 %v3497
    %3989 = vmatprep.subr.bf16.mxu0 %v3494
    %3990 = vmatpush1.bf16.msra.mxu0 %v3493
    %3991 = vmatprep.subr.bf16.mxu0 %v3490
    %3992 = vmatpush1.bf16.msra.mxu0 %v3489
    %3993 = vmatprep.subr.bf16.mxu0 %v3486
    %3994 = vmatpush1.bf16.msra.mxu0 %v3485
    %3995 = vmatprep.subr.bf16.mxu0 %v3482
    %3996 = vmatpush1.bf16.msra.mxu0 %v3481
    %3997 = vmatprep.subr.bf16.mxu0 %v3478
    %3998 = vmatpush1.bf16.msra.mxu0 %v3477
    %3999 = vmatprep.subr.bf16.mxu0 %v3474
    %4000 = vmatpush1.bf16.msra.mxu0 %v3473
    %4001 = vmatprep.subr.bf16.mxu0 %v3534
    %4002 = vmatpush2.bf16.msra.mxu0 %v3533
    %4003 = vmatprep.subr.bf16.mxu0 %v3530
    %4004 = vmatpush2.bf16.msra.mxu0 %v3529
    %4005 = vmatprep.subr.bf16.mxu0 %v3526
    %4006 = vmatpush2.bf16.msra.mxu0 %v3525
    %4007 = vmatprep.subr.bf16.mxu0 %v3522
    %4008 = vmatpush2.bf16.msra.mxu0 %v3521
    %4009 = vmatprep.subr.bf16.mxu0 %v3518
    %4010 = vmatpush2.bf16.msra.mxu0 %v3517
    %4011 = vmatprep.subr.bf16.mxu0 %v3514
    %4012 = vmatpush2.bf16.msra.mxu0 %v3513
    %4013 = vmatprep.subr.bf16.mxu0 %v3510
    %4014 = vmatpush2.bf16.msra.mxu0 %v3509
    %4015 = vmatprep.subr.bf16.mxu0 %v3506
    %4016 = vmatpush2.bf16.msra.mxu0 %v3505
    %4017 = vmatprep.mubr.bf16.mxu0 %v2420
    %4018 = vmatmul.mubr.bf16.gmra.mxu0 %v2419
    %v4019 = vpop.f32.mrf.mxu0
    %v4020 = vadd.f32 %v2688, %v4019
    %v4021 = vpop.f32.mrf.mxu0
    %v4022 = vadd.f32 %v2692, %v4021
    %v4023 = vpop.f32.mrf.mxu0
    %v4024 = vadd.f32 %v2688, %v4023
    %v4025 = vpop.f32.mrf.mxu0
    %v4026 = vadd.f32 %v2692, %v4025
    %4027 = vdwg.mxu0
    %4028 = vmatprep.subr.bf16.mxu0 %v3566
    %4029 = vmatpush1.bf16.msra.mxu0 %v3565
    %4030 = vmatprep.subr.bf16.mxu0 %v3562
    %4031 = vmatpush1.bf16.msra.mxu0 %v3561
    %4032 = vmatprep.subr.bf16.mxu0 %v3558
    %4033 = vmatpush1.bf16.msra.mxu0 %v3557
    %4034 = vmatprep.subr.bf16.mxu0 %v3554
    %4035 = vmatpush1.bf16.msra.mxu0 %v3553
    %4036 = vmatprep.subr.bf16.mxu0 %v3550
    %4037 = vmatpush1.bf16.msra.mxu0 %v3549
    %4038 = vmatprep.subr.bf16.mxu0 %v3546
    %4039 = vmatpush1.bf16.msra.mxu0 %v3545
    %4040 = vmatprep.subr.bf16.mxu0 %v3542
    %4041 = vmatpush1.bf16.msra.mxu0 %v3541
    %4042 = vmatprep.subr.bf16.mxu0 %v3538
    %4043 = vmatpush1.bf16.msra.mxu0 %v3537
    %4044 = vmatprep.subr.bf16.mxu0 %v3598
    %4045 = vmatpush2.bf16.msra.mxu0 %v3597
    %4046 = vmatprep.subr.bf16.mxu0 %v3594
    %4047 = vmatpush2.bf16.msra.mxu0 %v3593
    %4048 = vmatprep.subr.bf16.mxu0 %v3590
    %4049 = vmatpush2.bf16.msra.mxu0 %v3589
    %4050 = vmatprep.subr.bf16.mxu0 %v3586
    %4051 = vmatpush2.bf16.msra.mxu0 %v3585
    %4052 = vmatprep.subr.bf16.mxu0 %v3582
    %4053 = vmatpush2.bf16.msra.mxu0 %v3581
    %4054 = vmatprep.subr.bf16.mxu0 %v3578
    %4055 = vmatpush2.bf16.msra.mxu0 %v3577
    %4056 = vmatprep.subr.bf16.mxu0 %v3574
    %4057 = vmatpush2.bf16.msra.mxu0 %v3573
    %4058 = vmatprep.subr.bf16.mxu0 %v3570
    %4059 = vmatpush2.bf16.msra.mxu0 %v3569
    %4060 = vmatprep.mubr.bf16.mxu0 %v2422
    %4061 = vmatmul.mubr.bf16.gmra.mxu0 %v2421
    %v4062 = vpop.f32.mrf.mxu0
    %v4063 = vadd.f32 %v4020, %v4062
    %v4064 = vpop.f32.mrf.mxu0
    %v4065 = vadd.f32 %v4022, %v4064
    %v4066 = vpop.f32.mrf.mxu0
    %v4067 = vadd.f32 %v4024, %v4066
    %v4068 = vpop.f32.mrf.mxu0
    %v4069 = vadd.f32 %v4026, %v4068
    %4070 = vdwg.mxu0
    %4071 = vmatprep.subr.bf16.mxu0 %v3630
    %4072 = vmatpush1.bf16.msra.mxu0 %v3629
    %4073 = vmatprep.subr.bf16.mxu0 %v3626
    %4074 = vmatpush1.bf16.msra.mxu0 %v3625
    %4075 = vmatprep.subr.bf16.mxu0 %v3622
    %4076 = vmatpush1.bf16.msra.mxu0 %v3621
    %4077 = vmatprep.subr.bf16.mxu0 %v3618
    %4078 = vmatpush1.bf16.msra.mxu0 %v3617
    %4079 = vmatprep.subr.bf16.mxu0 %v3614
    %4080 = vmatpush1.bf16.msra.mxu0 %v3613
    %4081 = vmatprep.subr.bf16.mxu0 %v3610
    %4082 = vmatpush1.bf16.msra.mxu0 %v3609
    %4083 = vmatprep.subr.bf16.mxu0 %v3606
    %4084 = vmatpush1.bf16.msra.mxu0 %v3605
    %4085 = vmatprep.subr.bf16.mxu0 %v3602
    %4086 = vmatpush1.bf16.msra.mxu0 %v3601
    %4087 = vmatprep.subr.bf16.mxu0 %v3662
    %4088 = vmatpush2.bf16.msra.mxu0 %v3661
    %4089 = vmatprep.subr.bf16.mxu0 %v3658
    %4090 = vmatpush2.bf16.msra.mxu0 %v3657
    %4091 = vmatprep.subr.bf16.mxu0 %v3654
    %4092 = vmatpush2.bf16.msra.mxu0 %v3653
    %4093 = vmatprep.subr.bf16.mxu0 %v3650
    %4094 = vmatpush2.bf16.msra.mxu0 %v3649
    %4095 = vmatprep.subr.bf16.mxu0 %v3646
    %4096 = vmatpush2.bf16.msra.mxu0 %v3645
    %4097 = vmatprep.subr.bf16.mxu0 %v3642
    %4098 = vmatpush2.bf16.msra.mxu0 %v3641
    %4099 = vmatprep.subr.bf16.mxu0 %v3638
    %4100 = vmatpush2.bf16.msra.mxu0 %v3637
    %4101 = vmatprep.subr.bf16.mxu0 %v3634
    %4102 = vmatpush2.bf16.msra.mxu0 %v3633
    %4103 = vmatprep.mubr.bf16.mxu0 %v2424
    %4104 = vmatmul.mubr.bf16.gmra.mxu0 %v2423
    %v4105 = vpop.f32.mrf.mxu0
    %v4106 = vadd.f32 %v4063, %v4105
    %v4107 = vpop.f32.mrf.mxu0
    %v4108 = vadd.f32 %v4065, %v4107
    %v4109 = vpop.f32.mrf.mxu0
    %v4110 = vadd.f32 %v4067, %v4109
    %v4111 = vpop.f32.mrf.mxu0
    %v4112 = vadd.f32 %v4069, %v4111
    %4113 = vdwg.mxu0
    %4114 = vmatprep.subr.bf16.mxu0 %v3694
    %4115 = vmatpush1.bf16.msra.mxu0 %v3693
    %4116 = vmatprep.subr.bf16.mxu0 %v3690
    %4117 = vmatpush1.bf16.msra.mxu0 %v3689
    %4118 = vmatprep.subr.bf16.mxu0 %v3686
    %4119 = vmatpush1.bf16.msra.mxu0 %v3685
    %4120 = vmatprep.subr.bf16.mxu0 %v3682
    %4121 = vmatpush1.bf16.msra.mxu0 %v3681
    %4122 = vmatprep.subr.bf16.mxu0 %v3678
    %4123 = vmatpush1.bf16.msra.mxu0 %v3677
    %4124 = vmatprep.subr.bf16.mxu0 %v3674
    %4125 = vmatpush1.bf16.msra.mxu0 %v3673
    %4126 = vmatprep.subr.bf16.mxu0 %v3670
    %4127 = vmatpush1.bf16.msra.mxu0 %v3669
    %4128 = vmatprep.subr.bf16.mxu0 %v3666
    %4129 = vmatpush1.bf16.msra.mxu0 %v3665
    %4130 = vmatprep.subr.bf16.mxu0 %v3726
    %4131 = vmatpush2.bf16.msra.mxu0 %v3725
    %4132 = vmatprep.subr.bf16.mxu0 %v3722
    %4133 = vmatpush2.bf16.msra.mxu0 %v3721
    %4134 = vmatprep.subr.bf16.mxu0 %v3718
    %4135 = vmatpush2.bf16.msra.mxu0 %v3717
    %4136 = vmatprep.subr.bf16.mxu0 %v3714
    %4137 = vmatpush2.bf16.msra.mxu0 %v3713
    %4138 = vmatprep.subr.bf16.mxu0 %v3710
    %4139 = vmatpush2.bf16.msra.mxu0 %v3709
    %4140 = vmatprep.subr.bf16.mxu0 %v3706
    %4141 = vmatpush2.bf16.msra.mxu0 %v3705
    %4142 = vmatprep.subr.bf16.mxu0 %v3702
    %4143 = vmatpush2.bf16.msra.mxu0 %v3701
    %4144 = vmatprep.subr.bf16.mxu0 %v3698
    %4145 = vmatpush2.bf16.msra.mxu0 %v3697
    %4146 = vmatprep.mubr.bf16.mxu0 %v2426
    %4147 = vmatmul.mubr.bf16.gmra.mxu0 %v2425
    %v4148 = vpop.f32.mrf.mxu0
    %v4149 = vadd.f32 %v4106, %v4148
    %v4150 = vpop.f32.mrf.mxu0
    %v4151 = vadd.f32 %v4108, %v4150
    %v4152 = vpop.f32.mrf.mxu0
    %v4153 = vadd.f32 %v4110, %v4152
    %v4154 = vpop.f32.mrf.mxu0
    %v4155 = vadd.f32 %v4112, %v4154
    %4156 = vdwg.mxu0
    %4157 = vmatprep.subr.bf16.mxu0 %v3504
    %4158 = vmatpush1.bf16.msra.mxu0 %v3503
    %4159 = vmatprep.subr.bf16.mxu0 %v3500
    %4160 = vmatpush1.bf16.msra.mxu0 %v3499
    %4161 = vmatprep.subr.bf16.mxu0 %v3496
    %4162 = vmatpush1.bf16.msra.mxu0 %v3495
    %4163 = vmatprep.subr.bf16.mxu0 %v3492
    %4164 = vmatpush1.bf16.msra.mxu0 %v3491
    %4165 = vmatprep.subr.bf16.mxu0 %v3488
    %4166 = vmatpush1.bf16.msra.mxu0 %v3487
    %4167 = vmatprep.subr.bf16.mxu0 %v3484
    %4168 = vmatpush1.bf16.msra.mxu0 %v3483
    %4169 = vmatprep.subr.bf16.mxu0 %v3480
    %4170 = vmatpush1.bf16.msra.mxu0 %v3479
    %4171 = vmatprep.subr.bf16.mxu0 %v3476
    %4172 = vmatpush1.bf16.msra.mxu0 %v3475
    %4173 = vmatprep.subr.bf16.mxu0 %v3536
    %4174 = vmatpush2.bf16.msra.mxu0 %v3535
    %4175 = vmatprep.subr.bf16.mxu0 %v3532
    %4176 = vmatpush2.bf16.msra.mxu0 %v3531
    %4177 = vmatprep.subr.bf16.mxu0 %v3528
    %4178 = vmatpush2.bf16.msra.mxu0 %v3527
    %4179 = vmatprep.subr.bf16.mxu0 %v3524
    %4180 = vmatpush2.bf16.msra.mxu0 %v3523
    %4181 = vmatprep.subr.bf16.mxu0 %v3520
    %4182 = vmatpush2.bf16.msra.mxu0 %v3519
    %4183 = vmatprep.subr.bf16.mxu0 %v3516
    %4184 = vmatpush2.bf16.msra.mxu0 %v3515
    %4185 = vmatprep.subr.bf16.mxu0 %v3512
    %4186 = vmatpush2.bf16.msra.mxu0 %v3511
    %4187 = vmatprep.subr.bf16.mxu0 %v3508
    %4188 = vmatpush2.bf16.msra.mxu0 %v3507
    %4189 = vmatprep.mubr.bf16.mxu0 %v2420
    %4190 = vmatmul.mubr.bf16.gmra.mxu0 %v2419
    %v4191 = vpop.f32.mrf.mxu0
    %v4192 = vadd.f32 %v2696, %v4191
    %v4193 = vpop.f32.mrf.mxu0
    %v4194 = vadd.f32 %v2700, %v4193
    %v4195 = vpop.f32.mrf.mxu0
    %v4196 = vadd.f32 %v2696, %v4195
    %v4197 = vpop.f32.mrf.mxu0
    %v4198 = vadd.f32 %v2700, %v4197
    %4199 = vdwg.mxu0
    %4200 = vmatprep.subr.bf16.mxu0 %v3568
    %4201 = vmatpush1.bf16.msra.mxu0 %v3567
    %4202 = vmatprep.subr.bf16.mxu0 %v3564
    %4203 = vmatpush1.bf16.msra.mxu0 %v3563
    %4204 = vmatprep.subr.bf16.mxu0 %v3560
    %4205 = vmatpush1.bf16.msra.mxu0 %v3559
    %4206 = vmatprep.subr.bf16.mxu0 %v3556
    %4207 = vmatpush1.bf16.msra.mxu0 %v3555
    %4208 = vmatprep.subr.bf16.mxu0 %v3552
    %4209 = vmatpush1.bf16.msra.mxu0 %v3551
    %4210 = vmatprep.subr.bf16.mxu0 %v3548
    %4211 = vmatpush1.bf16.msra.mxu0 %v3547
    %4212 = vmatprep.subr.bf16.mxu0 %v3544
    %4213 = vmatpush1.bf16.msra.mxu0 %v3543
    %4214 = vmatprep.subr.bf16.mxu0 %v3540
    %4215 = vmatpush1.bf16.msra.mxu0 %v3539
    %4216 = vmatprep.subr.bf16.mxu0 %v3600
    %4217 = vmatpush2.bf16.msra.mxu0 %v3599
    %4218 = vmatprep.subr.bf16.mxu0 %v3596
    %4219 = vmatpush2.bf16.msra.mxu0 %v3595
    %4220 = vmatprep.subr.bf16.mxu0 %v3592
    %4221 = vmatpush2.bf16.msra.mxu0 %v3591
    %4222 = vmatprep.subr.bf16.mxu0 %v3588
    %4223 = vmatpush2.bf16.msra.mxu0 %v3587
    %4224 = vmatprep.subr.bf16.mxu0 %v3584
    %4225 = vmatpush2.bf16.msra.mxu0 %v3583
    %4226 = vmatprep.subr.bf16.mxu0 %v3580
    %4227 = vmatpush2.bf16.msra.mxu0 %v3579
    %4228 = vmatprep.subr.bf16.mxu0 %v3576
    %4229 = vmatpush2.bf16.msra.mxu0 %v3575
    %4230 = vmatprep.subr.bf16.mxu0 %v3572
    %4231 = vmatpush2.bf16.msra.mxu0 %v3571
    %4232 = vmatprep.mubr.bf16.mxu0 %v2422
    %4233 = vmatmul.mubr.bf16.gmra.mxu0 %v2421
    %v4234 = vpop.f32.mrf.mxu0
    %v4235 = vadd.f32 %v4192, %v4234
    %v4236 = vpop.f32.mrf.mxu0
    %v4237 = vadd.f32 %v4194, %v4236
    %v4238 = vpop.f32.mrf.mxu0
    %v4239 = vadd.f32 %v4196, %v4238
    %v4240 = vpop.f32.mrf.mxu0
    %v4241 = vadd.f32 %v4198, %v4240
    %4242 = vdwg.mxu0
    %4243 = vmatprep.subr.bf16.mxu0 %v3632
    %4244 = vmatpush1.bf16.msra.mxu0 %v3631
    %4245 = vmatprep.subr.bf16.mxu0 %v3628
    %4246 = vmatpush1.bf16.msra.mxu0 %v3627
    %4247 = vmatprep.subr.bf16.mxu0 %v3624
    %4248 = vmatpush1.bf16.msra.mxu0 %v3623
    %4249 = vmatprep.subr.bf16.mxu0 %v3620
    %4250 = vmatpush1.bf16.msra.mxu0 %v3619
    %4251 = vmatprep.subr.bf16.mxu0 %v3616
    %4252 = vmatpush1.bf16.msra.mxu0 %v3615
    %4253 = vmatprep.subr.bf16.mxu0 %v3612
    %4254 = vmatpush1.bf16.msra.mxu0 %v3611
    %4255 = vmatprep.subr.bf16.mxu0 %v3608
    %4256 = vmatpush1.bf16.msra.mxu0 %v3607
    %4257 = vmatprep.subr.bf16.mxu0 %v3604
    %4258 = vmatpush1.bf16.msra.mxu0 %v3603
    %4259 = vmatprep.subr.bf16.mxu0 %v3664
    %4260 = vmatpush2.bf16.msra.mxu0 %v3663
    %4261 = vmatprep.subr.bf16.mxu0 %v3660
    %4262 = vmatpush2.bf16.msra.mxu0 %v3659
    %4263 = vmatprep.subr.bf16.mxu0 %v3656
    %4264 = vmatpush2.bf16.msra.mxu0 %v3655
    %4265 = vmatprep.subr.bf16.mxu0 %v3652
    %4266 = vmatpush2.bf16.msra.mxu0 %v3651
    %4267 = vmatprep.subr.bf16.mxu0 %v3648
    %4268 = vmatpush2.bf16.msra.mxu0 %v3647
    %4269 = vmatprep.subr.bf16.mxu0 %v3644
    %4270 = vmatpush2.bf16.msra.mxu0 %v3643
    %4271 = vmatprep.subr.bf16.mxu0 %v3640
    %4272 = vmatpush2.bf16.msra.mxu0 %v3639
    %4273 = vmatprep.subr.bf16.mxu0 %v3636
    %4274 = vmatpush2.bf16.msra.mxu0 %v3635
    %4275 = vmatprep.mubr.bf16.mxu0 %v2424
    %4276 = vmatmul.mubr.bf16.gmra.mxu0 %v2423
    %v4277 = vpop.f32.mrf.mxu0
    %v4278 = vadd.f32 %v4235, %v4277
    %v4279 = vpop.f32.mrf.mxu0
    %v4280 = vadd.f32 %v4237, %v4279
    %v4281 = vpop.f32.mrf.mxu0
    %v4282 = vadd.f32 %v4239, %v4281
    %v4283 = vpop.f32.mrf.mxu0
    %v4284 = vadd.f32 %v4241, %v4283
    %4285 = vdwg.mxu0
    %4286 = vmatprep.subr.bf16.mxu0 %v3696
    %4287 = vmatpush1.bf16.msra.mxu0 %v3695
    %4288 = vmatprep.subr.bf16.mxu0 %v3692
    %4289 = vmatpush1.bf16.msra.mxu0 %v3691
    %4290 = vmatprep.subr.bf16.mxu0 %v3688
    %4291 = vmatpush1.bf16.msra.mxu0 %v3687
    %4292 = vmatprep.subr.bf16.mxu0 %v3684
    %4293 = vmatpush1.bf16.msra.mxu0 %v3683
    %4294 = vmatprep.subr.bf16.mxu0 %v3680
    %4295 = vmatpush1.bf16.msra.mxu0 %v3679
    %4296 = vmatprep.subr.bf16.mxu0 %v3676
    %4297 = vmatpush1.bf16.msra.mxu0 %v3675
    %4298 = vmatprep.subr.bf16.mxu0 %v3672
    %4299 = vmatpush1.bf16.msra.mxu0 %v3671
    %4300 = vmatprep.subr.bf16.mxu0 %v3668
    %4301 = vmatpush1.bf16.msra.mxu0 %v3667
    %4302 = vmatprep.subr.bf16.mxu0 %v3728
    %4303 = vmatpush2.bf16.msra.mxu0 %v3727
    %4304 = vmatprep.subr.bf16.mxu0 %v3724
    %4305 = vmatpush2.bf16.msra.mxu0 %v3723
    %4306 = vmatprep.subr.bf16.mxu0 %v3720
    %4307 = vmatpush2.bf16.msra.mxu0 %v3719
    %4308 = vmatprep.subr.bf16.mxu0 %v3716
    %4309 = vmatpush2.bf16.msra.mxu0 %v3715
    %4310 = vmatprep.subr.bf16.mxu0 %v3712
    %4311 = vmatpush2.bf16.msra.mxu0 %v3711
    %4312 = vmatprep.subr.bf16.mxu0 %v3708
    %4313 = vmatpush2.bf16.msra.mxu0 %v3707
    %4314 = vmatprep.subr.bf16.mxu0 %v3704
    %4315 = vmatpush2.bf16.msra.mxu0 %v3703
    %4316 = vmatprep.subr.bf16.mxu0 %v3700
    %4317 = vmatpush2.bf16.msra.mxu0 %v3699
    %4318 = vmatprep.mubr.bf16.mxu0 %v2426
    %4319 = vmatmul.mubr.bf16.gmra.mxu0 %v2425
    %v4320 = vpop.f32.mrf.mxu0
    %v4321 = vadd.f32 %v4278, %v4320
    %v4322 = vpop.f32.mrf.mxu0
    %v4323 = vadd.f32 %v4280, %v4322
    %v4324 = vpop.f32.mrf.mxu0
    %v4325 = vadd.f32 %v4282, %v4324
    %v4326 = vpop.f32.mrf.mxu0
    %v4327 = vadd.f32 %v4284, %v4326
    %4328 = vdwg.mxu0
    %v4329 = vmax.f32 %v4149, 0.0
    %v4330 = vmax.f32 %v4151, 0.0
    %v4331 = vmax.f32 %v4321, 0.0
    %v4332 = vmax.f32 %v4323, 0.0
    %v4333 = vmax.f32 %v4153, 0.0
    %v4334 = vmax.f32 %v4155, 0.0
    %v4335 = vmax.f32 %v4325, 0.0
    %v4336 = vmax.f32 %v4327, 0.0
    %v4337 = vpack.c.bf16 %v4333, %v4329
    %v4338 = vpack.c.bf16 %v4334, %v4330
    %v4339 = vpack.c.bf16 %v4335, %v4331
    %v4340 = vpack.c.bf16 %v4336, %v4332
    %v4341 = vld [vmem:[#allocation7] sm:$0xf]
    %v4342 = vld [vmem:[#allocation7 + $0x4] sm:$0xf]
    %v4343 = vld [vmem:[#allocation7 + $0x8] sm:$0xf]
    %v4344 = vld [vmem:[#allocation7 + $0xc] sm:$0xf]
    %v4345 = vld [vmem:[#allocation7 + $0x10] sm:$0xf]
    %v4346 = vld [vmem:[#allocation7 + $0x14] sm:$0xf]
    %v4347 = vld [vmem:[#allocation7 + $0x18] sm:$0xf]
    %v4348 = vld [vmem:[#allocation7 + $0x1c] sm:$0xf]
    %v4349 = vld [vmem:[#allocation7 + $0x20] sm:$0xf]
    %v4350 = vld [vmem:[#allocation7 + $0x24] sm:$0xf]
    %v4351 = vld [vmem:[#allocation7 + $0x28] sm:$0xf]
    %v4352 = vld [vmem:[#allocation7 + $0x2c] sm:$0xf]
    %v4353 = vld [vmem:[#allocation7 + $0x30] sm:$0xf]
    %v4354 = vld [vmem:[#allocation7 + $0x34] sm:$0xf]
    %v4355 = vld [vmem:[#allocation7 + $0x38] sm:$0xf]
    %v4356 = vld [vmem:[#allocation7 + $0x3c] sm:$0xf]
    %v4357 = vld [vmem:[#allocation7 + $0x40] sm:$0xf]
    %v4358 = vld [vmem:[#allocation7 + $0x44] sm:$0xf]
    %v4359 = vld [vmem:[#allocation7 + $0x48] sm:$0xf]
    %v4360 = vld [vmem:[#allocation7 + $0x4c] sm:$0xf]
    %v4361 = vld [vmem:[#allocation7 + $0x50] sm:$0xf]
    %v4362 = vld [vmem:[#allocation7 + $0x54] sm:$0xf]
    %v4363 = vld [vmem:[#allocation7 + $0x58] sm:$0xf]
    %v4364 = vld [vmem:[#allocation7 + $0x5c] sm:$0xf]
    %v4365 = vld [vmem:[#allocation7 + $0x60] sm:$0xf]
    %v4366 = vld [vmem:[#allocation7 + $0x64] sm:$0xf]
    %v4367 = vld [vmem:[#allocation7 + $0x68] sm:$0xf]
    %v4368 = vld [vmem:[#allocation7 + $0x6c] sm:$0xf]
    %v4369 = vld [vmem:[#allocation7 + $0x70] sm:$0xf]
    %v4370 = vld [vmem:[#allocation7 + $0x74] sm:$0xf]
    %v4371 = vld [vmem:[#allocation7 + $0x78] sm:$0xf]
    %v4372 = vld [vmem:[#allocation7 + $0x7c] sm:$0xf]
    %v4373 = vld [vmem:[#allocation7 + $0x80] sm:$0xf]
    %v4374 = vld [vmem:[#allocation7 + $0x84] sm:$0xf]
    %v4375 = vld [vmem:[#allocation7 + $0x88] sm:$0xf]
    %v4376 = vld [vmem:[#allocation7 + $0x8c] sm:$0xf]
    %v4377 = vld [vmem:[#allocation7 + $0x90] sm:$0xf]
    %v4378 = vld [vmem:[#allocation7 + $0x94] sm:$0xf]
    %v4379 = vld [vmem:[#allocation7 + $0x98] sm:$0xf]
    %v4380 = vld [vmem:[#allocation7 + $0x9c] sm:$0xf]
    %v4381 = vld [vmem:[#allocation7 + $0xa0] sm:$0xf]
    %v4382 = vld [vmem:[#allocation7 + $0xa4] sm:$0xf]
    %v4383 = vld [vmem:[#allocation7 + $0xa8] sm:$0xf]
    %v4384 = vld [vmem:[#allocation7 + $0xac] sm:$0xf]
    %v4385 = vld [vmem:[#allocation7 + $0xb0] sm:$0xf]
    %v4386 = vld [vmem:[#allocation7 + $0xb4] sm:$0xf]
    %v4387 = vld [vmem:[#allocation7 + $0xb8] sm:$0xf]
    %v4388 = vld [vmem:[#allocation7 + $0xbc] sm:$0xf]
    %v4389 = vld [vmem:[#allocation7 + $0xc0] sm:$0xf]
    %v4390 = vld [vmem:[#allocation7 + $0xc4] sm:$0xf]
    %v4391 = vld [vmem:[#allocation7 + $0xc8] sm:$0xf]
    %v4392 = vld [vmem:[#allocation7 + $0xcc] sm:$0xf]
    %v4393 = vld [vmem:[#allocation7 + $0xd0] sm:$0xf]
    %v4394 = vld [vmem:[#allocation7 + $0xd4] sm:$0xf]
    %v4395 = vld [vmem:[#allocation7 + $0xd8] sm:$0xf]
    %v4396 = vld [vmem:[#allocation7 + $0xdc] sm:$0xf]
    %v4397 = vld [vmem:[#allocation7 + $0xe0] sm:$0xf]
    %v4398 = vld [vmem:[#allocation7 + $0xe4] sm:$0xf]
    %v4399 = vld [vmem:[#allocation7 + $0xe8] sm:$0xf]
    %v4400 = vld [vmem:[#allocation7 + $0xec] sm:$0xf]
    %v4401 = vld [vmem:[#allocation7 + $0xf0] sm:$0xf]
    %v4402 = vld [vmem:[#allocation7 + $0xf4] sm:$0xf]
    %v4403 = vld [vmem:[#allocation7 + $0xf8] sm:$0xf]
    %v4404 = vld [vmem:[#allocation7 + $0xfc] sm:$0xf]
    %v4405 = vld [vmem:[%s8] sm:$0x1]
    %v4407 = vlaneseq
    %v4408 = vshrl.u32 %v4407, 7
    %v4409 = vsub.s32 0, %v4408
    %v4410 = vrot.slane %v4405, %v4409
    %v4476 = vunpack.c.l.b16 %v4341
    %v4477 = vunpack.c.l.b16 %v4342
    %v4478 = vunpack.c.l.b16 %v4343
    %v4479 = vunpack.c.l.b16 %v4344
    %v4480 = vunpack.c.l.b16 %v4345
    %v4481 = vunpack.c.l.b16 %v4346
    %v4482 = vunpack.c.l.b16 %v4347
    %v4483 = vunpack.c.l.b16 %v4348
    %v4484 = vunpack.c.l.b16 %v4349
    %v4485 = vunpack.c.l.b16 %v4350
    %v4486 = vunpack.c.l.b16 %v4351
    %v4487 = vunpack.c.l.b16 %v4352
    %v4488 = vunpack.c.l.b16 %v4353
    %v4489 = vunpack.c.l.b16 %v4354
    %v4490 = vunpack.c.l.b16 %v4355
    %v4491 = vunpack.c.l.b16 %v4356
    %v4492 = vunpack.c.l.b16 %v4357
    %v4493 = vunpack.c.l.b16 %v4358
    %v4494 = vunpack.c.l.b16 %v4359
    %v4495 = vunpack.c.l.b16 %v4360
    %v4496 = vunpack.c.l.b16 %v4361
    %v4497 = vunpack.c.l.b16 %v4362
    %v4498 = vunpack.c.l.b16 %v4363
    %v4499 = vunpack.c.l.b16 %v4364
    %v4500 = vunpack.c.l.b16 %v4365
    %v4501 = vunpack.c.l.b16 %v4366
    %v4502 = vunpack.c.l.b16 %v4367
    %v4503 = vunpack.c.l.b16 %v4368
    %v4504 = vunpack.c.l.b16 %v4369
    %v4505 = vunpack.c.l.b16 %v4370
    %v4506 = vunpack.c.l.b16 %v4371
    %v4507 = vunpack.c.l.b16 %v4372
    %v4508 = vunpack.c.l.b16 %v4373
    %v4509 = vunpack.c.l.b16 %v4374
    %v4510 = vunpack.c.l.b16 %v4375
    %v4511 = vunpack.c.l.b16 %v4376
    %v4512 = vunpack.c.l.b16 %v4377
    %v4513 = vunpack.c.l.b16 %v4378
    %v4514 = vunpack.c.l.b16 %v4379
    %v4515 = vunpack.c.l.b16 %v4380
    %v4516 = vunpack.c.l.b16 %v4381
    %v4517 = vunpack.c.l.b16 %v4382
    %v4518 = vunpack.c.l.b16 %v4383
    %v4519 = vunpack.c.l.b16 %v4384
    %v4520 = vunpack.c.l.b16 %v4385
    %v4521 = vunpack.c.l.b16 %v4386
    %v4522 = vunpack.c.l.b16 %v4387
    %v4523 = vunpack.c.l.b16 %v4388
    %v4524 = vunpack.c.l.b16 %v4389
    %v4525 = vunpack.c.l.b16 %v4390
    %v4526 = vunpack.c.l.b16 %v4391
    %v4527 = vunpack.c.l.b16 %v4392
    %v4528 = vunpack.c.l.b16 %v4393
    %v4529 = vunpack.c.l.b16 %v4394
    %v4530 = vunpack.c.l.b16 %v4395
    %v4531 = vunpack.c.l.b16 %v4396
    %v4532 = vunpack.c.l.b16 %v4397
    %v4533 = vunpack.c.l.b16 %v4398
    %v4534 = vunpack.c.l.b16 %v4399
    %v4535 = vunpack.c.l.b16 %v4400
    %v4536 = vunpack.c.l.b16 %v4401
    %v4537 = vunpack.c.l.b16 %v4402
    %v4538 = vunpack.c.l.b16 %v4403
    %v4539 = vunpack.c.l.b16 %v4404
    %v4540 = vpack.c.b16 %v4477, %v4476
    %v4541 = vpack.c.b16 %v4479, %v4478
    %v4542 = vpack.c.b16 %v4481, %v4480
    %v4543 = vpack.c.b16 %v4483, %v4482
    %v4544 = vpack.c.b16 %v4485, %v4484
    %v4545 = vpack.c.b16 %v4487, %v4486
    %v4546 = vpack.c.b16 %v4489, %v4488
    %v4547 = vpack.c.b16 %v4491, %v4490
    %v4548 = vpack.c.b16 %v4493, %v4492
    %v4549 = vpack.c.b16 %v4495, %v4494
    %v4550 = vpack.c.b16 %v4497, %v4496
    %v4551 = vpack.c.b16 %v4499, %v4498
    %v4552 = vpack.c.b16 %v4501, %v4500
    %v4553 = vpack.c.b16 %v4503, %v4502
    %v4554 = vpack.c.b16 %v4505, %v4504
    %v4555 = vpack.c.b16 %v4507, %v4506
    %v4556 = vpack.c.b16 %v4509, %v4508
    %v4557 = vpack.c.b16 %v4511, %v4510
    %v4558 = vpack.c.b16 %v4513, %v4512
    %v4559 = vpack.c.b16 %v4515, %v4514
    %v4560 = vpack.c.b16 %v4517, %v4516
    %v4561 = vpack.c.b16 %v4519, %v4518
    %v4562 = vpack.c.b16 %v4521, %v4520
    %v4563 = vpack.c.b16 %v4523, %v4522
    %v4564 = vpack.c.b16 %v4525, %v4524
    %v4565 = vpack.c.b16 %v4527, %v4526
    %v4566 = vpack.c.b16 %v4529, %v4528
    %v4567 = vpack.c.b16 %v4531, %v4530
    %v4568 = vpack.c.b16 %v4533, %v4532
    %v4569 = vpack.c.b16 %v4535, %v4534
    %v4570 = vpack.c.b16 %v4537, %v4536
    %v4571 = vpack.c.b16 %v4539, %v4538
    %4604 = vmatprep.subr.bf16.mxu0 0
    %4605 = vmatpush1.bf16.msra.mxu0 %v4547
    %4606 = vmatprep.subr.bf16.mxu0 0
    %4607 = vmatpush1.bf16.msra.mxu0 %v4546
    %4608 = vmatprep.subr.bf16.mxu0 0
    %4609 = vmatpush1.bf16.msra.mxu0 %v4545
    %4610 = vmatprep.subr.bf16.mxu0 0
    %4611 = vmatpush1.bf16.msra.mxu0 %v4544
    %4612 = vmatprep.subr.bf16.mxu0 0
    %4613 = vmatpush1.bf16.msra.mxu0 %v4543
    %4614 = vmatprep.subr.bf16.mxu0 0
    %4615 = vmatpush1.bf16.msra.mxu0 %v4542
    %4616 = vmatprep.subr.bf16.mxu0 0
    %4617 = vmatpush1.bf16.msra.mxu0 %v4541
    %4618 = vmatprep.subr.bf16.mxu0 0
    %4619 = vmatpush1.bf16.msra.mxu0 %v4540
    %4620 = vmatprep.subr.bf16.mxu0 0
    %4621 = vmatpush2.bf16.msra.mxu0 %v4555
    %4622 = vmatprep.subr.bf16.mxu0 0
    %4623 = vmatpush2.bf16.msra.mxu0 %v4554
    %4624 = vmatprep.subr.bf16.mxu0 0
    %4625 = vmatpush2.bf16.msra.mxu0 %v4553
    %4626 = vmatprep.subr.bf16.mxu0 0
    %4627 = vmatpush2.bf16.msra.mxu0 %v4552
    %4628 = vmatprep.subr.bf16.mxu0 0
    %4629 = vmatpush2.bf16.msra.mxu0 %v4551
    %4630 = vmatprep.subr.bf16.mxu0 0
    %4631 = vmatpush2.bf16.msra.mxu0 %v4550
    %4632 = vmatprep.subr.bf16.mxu0 0
    %4633 = vmatpush2.bf16.msra.mxu0 %v4549
    %4634 = vmatprep.subr.bf16.mxu0 0
    %4635 = vmatpush2.bf16.msra.mxu0 %v4548
    %4636 = vmatprep.mubr.bf16.mxu0 %v4338
    %4637 = vmatmul.mubr.bf16.gmra.mxu0 %v4337
    %v4638 = vpop.f32.mrf.mxu0
    %v4639 = vadd.f32 %v4410, %v4638
    %v4640 = vpop.f32.mrf.mxu0
    %v4641 = vpop.f32.mrf.mxu0
    %v4642 = vadd.f32 %v4410, %v4641
    %v4643 = vpop.f32.mrf.mxu0
    %4644 = vdwg.mxu0
    %4645 = vmatprep.subr.bf16.mxu0 0
    %4646 = vmatpush1.bf16.msra.mxu0 %v4563
    %4647 = vmatprep.subr.bf16.mxu0 0
    %4648 = vmatpush1.bf16.msra.mxu0 %v4562
    %4649 = vmatprep.subr.bf16.mxu0 0
    %4650 = vmatpush1.bf16.msra.mxu0 %v4561
    %4651 = vmatprep.subr.bf16.mxu0 0
    %4652 = vmatpush1.bf16.msra.mxu0 %v4560
    %4653 = vmatprep.subr.bf16.mxu0 0
    %4654 = vmatpush1.bf16.msra.mxu0 %v4559
    %4655 = vmatprep.subr.bf16.mxu0 0
    %4656 = vmatpush1.bf16.msra.mxu0 %v4558
    %4657 = vmatprep.subr.bf16.mxu0 0
    %4658 = vmatpush1.bf16.msra.mxu0 %v4557
    %4659 = vmatprep.subr.bf16.mxu0 0
    %4660 = vmatpush1.bf16.msra.mxu0 %v4556
    %4661 = vmatprep.subr.bf16.mxu0 0
    %4662 = vmatpush2.bf16.msra.mxu0 %v4571
    %4663 = vmatprep.subr.bf16.mxu0 0
    %4664 = vmatpush2.bf16.msra.mxu0 %v4570
    %4665 = vmatprep.subr.bf16.mxu0 0
    %4666 = vmatpush2.bf16.msra.mxu0 %v4569
    %4667 = vmatprep.subr.bf16.mxu0 0
    %4668 = vmatpush2.bf16.msra.mxu0 %v4568
    %4669 = vmatprep.subr.bf16.mxu0 0
    %4670 = vmatpush2.bf16.msra.mxu0 %v4567
    %4671 = vmatprep.subr.bf16.mxu0 0
    %4672 = vmatpush2.bf16.msra.mxu0 %v4566
    %4673 = vmatprep.subr.bf16.mxu0 0
    %4674 = vmatpush2.bf16.msra.mxu0 %v4565
    %4675 = vmatprep.subr.bf16.mxu0 0
    %4676 = vmatpush2.bf16.msra.mxu0 %v4564
    %4677 = vmatprep.mubr.bf16.mxu0 %v4340
    %4678 = vmatmul.mubr.bf16.gmra.mxu0 %v4339
    %v4679 = vpop.f32.mrf.mxu0
    %v4680 = vadd.f32 %v4639, %v4679
    %v4681 = vpop.f32.mrf.mxu0
    %v4682 = vpop.f32.mrf.mxu0
    %v4683 = vadd.f32 %v4642, %v4682
    %v4684 = vpop.f32.mrf.mxu0
    %4685 = vdwg.mxu0
    %v4686 = vmax.f32 %v4680, 0.0
    %v4687 = vmax.f32 %v4683, 0.0
    %v4688 = vpack.c.bf16 %v4687, %v4686
    %v4689 = vld [vmem:[#allocation9] sm:$0xf]
    %v4690 = vld [vmem:[#allocation9 + $0x4] sm:$0xf]
    %v4691 = vld [vmem:[#allocation9 + $0x8] sm:$0xf]
    %v4692 = vld [vmem:[#allocation9 + $0xc] sm:$0xf]
    %v4693 = vld [vmem:[#allocation9 + $0x10] sm:$0xf]
    %v4694 = vld [vmem:[#allocation9 + $0x14] sm:$0xf]
    %v4695 = vld [vmem:[#allocation9 + $0x18] sm:$0xf]
    %v4696 = vld [vmem:[#allocation9 + $0x1c] sm:$0xf]
    %v4697 = vld [vmem:[#allocation9 + $0x20] sm:$0xf]
    %v4698 = vld [vmem:[#allocation9 + $0x24] sm:$0xf]
    %v4699 = vld [vmem:[#allocation9 + $0x28] sm:$0xf]
    %v4700 = vld [vmem:[#allocation9 + $0x2c] sm:$0xf]
    %v4701 = vld [vmem:[#allocation9 + $0x30] sm:$0xf]
    %v4702 = vld [vmem:[#allocation9 + $0x34] sm:$0xf]
    %v4703 = vld [vmem:[#allocation9 + $0x38] sm:$0xf]
    %v4704 = vld [vmem:[#allocation9 + $0x3c] sm:$0xf]
    %v4705 = vld [vmem:[%s10] sm:$0x1]
    %v4707 = vlaneseq
    %v4708 = vshrl.u32 %v4707, 7
    %v4709 = vsub.s32 0, %v4708
    %v4710 = vrot.slane %v4705, %v4709
    %v4728 = vunpack.c.l.b16 %v4689
    %v4729 = vunpack.c.l.b16 %v4690
    %v4730 = vunpack.c.l.b16 %v4691
    %v4731 = vunpack.c.l.b16 %v4692
    %v4732 = vunpack.c.l.b16 %v4693
    %v4733 = vunpack.c.l.b16 %v4694
    %v4734 = vunpack.c.l.b16 %v4695
    %v4735 = vunpack.c.l.b16 %v4696
    %v4736 = vunpack.c.l.b16 %v4697
    %v4737 = vunpack.c.l.b16 %v4698
    %v4738 = vunpack.c.l.b16 %v4699
    %v4739 = vunpack.c.l.b16 %v4700
    %v4740 = vunpack.c.l.b16 %v4701
    %v4741 = vunpack.c.l.b16 %v4702
    %v4742 = vunpack.c.l.b16 %v4703
    %v4743 = vunpack.c.l.b16 %v4704
    %v4744 = vpack.c.b16 %v4729, %v4728
    %v4745 = vpack.c.b16 %v4731, %v4730
    %v4746 = vpack.c.b16 %v4733, %v4732
    %v4747 = vpack.c.b16 %v4735, %v4734
    %v4748 = vpack.c.b16 %v4737, %v4736
    %v4749 = vpack.c.b16 %v4739, %v4738
    %v4750 = vpack.c.b16 %v4741, %v4740
    %v4751 = vpack.c.b16 %v4743, %v4742
    %4760 = vmatprep.subr.bf16.mxu0 0
    %4761 = vmatpush1.bf16.msra.mxu0 %v4751
    %4762 = vmatprep.subr.bf16.mxu0 0
    %4763 = vmatpush1.bf16.msra.mxu0 %v4750
    %4764 = vmatprep.subr.bf16.mxu0 0
    %4765 = vmatpush1.bf16.msra.mxu0 %v4749
    %4766 = vmatprep.subr.bf16.mxu0 0
    %4767 = vmatpush1.bf16.msra.mxu0 %v4748
    %4768 = vmatprep.subr.bf16.mxu0 0
    %4769 = vmatpush1.bf16.msra.mxu0 %v4747
    %4770 = vmatprep.subr.bf16.mxu0 0
    %4771 = vmatpush1.bf16.msra.mxu0 %v4746
    %4772 = vmatprep.subr.bf16.mxu0 0
    %4773 = vmatpush1.bf16.msra.mxu0 %v4745
    %4774 = vmatprep.subr.bf16.mxu0 0
    %4775 = vmatpush1.bf16.msra.mxu0 %v4744
    %4776 = vmatprep.subr.bf16.mxu0 0
    %4777 = vmatpush2.bf16.msra.mxu0 0
    %4778 = vmatprep.subr.bf16.mxu0 0
    %4779 = vmatpush2.bf16.msra.mxu0 0
    %4780 = vmatprep.subr.bf16.mxu0 0
    %4781 = vmatpush2.bf16.msra.mxu0 0
    %4782 = vmatprep.subr.bf16.mxu0 0
    %4783 = vmatpush2.bf16.msra.mxu0 0
    %4784 = vmatprep.subr.bf16.mxu0 0
    %4785 = vmatpush2.bf16.msra.mxu0 0
    %4786 = vmatprep.subr.bf16.mxu0 0
    %4787 = vmatpush2.bf16.msra.mxu0 0
    %4788 = vmatprep.subr.bf16.mxu0 0
    %4789 = vmatpush2.bf16.msra.mxu0 0
    %4790 = vmatprep.subr.bf16.mxu0 0
    %4791 = vmatpush2.bf16.msra.mxu0 0
    %4792 = vmatprep.mubr.bf16.mxu0 0
    %4793 = vmatmul.mubr.bf16.gmra.mxu0 %v4688
    %v4794 = vpop.f32.mrf.mxu0
    %v4795 = vadd.f32 %v4710, %v4794
    %v4796 = vpop.f32.mrf.mxu0
    %v4797 = vpop.f32.mrf.mxu0
    %v4798 = vadd.f32 %v4710, %v4797
    %v4799 = vpop.f32.mrf.mxu0
    %4800 = vdwg.mxu0
    %4801 = vst [vmem:[%s11] sm:$0xff] %v4795
    %4802 = vst [vmem:[%s11 + $0x8] sm:$0xff] %v4798
    // Predicated region
    $region66: #{mlp_forward.1} parent=1 // pred_check
      _
    $region67: #{mlp_forward.1} parent=1 // pred_check_branch
      %4804 = sbr.rel (0) target = $region69
    $region68: #{mlp_forward.1} parent=1 // pred_region
      _
    $region69: #{mlp_forward.1} parent=1 // pred_fallthru
      _
    // Predicated region
    $region70: #{mlp_forward.1} parent=1 // pred_check
      _
    $region71: #{mlp_forward.1} parent=1 // pred_check_branch
      %4806 = sbr.rel (0) target = $region73
    $region72: #{mlp_forward.1} parent=1 // pred_region
      _
    $region73: #{mlp_forward.1} parent=1 // pred_fallthru
      _
    %4807 = vsyncpa [#allocation3], 1
    %4808 = vsyncpa [#allocation5], 1
    %4809 = vsyncpa [#allocation8], 1

</llo_original>
